<compile_context>
chip_gen: v7x
topology: tpu7x:2x2x1
jax: 0.10.0
libtpu: 0.0.40
codegen_flags: <defaults>
</compile_context>

<pallas_src>
import functools

import numpy as np
import jax
import jax.numpy as jnp
from jax import lax
from jax.experimental import pallas as pl
from jax.experimental.pallas import tpu as pltpu  # noqa: F401  (TPU backend)

GP = 128  # padded per-gate / per-state lane width = one vreg lane-tile


# ----------------------------------------------------------------------------
# Constant folding: cumulative-(reverse)-sum triangulars x chunk expansion.
#   sm_in @ C_in == flat( cat([cumsum(sm_happy), revcumsum(sm_sad)]) expanded )
#   sm_fg @ C_fg == flat( cat([revcumsum(sm_happy), cumsum(sm_sad)]) expanded )
# ----------------------------------------------------------------------------
def _make_cum_expand_mats(hidden, n_chunk):
    half = n_chunk // 2
    chunk_size = hidden // n_chunk
    r = np.arange(half)[:, None]
    c = np.arange(half)[None, :]
    fwd = (r <= c).astype(np.float32)        # x @ fwd == cumsum(x)
    rev = (r >= c).astype(np.float32)        # x @ rev == reverse-cumsum(x)
    chunk_of = np.arange(hidden) // chunk_size
    e_happy = (chunk_of[None, :] == np.arange(half)[:, None]).astype(np.float32)
    e_sad = (chunk_of[None, :] == (np.arange(half)[:, None] + half)).astype(np.float32)
    c_in = np.concatenate([fwd @ e_happy, rev @ e_sad], axis=0)   # (n_chunk, hidden)
    c_fg = np.concatenate([rev @ e_happy, fwd @ e_sad], axis=0)   # (n_chunk, hidden)
    return c_in, c_fg


# ----------------------------------------------------------------------------
# Host-side weight preparation (one time):
#   W_x  : (2D+4nc, 6*GP)   time-invariant part (inputs + cumsoftmax expansion)
#   b_x  : (2, 6*GP)        lyric-row / tune-row bias (bih+bhh pre-summed)
#   W_hh : (GP, 8*GP)       recurrent part, lyric gates in cols [0,4GP),
#                           tune gates in cols [4GP,8GP)
# Gate k of hidden-size H lives in padded columns [k*GP, k*GP+H)  (128-aligned).
# ----------------------------------------------------------------------------
def prepare_fused_params(raw, layer_sizes, n_chunk):
    nc = n_chunk
    n_layers = len(layer_sizes) - 1
    fused = {"layers": [], "emb": raw["emb"]}

    def to_np(x):
        return np.asarray(x, dtype=np.float32)

    for li in range(n_layers):
        D, H = layer_sizes[li], layer_sizes[li + 1]
        wih_l, bih_l, whh_l, bhh_l = [to_np(a) for a in raw["cells"][li]]
        wih_t, bih_t, whh_t, bhh_t = [to_np(a) for a in raw["tune_cells"][li]]
        c_in, c_fg = _make_cum_expand_mats(H, nc)

        def pad_gates(w):   # (in, 4H) -> (in, 4*GP), each gate on its own tile
            out = np.zeros((w.shape[0], 4 * GP), np.float32)
            for k in range(4):
                out[:, k * GP:k * GP + H] = w[:, k * H:(k + 1) * H]
            return out

        kx = 2 * D + 4 * nc
        wx = np.zeros((kx, 6 * GP), np.float32)
        wx[0:D, 0:4 * GP] = pad_gates(wih_l)                 # lyric input gates
        wx[D:2 * D, 0:4 * GP] = pad_gates(wih_t)             # tune input gates
        wx[2 * D:2 * D + nc, 4 * GP:4 * GP + H] = c_in       # lyric cin
        wx[2 * D + nc:2 * D + 2 * nc, 5 * GP:5 * GP + H] = c_fg   # lyric cfg
        wx[2 * D + 2 * nc:2 * D + 3 * nc, 4 * GP:4 * GP + H] = c_fg  # tune cin (=lyric cfg)
        wx[2 * D + 3 * nc:2 * D + 4 * nc, 5 * GP:5 * GP + H] = c_in  # tune cfg (=lyric cin)

        bx = np.zeros((2, 6 * GP), np.float32)
        bx[0, 0:4 * GP] = pad_gates((bih_l + bhh_l).reshape(1, -1))[0]
        bx[1, 0:4 * GP] = pad_gates((bih_t + bhh_t).reshape(1, -1))[0]

        whh = np.zeros((GP, 8 * GP), np.float32)
        whh[0:H, 0:4 * GP] = pad_gates(whh_l)
        whh[0:H, 4 * GP:8 * GP] = pad_gates(whh_t)

        fused["layers"].append((jnp.asarray(wx, jnp.bfloat16),
                                jnp.asarray(bx, jnp.float32),
                                jnp.asarray(whh, jnp.bfloat16)))

    # MLP head: rows [0,H_last) act on lyric features, [GP,GP+H_last) on tune.
    H_last = layer_sizes[-1]
    mlp_w = to_np(raw["mlp_w"])
    wm = np.zeros((2 * GP, mlp_w.shape[1]), np.float32)
    wm[0:H_last] = mlp_w[:H_last]
    wm[GP:GP + H_last] = mlp_w[H_last:]
    fused["mlp_w"] = jnp.asarray(wm, jnp.float32)
    fused["mlp_b"] = jnp.asarray(to_np(raw["mlp_b"]), jnp.float32)
    return fused


# ----------------------------------------------------------------------------
# The single fused kernel: all layers, all timesteps, MLP head.
# ----------------------------------------------------------------------------
def _onlstm_stack_kernel(lyric_ref, tune_ref, floor_ref, *rest,
                         layer_sizes, n_chunk):
    n_layers = len(layer_sizes) - 1
    layer_refs = rest[:3 * n_layers]
    wm_ref = rest[3 * n_layers]
    bm_ref = rest[3 * n_layers + 1]
    out_ref = rest[3 * n_layers + 2]

    L, B, _ = lyric_ref.shape
    B2 = 2 * B
    nc = n_chunk
    half = nc // 2
    f32 = jnp.float32
    bf16 = jnp.bfloat16

    # ---- floor-gate softmaxes (layer independent, computed once) ----
    floor = floor_ref[...]                                    # (L, B, nc)

    def half_softmax(x):
        m = jnp.max(x, axis=-1, keepdims=True)
        e = jnp.exp(x - m)
        return e / jnp.sum(e, axis=-1, keepdims=True)

    sm_in = jnp.concatenate(
        [half_softmax(floor[:, :, :half]), half_softmax(floor[:, :, half:])],
        axis=-1)                                              # (L, B, nc)
    uniform = jnp.full((1, B, nc), 1.0 / half, dtype=f32)     # softmax(zeros) at t=0
    sm_fg = jnp.concatenate([uniform, sm_in[:-1]], axis=0)    # (L, B, nc)

    # lyric occupies rows 0..B-1, tune rows B..2B-1 of every (2B, .) block
    lyric_rows = lax.broadcasted_iota(jnp.int32, (B2, 4 * GP), 0) < B

    xl = lyric_ref[...]                                       # (L, B, D0)
    xt = tune_ref[...]

    h = None
    for li in range(n_layers):
        D = layer_sizes[li]
        H = layer_sizes[li + 1]
        wx_ref, bx_ref, whh_ref = layer_refs[3 * li:3 * li + 3]

        # ---- hoisted non-recurrent precompute: ONE batched matmul, bias folded ----
        zd = jnp.zeros((L, B, D), f32)
        zn = jnp.zeros((L, B, nc), f32)
        lhs_l = jnp.concatenate([xl, zd, sm_in, sm_fg, zn, zn], axis=-1)
        lhs_t = jnp.concatenate([zd, xt, zn, zn, sm_fg, sm_in], axis=-1)
        lhs = jnp.concatenate([lhs_l, lhs_t], axis=1)         # (L, 2B, 2D+4nc)
        kx = 2 * D + 4 * nc
        lhs = lhs.reshape(L * B2, kx).astype(bf16)
        pre = jnp.dot(lhs, wx_ref[...], preferred_element_type=f32)  # (L*2B, 6*GP)
        bx = bx_ref[...]                                      # (2, 6*GP)
        bias2b = jnp.concatenate(
            [jnp.broadcast_to(bx[0:1], (B, 6 * GP)),
             jnp.broadcast_to(bx[1:2], (B, 6 * GP))], axis=0)  # (2B, 6*GP)
        pre = pre.reshape(L, B2, 6 * GP) + bias2b[None]

        whh = whh_ref[...]                                    # (GP, 8*GP) bf16

        # ---- recurrent loop: 1 small matmul + aligned vreg slices per step ----
        h = jnp.zeros((B2, GP), f32)
        c = jnp.zeros((B2, GP), f32)
        hs = []
        for t in range(L):
            rec = jnp.dot(h.astype(bf16), whh, preferred_element_type=f32)
            rec = jnp.where(lyric_rows, rec[:, :4 * GP], rec[:, 4 * GP:])
            g = pre[t, :, 0:4 * GP] + rec                     # (2B, 4*GP)
            cin = pre[t, :, 4 * GP:5 * GP]
            cfg = pre[t, :, 5 * GP:6 * GP]
            og = jax.nn.sigmoid(g[:, 0:GP])
            cg = jnp.tanh(g[:, GP:2 * GP])
            ig = jax.nn.sigmoid(g[:, 2 * GP:3 * GP])
            fg = jax.nn.sigmoid(g[:, 3 * GP:4 * GP])
            ov = cfg * cin
            fg = fg * ov + (cfg - ov)
            ig = ig * ov + (cin - ov)
            c = fg * c + ig * cg
            h = og * jnp.tanh(c)
            if li < n_layers - 1:
                hs.append(h)

        if li < n_layers - 1:
            h_all = jnp.stack(hs, axis=0)                     # (L, 2B, GP)
            xl = h_all[:, :B, :H]                             # lyric inputs, (L, B, H)
            xt = h_all[:, B:, :H]                             # tune inputs

    # ---- MLP head: Linear(2*H_last, 4) + Softmax ----
    feat = jnp.concatenate([h[:B], h[B:]], axis=-1)           # (B, 2*GP), lane-aligned
    logits = jnp.dot(feat, wm_ref[...], preferred_element_type=f32) + bm_ref[...]
    m = jnp.max(logits, axis=-1, keepdims=True)
    e = jnp.exp(logits - m)
    out_ref[...] = e / jnp.sum(e, axis=-1, keepdims=True)


# ----------------------------------------------------------------------------
# Wrapper: transpose + embedding lookup (plain-JAX glue), one pallas_call.
# No grid / BlockSpecs: total working set (<2 MiB) maps whole into VMEM.
# ----------------------------------------------------------------------------
def onlstm_stack_forward(lyric, tree_posi, tune, fused, layer_sizes, n_chunk):
    B, L, _ = lyric.shape
    lyric_x = jnp.transpose(lyric, (1, 0, 2)).astype(jnp.float32)   # (L, B, D0)
    tune_x = jnp.transpose(tune, (1, 0, 2)).astype(jnp.float32)     # (L, B, D0)
    # embedded_dropout (eval) == plain embedding lookup of sentiment_floor.t()[t]
    idx = jnp.transpose(tree_posi)[:L]                              # (L, B)
    floor_seq = fused["emb"][idx].astype(jnp.float32)               # (L, B, nc)

    kernel = functools.partial(_onlstm_stack_kernel,
                               layer_sizes=tuple(layer_sizes), n_chunk=n_chunk)
    args = [lyric_x, tune_x, floor_seq]
    for wx, bx, whh in fused["layers"]:
        args += [wx, bx, whh]
    args += [fused["mlp_w"], fused["mlp_b"]]

    n_cls = fused["mlp_w"].shape[1]
    return pl.pallas_call(
        kernel,
        out_shape=jax.ShapeDtypeStruct((B, n_cls), jnp.float32),
    )(*args)


onlstm_stack_forward_jit = jax.jit(
    onlstm_stack_forward, static_argnames=("layer_sizes", "n_chunk"))


# ----------------------------------------------------------------------------
# Deterministic parameter initialization (shapes match the PyTorch __init__;
# Linear weights stored pre-transposed as (in, out)).
# ----------------------------------------------------------------------------
def init_params(key, layer_sizes, n_chunk):
    def lin(k, in_dim, out_dim):
        k1, k2 = jax.random.split(k)
        w = jax.random.normal(k1, (in_dim, out_dim), jnp.float32) * 0.1
        b = jax.random.normal(k2, (1, out_dim), jnp.float32) * 0.1
        return w, b

    keys = iter(jax.random.split(key, 4 * (len(layer_sizes) - 1) + 2))
    params = {"cells": [], "tune_cells": []}
    for i in range(len(layer_sizes) - 1):
        d_in, h = layer_sizes[i], layer_sizes[i + 1]
        params["cells"].append(lin(next(keys), d_in, 4 * h) + lin(next(keys), h, 4 * h))
        params["tune_cells"].append(lin(next(keys), d_in, 4 * h) + lin(next(keys), h, 4 * h))
    params["emb"] = jax.random.normal(next(keys), (12, n_chunk), jnp.float32) * 0.1
    params["mlp_w"], params["mlp_b"] = lin(next(keys), 2 * layer_sizes[-1], 4)
    return params


# ----------------------------------------------------------------------------
# Pure-JAX eval-mode reference (mirrors the PyTorch forward) for validation.
# ----------------------------------------------------------------------------
def _forward_reference(lyric, tree_posi, tune, raw, layer_sizes, n_chunk):
    B, L, _ = lyric.shape
    nc = n_chunk
    half = nc // 2
    prev_l = jnp.transpose(lyric, (1, 0, 2)).astype(jnp.float32)
    prev_t = jnp.transpose(tune, (1, 0, 2)).astype(jnp.float32)
    idx = jnp.transpose(tree_posi)[:L]
    floor = raw["emb"][idx].astype(jnp.float32)

    def cumsoftmax(v):
        return jnp.cumsum(jax.nn.softmax(v, axis=-1), axis=-1)

    for li in range(len(layer_sizes) - 1):
        H = layer_sizes[li + 1]
        cs = H // nc
        wih_l, bih_l, whh_l, bhh_l = raw["cells"][li]
        wih_t, bih_t, whh_t, bhh_t = raw["tune_cells"][li]
        h_l = jnp.zeros((B, H)); c_l = jnp.zeros((B, H))
        h_t = jnp.zeros((B, H)); c_t = jnp.zeros((B, H))
        ff = jnp.zeros((B, nc))
        outs_l, outs_t = [], []

        def cell(x, h, c, wih, bih, whh, bhh, cin_e, cfg_e, H=H):
            g = x @ wih + bih + h @ whh + bhh
            og = jax.nn.sigmoid(g[:, :H]); cg = jnp.tanh(g[:, H:2 * H])
            ig = jax.nn.sigmoid(g[:, 2 * H:3 * H]); fg = jax.nn.sigmoid(g[:, 3 * H:])
            ov = cfg_e * cin_e
            fg = fg * ov + (cfg_e - ov)
            ig = ig * ov + (cin_e - ov)
            cy = fg * c + ig * cg
            return og * jnp.tanh(cy), cy

        for t in range(L):
            infl = floor[t]
            h_in, s_in = infl[:, :half], infl[:, half:]
            h_fg, s_fg = ff[:, :half], ff[:, half:]
            happy_cin = cumsoftmax(h_in)
            happy_cfg = jnp.flip(cumsoftmax(jnp.flip(h_fg, -1)), -1)
            sad_cin = jnp.flip(cumsoftmax(jnp.flip(s_in, -1)), -1)
            sad_cfg = cumsoftmax(s_fg)
            cin = jnp.repeat(jnp.concatenate([happy_cin, sad_cin], -1), cs, axis=-1)
            cfg = jnp.repeat(jnp.concatenate([happy_cfg, sad_cfg], -1), cs, axis=-1)
            h_l, c_l = cell(prev_l[t], h_l, c_l, wih_l, bih_l, whh_l, bhh_l, cin, cfg)
            h_t, c_t = cell(prev_t[t], h_t, c_t, wih_t, bih_t, whh_t, bhh_t, cfg, cin)
            outs_l.append(h_l); outs_t.append(h_t)
            ff = infl
        prev_l = jnp.stack(outs_l); prev_t = jnp.stack(outs_t)

    feat = jnp.concatenate([prev_l[-1], prev_t[-1]], axis=1)
    logits = feat @ raw["mlp_w"] + raw["mlp_b"]
    return jax.nn.softmax(logits, axis=-1)


if __name__ == "__main__":
    layer_sizes = (24, 48, 24)
    n_chunk = 12
    B, L = 4, 4

    key = jax.random.PRNGKey(0)
    kp, k1, k2, k3 = jax.random.split(key, 4)
    raw = init_params(kp, layer_sizes, n_chunk)
    fused = prepare_fused_params(raw, layer_sizes, n_chunk)

    lyric = jax.random.normal(k1, (B, L, layer_sizes[0]), jnp.float32)
    tune = jax.random.normal(k2, (B, L, layer_sizes[0]), jnp.float32)
    # TODO(synk): reference samples randint(-5, 5) which yields invalid negative
    # embedding indices; we sample valid indices in [0, 12).
    tree_posi = jax.random.randint(k3, (B, 12), 0, 12, dtype=jnp.int32)

    out = onlstm_stack_forward_jit(lyric, tree_posi, tune, fused,
                                   layer_sizes=layer_sizes, n_chunk=n_chunk)
    out = jax.block_until_ready(out)

    ref = _forward_reference(lyric, tree_posi, tune, raw, layer_sizes, n_chunk)

    assert out.shape == (B, 4)
    assert bool(jnp.all(jnp.isfinite(out)))
    assert float(jnp.max(jnp.abs(out - ref))) < 2e-2   # bf16 weights + MXU precision
    print("KERNEL_OK")
</pallas_src>

<mosaic_0001>
module attributes {stable_mosaic.version = 11 : i64} {
  func.func @_onlstm_stack_kernel(%arg0: memref<4x4x24xf32, #tpu.memory_space<vmem>>, %arg1: memref<4x4x24xf32, #tpu.memory_space<vmem>>, %arg2: memref<4x4x12xf32, #tpu.memory_space<vmem>>, %arg3: memref<96x768xbf16, #tpu.memory_space<vmem>>, %arg4: memref<2x768xf32, #tpu.memory_space<vmem>>, %arg5: memref<128x1024xbf16, #tpu.memory_space<vmem>>, %arg6: memref<144x768xbf16, #tpu.memory_space<vmem>>, %arg7: memref<2x768xf32, #tpu.memory_space<vmem>>, %arg8: memref<128x1024xbf16, #tpu.memory_space<vmem>>, %arg9: memref<256x4xf32, #tpu.memory_space<vmem>>, %arg10: memref<1x4xf32, #tpu.memory_space<vmem>>, %arg11: memref<4x4xf32, #tpu.memory_space<vmem>>) attributes {dimension_semantics = [], scalar_prefetch = 0 : i64, scratch_operands = 0 : i64, tpu.core_type = #tpu.core_type<tc>} {
    %c0 = arith.constant 0 : index
    %c0_0 = arith.constant 0 : index
    %c0_1 = arith.constant 0 : index
    %0 = vector.load %arg2[%c0, %c0_0, %c0_1] : memref<4x4x12xf32, #tpu.memory_space<vmem>>, vector<4x4x12xf32>
    %1 = vector.extract_strided_slice %0 {offsets = [0, 0, 0], sizes = [4, 4, 6], strides = [1, 1, 1]} : vector<4x4x12xf32> to vector<4x4x6xf32>
    %cst = arith.constant dense<0xFF800000> : vector<4x4xf32>
    %2 = vector.multi_reduction <maximumf>, %1, %cst [2] : vector<4x4x6xf32> to vector<4x4xf32>
    %3 = vector.shape_cast %2 : vector<4x4xf32> to vector<4x4x1xf32>
    %4 = vector.broadcast %3 : vector<4x4x1xf32> to vector<4x4x6xf32>
    %5 = arith.subf %1, %4 : vector<4x4x6xf32>
    %6 = math.exp %5 : vector<4x4x6xf32>
    %cst_2 = arith.constant dense<0.000000e+00> : vector<4x4xf32>
    %7 = vector.multi_reduction <add>, %6, %cst_2 [2] : vector<4x4x6xf32> to vector<4x4xf32>
    %8 = vector.shape_cast %7 : vector<4x4xf32> to vector<4x4x1xf32>
    %9 = vector.broadcast %8 : vector<4x4x1xf32> to vector<4x4x6xf32>
    %10 = arith.divf %6, %9 : vector<4x4x6xf32>
    %11 = vector.extract_strided_slice %0 {offsets = [0, 0, 6], sizes = [4, 4, 6], strides = [1, 1, 1]} : vector<4x4x12xf32> to vector<4x4x6xf32>
    %cst_3 = arith.constant dense<0xFF800000> : vector<4x4xf32>
    %12 = vector.multi_reduction <maximumf>, %11, %cst_3 [2] : vector<4x4x6xf32> to vector<4x4xf32>
    %13 = vector.shape_cast %12 : vector<4x4xf32> to vector<4x4x1xf32>
    %14 = vector.broadcast %13 : vector<4x4x1xf32> to vector<4x4x6xf32>
    %15 = arith.subf %11, %14 : vector<4x4x6xf32>
    %16 = math.exp %15 : vector<4x4x6xf32>
    %cst_4 = arith.constant dense<0.000000e+00> : vector<4x4xf32>
    %17 = vector.multi_reduction <add>, %16, %cst_4 [2] : vector<4x4x6xf32> to vector<4x4xf32>
    %18 = vector.shape_cast %17 : vector<4x4xf32> to vector<4x4x1xf32>
    %19 = vector.broadcast %18 : vector<4x4x1xf32> to vector<4x4x6xf32>
    %20 = arith.divf %16, %19 : vector<4x4x6xf32>
    %21 = tpu.concatenate %10, %20 in 2 : vector<4x4x6xf32>, vector<4x4x6xf32> -> vector<4x4x12xf32>
    %cst_5 = arith.constant 0.166666672 : f32
    %22 = vector.broadcast %cst_5 : f32 to vector<1x4x12xf32>
    %23 = vector.extract_strided_slice %21 {offsets = [0, 0, 0], sizes = [3, 4, 12], strides = [1, 1, 1]} : vector<4x4x12xf32> to vector<3x4x12xf32>
    %24 = tpu.concatenate %22, %23 in 0 : vector<1x4x12xf32>, vector<3x4x12xf32> -> vector<4x4x12xf32>
    %25 = tpu.iota {dimensions = array<i32: 0>} : vector<8x512xi32>
    %c4_i32 = arith.constant 4 : i32
    %26 = vector.broadcast %c4_i32 : i32 to vector<8x512xi32>
    %27 = arith.cmpi slt, %25, %26 : vector<8x512xi32>
    %c0_6 = arith.constant 0 : index
    %c0_7 = arith.constant 0 : index
    %c0_8 = arith.constant 0 : index
    %28 = vector.load %arg0[%c0_6, %c0_7, %c0_8] : memref<4x4x24xf32, #tpu.memory_space<vmem>>, vector<4x4x24xf32>
    %c0_9 = arith.constant 0 : index
    %c0_10 = arith.constant 0 : index
    %c0_11 = arith.constant 0 : index
    %29 = vector.load %arg1[%c0_9, %c0_10, %c0_11] : memref<4x4x24xf32, #tpu.memory_space<vmem>>, vector<4x4x24xf32>
    %cst_12 = arith.constant 0.000000e+00 : f32
    %30 = vector.broadcast %cst_12 : f32 to vector<4x4x24xf32>
    %cst_13 = arith.constant 0.000000e+00 : f32
    %31 = vector.broadcast %cst_13 : f32 to vector<4x4x12xf32>
    %32 = tpu.concatenate %28, %30, %21, %24, %31, %31 in 2 : vector<4x4x24xf32>, vector<4x4x24xf32>, vector<4x4x12xf32>, vector<4x4x12xf32>, vector<4x4x12xf32>, vector<4x4x12xf32> -> vector<4x4x96xf32>
    %33 = tpu.concatenate %30, %29, %31, %31, %24, %21 in 2 : vector<4x4x24xf32>, vector<4x4x24xf32>, vector<4x4x12xf32>, vector<4x4x12xf32>, vector<4x4x12xf32>, vector<4x4x12xf32> -> vector<4x4x96xf32>
    %34 = tpu.concatenate %32, %33 in 1 : vector<4x4x96xf32>, vector<4x4x96xf32> -> vector<4x8x96xf32>
    %35 = vector.shape_cast %34 : vector<4x8x96xf32> to vector<32x96xf32>
    %36 = arith.truncf %35 : vector<32x96xf32> to vector<32x96xbf16>
    %c0_14 = arith.constant 0 : index
    %c0_15 = arith.constant 0 : index
    %37 = vector.load %arg3[%c0_14, %c0_15] : memref<96x768xbf16, #tpu.memory_space<vmem>>, vector<96x768xbf16>
    %cst_16 = arith.constant dense<0.000000e+00> : vector<32x768xf32>
    %38 = tpu.matmul %36, %37, %cst_16 {dimension_numbers = #tpu.dot_dimension_numbers<[1], [0], [0], [1], [0, 0, 1, 1], [], []>} : vector<32x96xbf16>, vector<96x768xbf16>, vector<32x768xf32> -> vector<32x768xf32>
    %c0_17 = arith.constant 0 : index
    %c0_18 = arith.constant 0 : index
    %39 = vector.load %arg4[%c0_17, %c0_18] : memref<2x768xf32, #tpu.memory_space<vmem>>, vector<2x768xf32>
    %40 = vector.extract_strided_slice %39 {offsets = [0, 0], sizes = [1, 768], strides = [1, 1]} : vector<2x768xf32> to vector<1x768xf32>
    %41 = vector.shape_cast %40 : vector<1x768xf32> to vector<1x768xf32>
    %42 = vector.broadcast %41 : vector<1x768xf32> to vector<4x768xf32>
    %43 = vector.extract_strided_slice %39 {offsets = [1, 0], sizes = [1, 768], strides = [1, 1]} : vector<2x768xf32> to vector<1x768xf32>
    %44 = vector.shape_cast %43 : vector<1x768xf32> to vector<1x768xf32>
    %45 = vector.broadcast %44 : vector<1x768xf32> to vector<4x768xf32>
    %46 = tpu.concatenate %42, %45 in 0 : vector<4x768xf32>, vector<4x768xf32> -> vector<8x768xf32>
    %47 = vector.shape_cast %38 : vector<32x768xf32> to vector<4x8x768xf32>
    %48 = vector.shape_cast %46 : vector<8x768xf32> to vector<1x8x768xf32>
    %49 = vector.broadcast %48 : vector<1x8x768xf32> to vector<4x8x768xf32>
    %50 = arith.addf %47, %49 : vector<4x8x768xf32>
    %c0_19 = arith.constant 0 : index
    %c0_20 = arith.constant 0 : index
    %51 = vector.load %arg5[%c0_19, %c0_20] : memref<128x1024xbf16, #tpu.memory_space<vmem>>, vector<128x1024xbf16>
    %cst_21 = arith.constant 0.000000e+00 : f32
    %52 = vector.broadcast %cst_21 : f32 to vector<8x128xf32>
    %cst_22 = arith.constant 0.000000e+00 : f32
    %53 = vector.broadcast %cst_22 : f32 to vector<8x128xf32>
    %54 = arith.truncf %52 : vector<8x128xf32> to vector<8x128xbf16>
    %cst_23 = arith.constant dense<0.000000e+00> : vector<8x1024xf32>
    %55 = tpu.matmul %54, %51, %cst_23 {dimension_numbers = #tpu.dot_dimension_numbers<[1], [0], [0], [1], [0, 0, 1, 1], [], []>} : vector<8x128xbf16>, vector<128x1024xbf16>, vector<8x1024xf32> -> vector<8x1024xf32>
    %56 = vector.extract_strided_slice %55 {offsets = [0, 0], sizes = [8, 512], strides = [1, 1]} : vector<8x1024xf32> to vector<8x512xf32>
    %57 = vector.extract_strided_slice %55 {offsets = [0, 512], sizes = [8, 512], strides = [1, 1]} : vector<8x1024xf32> to vector<8x512xf32>
    %58 = arith.select %27, %56, %57 : vector<8x512xi1>, vector<8x512xf32>
    %59 = vector.extract_strided_slice %50 {offsets = [0, 0, 0], sizes = [1, 8, 512], strides = [1, 1, 1]} : vector<4x8x768xf32> to vector<1x8x512xf32>
    %60 = vector.shape_cast %59 : vector<1x8x512xf32> to vector<8x512xf32>
    %61 = arith.addf %60, %58 : vector<8x512xf32>
    %62 = vector.extract_strided_slice %50 {offsets = [0, 0, 512], sizes = [1, 8, 128], strides = [1, 1, 1]} : vector<4x8x768xf32> to vector<1x8x128xf32>
    %63 = vector.shape_cast %62 : vector<1x8x128xf32> to vector<8x128xf32>
    %64 = vector.extract_strided_slice %50 {offsets = [0, 0, 640], sizes = [1, 8, 128], strides = [1, 1, 1]} : vector<4x8x768xf32> to vector<1x8x128xf32>
    %65 = vector.shape_cast %64 : vector<1x8x128xf32> to vector<8x128xf32>
    %66 = vector.extract_strided_slice %61 {offsets = [0, 0], sizes = [8, 128], strides = [1, 1]} : vector<8x512xf32> to vector<8x128xf32>
    %67 = arith.negf %66 : vector<8x128xf32>
    %68 = math.exp %67 : vector<8x128xf32>
    %cst_24 = arith.constant 1.000000e+00 : f32
    %69 = vector.broadcast %cst_24 : f32 to vector<8x128xf32>
    %70 = arith.addf %69, %68 : vector<8x128xf32>
    %71 = arith.divf %69, %70 : vector<8x128xf32>
    %72 = vector.extract_strided_slice %61 {offsets = [0, 128], sizes = [8, 128], strides = [1, 1]} : vector<8x512xf32> to vector<8x128xf32>
    %73 = math.tanh %72 : vector<8x128xf32>
    %74 = vector.extract_strided_slice %61 {offsets = [0, 256], sizes = [8, 128], strides = [1, 1]} : vector<8x512xf32> to vector<8x128xf32>
    %75 = arith.negf %74 : vector<8x128xf32>
    %76 = math.exp %75 : vector<8x128xf32>
    %cst_25 = arith.constant 1.000000e+00 : f32
    %77 = vector.broadcast %cst_25 : f32 to vector<8x128xf32>
    %78 = arith.addf %77, %76 : vector<8x128xf32>
    %79 = arith.divf %77, %78 : vector<8x128xf32>
    %80 = vector.extract_strided_slice %61 {offsets = [0, 384], sizes = [8, 128], strides = [1, 1]} : vector<8x512xf32> to vector<8x128xf32>
    %81 = arith.negf %80 : vector<8x128xf32>
    %82 = math.exp %81 : vector<8x128xf32>
    %cst_26 = arith.constant 1.000000e+00 : f32
    %83 = vector.broadcast %cst_26 : f32 to vector<8x128xf32>
    %84 = arith.addf %83, %82 : vector<8x128xf32>
    %85 = arith.divf %83, %84 : vector<8x128xf32>
    %86 = arith.mulf %65, %63 : vector<8x128xf32>
    %87 = arith.mulf %85, %86 : vector<8x128xf32>
    %88 = arith.subf %65, %86 : vector<8x128xf32>
    %89 = arith.addf %87, %88 : vector<8x128xf32>
    %90 = arith.mulf %79, %86 : vector<8x128xf32>
    %91 = arith.subf %63, %86 : vector<8x128xf32>
    %92 = arith.addf %90, %91 : vector<8x128xf32>
    %93 = arith.mulf %89, %53 : vector<8x128xf32>
    %94 = arith.mulf %92, %73 : vector<8x128xf32>
    %95 = arith.addf %93, %94 : vector<8x128xf32>
    %96 = math.tanh %95 : vector<8x128xf32>
    %97 = arith.mulf %71, %96 : vector<8x128xf32>
    %98 = arith.truncf %97 : vector<8x128xf32> to vector<8x128xbf16>
    %cst_27 = arith.constant dense<0.000000e+00> : vector<8x1024xf32>
    %99 = tpu.matmul %98, %51, %cst_27 {dimension_numbers = #tpu.dot_dimension_numbers<[1], [0], [0], [1], [0, 0, 1, 1], [], []>} : vector<8x128xbf16>, vector<128x1024xbf16>, vector<8x1024xf32> -> vector<8x1024xf32>
    %100 = vector.extract_strided_slice %99 {offsets = [0, 0], sizes = [8, 512], strides = [1, 1]} : vector<8x1024xf32> to vector<8x512xf32>
    %101 = vector.extract_strided_slice %99 {offsets = [0, 512], sizes = [8, 512], strides = [1, 1]} : vector<8x1024xf32> to vector<8x512xf32>
    %102 = arith.select %27, %100, %101 : vector<8x512xi1>, vector<8x512xf32>
    %103 = vector.extract_strided_slice %50 {offsets = [1, 0, 0], sizes = [1, 8, 512], strides = [1, 1, 1]} : vector<4x8x768xf32> to vector<1x8x512xf32>
    %104 = vector.shape_cast %103 : vector<1x8x512xf32> to vector<8x512xf32>
    %105 = arith.addf %104, %102 : vector<8x512xf32>
    %106 = vector.extract_strided_slice %50 {offsets = [1, 0, 512], sizes = [1, 8, 128], strides = [1, 1, 1]} : vector<4x8x768xf32> to vector<1x8x128xf32>
    %107 = vector.shape_cast %106 : vector<1x8x128xf32> to vector<8x128xf32>
    %108 = vector.extract_strided_slice %50 {offsets = [1, 0, 640], sizes = [1, 8, 128], strides = [1, 1, 1]} : vector<4x8x768xf32> to vector<1x8x128xf32>
    %109 = vector.shape_cast %108 : vector<1x8x128xf32> to vector<8x128xf32>
    %110 = vector.extract_strided_slice %105 {offsets = [0, 0], sizes = [8, 128], strides = [1, 1]} : vector<8x512xf32> to vector<8x128xf32>
    %111 = arith.negf %110 : vector<8x128xf32>
    %112 = math.exp %111 : vector<8x128xf32>
    %cst_28 = arith.constant 1.000000e+00 : f32
    %113 = vector.broadcast %cst_28 : f32 to vector<8x128xf32>
    %114 = arith.addf %113, %112 : vector<8x128xf32>
    %115 = arith.divf %113, %114 : vector<8x128xf32>
    %116 = vector.extract_strided_slice %105 {offsets = [0, 128], sizes = [8, 128], strides = [1, 1]} : vector<8x512xf32> to vector<8x128xf32>
    %117 = math.tanh %116 : vector<8x128xf32>
    %118 = vector.extract_strided_slice %105 {offsets = [0, 256], sizes = [8, 128], strides = [1, 1]} : vector<8x512xf32> to vector<8x128xf32>
    %119 = arith.negf %118 : vector<8x128xf32>
    %120 = math.exp %119 : vector<8x128xf32>
    %cst_29 = arith.constant 1.000000e+00 : f32
    %121 = vector.broadcast %cst_29 : f32 to vector<8x128xf32>
    %122 = arith.addf %121, %120 : vector<8x128xf32>
    %123 = arith.divf %121, %122 : vector<8x128xf32>
    %124 = vector.extract_strided_slice %105 {offsets = [0, 384], sizes = [8, 128], strides = [1, 1]} : vector<8x512xf32> to vector<8x128xf32>
    %125 = arith.negf %124 : vector<8x128xf32>
    %126 = math.exp %125 : vector<8x128xf32>
    %cst_30 = arith.constant 1.000000e+00 : f32
    %127 = vector.broadcast %cst_30 : f32 to vector<8x128xf32>
    %128 = arith.addf %127, %126 : vector<8x128xf32>
    %129 = arith.divf %127, %128 : vector<8x128xf32>
    %130 = arith.mulf %109, %107 : vector<8x128xf32>
    %131 = arith.mulf %129, %130 : vector<8x128xf32>
    %132 = arith.subf %109, %130 : vector<8x128xf32>
    %133 = arith.addf %131, %132 : vector<8x128xf32>
    %134 = arith.mulf %123, %130 : vector<8x128xf32>
    %135 = arith.subf %107, %130 : vector<8x128xf32>
    %136 = arith.addf %134, %135 : vector<8x128xf32>
    %137 = arith.mulf %133, %95 : vector<8x128xf32>
    %138 = arith.mulf %136, %117 : vector<8x128xf32>
    %139 = arith.addf %137, %138 : vector<8x128xf32>
    %140 = math.tanh %139 : vector<8x128xf32>
    %141 = arith.mulf %115, %140 : vector<8x128xf32>
    %142 = arith.truncf %141 : vector<8x128xf32> to vector<8x128xbf16>
    %cst_31 = arith.constant dense<0.000000e+00> : vector<8x1024xf32>
    %143 = tpu.matmul %142, %51, %cst_31 {dimension_numbers = #tpu.dot_dimension_numbers<[1], [0], [0], [1], [0, 0, 1, 1], [], []>} : vector<8x128xbf16>, vector<128x1024xbf16>, vector<8x1024xf32> -> vector<8x1024xf32>
    %144 = vector.extract_strided_slice %143 {offsets = [0, 0], sizes = [8, 512], strides = [1, 1]} : vector<8x1024xf32> to vector<8x512xf32>
    %145 = vector.extract_strided_slice %143 {offsets = [0, 512], sizes = [8, 512], strides = [1, 1]} : vector<8x1024xf32> to vector<8x512xf32>
    %146 = arith.select %27, %144, %145 : vector<8x512xi1>, vector<8x512xf32>
    %147 = vector.extract_strided_slice %50 {offsets = [2, 0, 0], sizes = [1, 8, 512], strides = [1, 1, 1]} : vector<4x8x768xf32> to vector<1x8x512xf32>
    %148 = vector.shape_cast %147 : vector<1x8x512xf32> to vector<8x512xf32>
    %149 = arith.addf %148, %146 : vector<8x512xf32>
    %150 = vector.extract_strided_slice %50 {offsets = [2, 0, 512], sizes = [1, 8, 128], strides = [1, 1, 1]} : vector<4x8x768xf32> to vector<1x8x128xf32>
    %151 = vector.shape_cast %150 : vector<1x8x128xf32> to vector<8x128xf32>
    %152 = vector.extract_strided_slice %50 {offsets = [2, 0, 640], sizes = [1, 8, 128], strides = [1, 1, 1]} : vector<4x8x768xf32> to vector<1x8x128xf32>
    %153 = vector.shape_cast %152 : vector<1x8x128xf32> to vector<8x128xf32>
    %154 = vector.extract_strided_slice %149 {offsets = [0, 0], sizes = [8, 128], strides = [1, 1]} : vector<8x512xf32> to vector<8x128xf32>
    %155 = arith.negf %154 : vector<8x128xf32>
    %156 = math.exp %155 : vector<8x128xf32>
    %cst_32 = arith.constant 1.000000e+00 : f32
    %157 = vector.broadcast %cst_32 : f32 to vector<8x128xf32>
    %158 = arith.addf %157, %156 : vector<8x128xf32>
    %159 = arith.divf %157, %158 : vector<8x128xf32>
    %160 = vector.extract_strided_slice %149 {offsets = [0, 128], sizes = [8, 128], strides = [1, 1]} : vector<8x512xf32> to vector<8x128xf32>
    %161 = math.tanh %160 : vector<8x128xf32>
    %162 = vector.extract_strided_slice %149 {offsets = [0, 256], sizes = [8, 128], strides = [1, 1]} : vector<8x512xf32> to vector<8x128xf32>
    %163 = arith.negf %162 : vector<8x128xf32>
    %164 = math.exp %163 : vector<8x128xf32>
    %cst_33 = arith.constant 1.000000e+00 : f32
    %165 = vector.broadcast %cst_33 : f32 to vector<8x128xf32>
    %166 = arith.addf %165, %164 : vector<8x128xf32>
    %167 = arith.divf %165, %166 : vector<8x128xf32>
    %168 = vector.extract_strided_slice %149 {offsets = [0, 384], sizes = [8, 128], strides = [1, 1]} : vector<8x512xf32> to vector<8x128xf32>
    %169 = arith.negf %168 : vector<8x128xf32>
    %170 = math.exp %169 : vector<8x128xf32>
    %cst_34 = arith.constant 1.000000e+00 : f32
    %171 = vector.broadcast %cst_34 : f32 to vector<8x128xf32>
    %172 = arith.addf %171, %170 : vector<8x128xf32>
    %173 = arith.divf %171, %172 : vector<8x128xf32>
    %174 = arith.mulf %153, %151 : vector<8x128xf32>
    %175 = arith.mulf %173, %174 : vector<8x128xf32>
    %176 = arith.subf %153, %174 : vector<8x128xf32>
    %177 = arith.addf %175, %176 : vector<8x128xf32>
    %178 = arith.mulf %167, %174 : vector<8x128xf32>
    %179 = arith.subf %151, %174 : vector<8x128xf32>
    %180 = arith.addf %178, %179 : vector<8x128xf32>
    %181 = arith.mulf %177, %139 : vector<8x128xf32>
    %182 = arith.mulf %180, %161 : vector<8x128xf32>
    %183 = arith.addf %181, %182 : vector<8x128xf32>
    %184 = math.tanh %183 : vector<8x128xf32>
    %185 = arith.mulf %159, %184 : vector<8x128xf32>
    %186 = arith.truncf %185 : vector<8x128xf32> to vector<8x128xbf16>
    %cst_35 = arith.constant dense<0.000000e+00> : vector<8x1024xf32>
    %187 = tpu.matmul %186, %51, %cst_35 {dimension_numbers = #tpu.dot_dimension_numbers<[1], [0], [0], [1], [0, 0, 1, 1], [], []>} : vector<8x128xbf16>, vector<128x1024xbf16>, vector<8x1024xf32> -> vector<8x1024xf32>
    %188 = vector.extract_strided_slice %187 {offsets = [0, 0], sizes = [8, 512], strides = [1, 1]} : vector<8x1024xf32> to vector<8x512xf32>
    %189 = vector.extract_strided_slice %187 {offsets = [0, 512], sizes = [8, 512], strides = [1, 1]} : vector<8x1024xf32> to vector<8x512xf32>
    %190 = arith.select %27, %188, %189 : vector<8x512xi1>, vector<8x512xf32>
    %191 = vector.extract_strided_slice %50 {offsets = [3, 0, 0], sizes = [1, 8, 512], strides = [1, 1, 1]} : vector<4x8x768xf32> to vector<1x8x512xf32>
    %192 = vector.shape_cast %191 : vector<1x8x512xf32> to vector<8x512xf32>
    %193 = arith.addf %192, %190 : vector<8x512xf32>
    %194 = vector.extract_strided_slice %50 {offsets = [3, 0, 512], sizes = [1, 8, 128], strides = [1, 1, 1]} : vector<4x8x768xf32> to vector<1x8x128xf32>
    %195 = vector.shape_cast %194 : vector<1x8x128xf32> to vector<8x128xf32>
    %196 = vector.extract_strided_slice %50 {offsets = [3, 0, 640], sizes = [1, 8, 128], strides = [1, 1, 1]} : vector<4x8x768xf32> to vector<1x8x128xf32>
    %197 = vector.shape_cast %196 : vector<1x8x128xf32> to vector<8x128xf32>
    %198 = vector.extract_strided_slice %193 {offsets = [0, 0], sizes = [8, 128], strides = [1, 1]} : vector<8x512xf32> to vector<8x128xf32>
    %199 = arith.negf %198 : vector<8x128xf32>
    %200 = math.exp %199 : vector<8x128xf32>
    %cst_36 = arith.constant 1.000000e+00 : f32
    %201 = vector.broadcast %cst_36 : f32 to vector<8x128xf32>
    %202 = arith.addf %201, %200 : vector<8x128xf32>
    %203 = arith.divf %201, %202 : vector<8x128xf32>
    %204 = vector.extract_strided_slice %193 {offsets = [0, 128], sizes = [8, 128], strides = [1, 1]} : vector<8x512xf32> to vector<8x128xf32>
    %205 = math.tanh %204 : vector<8x128xf32>
    %206 = vector.extract_strided_slice %193 {offsets = [0, 256], sizes = [8, 128], strides = [1, 1]} : vector<8x512xf32> to vector<8x128xf32>
    %207 = arith.negf %206 : vector<8x128xf32>
    %208 = math.exp %207 : vector<8x128xf32>
    %cst_37 = arith.constant 1.000000e+00 : f32
    %209 = vector.broadcast %cst_37 : f32 to vector<8x128xf32>
    %210 = arith.addf %209, %208 : vector<8x128xf32>
    %211 = arith.divf %209, %210 : vector<8x128xf32>
    %212 = vector.extract_strided_slice %193 {offsets = [0, 384], sizes = [8, 128], strides = [1, 1]} : vector<8x512xf32> to vector<8x128xf32>
    %213 = arith.negf %212 : vector<8x128xf32>
    %214 = math.exp %213 : vector<8x128xf32>
    %cst_38 = arith.constant 1.000000e+00 : f32
    %215 = vector.broadcast %cst_38 : f32 to vector<8x128xf32>
    %216 = arith.addf %215, %214 : vector<8x128xf32>
    %217 = arith.divf %215, %216 : vector<8x128xf32>
    %218 = arith.mulf %197, %195 : vector<8x128xf32>
    %219 = arith.mulf %217, %218 : vector<8x128xf32>
    %220 = arith.subf %197, %218 : vector<8x128xf32>
    %221 = arith.addf %219, %220 : vector<8x128xf32>
    %222 = arith.mulf %211, %218 : vector<8x128xf32>
    %223 = arith.subf %195, %218 : vector<8x128xf32>
    %224 = arith.addf %222, %223 : vector<8x128xf32>
    %225 = arith.mulf %221, %183 : vector<8x128xf32>
    %226 = arith.mulf %224, %205 : vector<8x128xf32>
    %227 = arith.addf %225, %226 : vector<8x128xf32>
    %228 = math.tanh %227 : vector<8x128xf32>
    %229 = arith.mulf %203, %228 : vector<8x128xf32>
    %230 = vector.shape_cast %97 : vector<8x128xf32> to vector<1x8x128xf32>
    %231 = vector.shape_cast %141 : vector<8x128xf32> to vector<1x8x128xf32>
    %232 = vector.shape_cast %185 : vector<8x128xf32> to vector<1x8x128xf32>
    %233 = vector.shape_cast %229 : vector<8x128xf32> to vector<1x8x128xf32>
    %234 = tpu.concatenate %230, %231, %232, %233 in 0 : vector<1x8x128xf32>, vector<1x8x128xf32>, vector<1x8x128xf32>, vector<1x8x128xf32> -> vector<4x8x128xf32>
    %235 = vector.extract_strided_slice %234 {offsets = [0, 0, 0], sizes = [4, 4, 48], strides = [1, 1, 1]} : vector<4x8x128xf32> to vector<4x4x48xf32>
    %236 = vector.extract_strided_slice %234 {offsets = [0, 4, 0], sizes = [4, 4, 48], strides = [1, 1, 1]} : vector<4x8x128xf32> to vector<4x4x48xf32>
    %cst_39 = arith.constant 0.000000e+00 : f32
    %237 = vector.broadcast %cst_39 : f32 to vector<4x4x48xf32>
    %cst_40 = arith.constant 0.000000e+00 : f32
    %238 = vector.broadcast %cst_40 : f32 to vector<4x4x12xf32>
    %239 = tpu.concatenate %235, %237, %21, %24, %238, %238 in 2 : vector<4x4x48xf32>, vector<4x4x48xf32>, vector<4x4x12xf32>, vector<4x4x12xf32>, vector<4x4x12xf32>, vector<4x4x12xf32> -> vector<4x4x144xf32>
    %240 = tpu.concatenate %237, %236, %238, %238, %24, %21 in 2 : vector<4x4x48xf32>, vector<4x4x48xf32>, vector<4x4x12xf32>, vector<4x4x12xf32>, vector<4x4x12xf32>, vector<4x4x12xf32> -> vector<4x4x144xf32>
    %241 = tpu.concatenate %239, %240 in 1 : vector<4x4x144xf32>, vector<4x4x144xf32> -> vector<4x8x144xf32>
    %242 = vector.shape_cast %241 : vector<4x8x144xf32> to vector<32x144xf32>
    %243 = arith.truncf %242 : vector<32x144xf32> to vector<32x144xbf16>
    %c0_41 = arith.constant 0 : index
    %c0_42 = arith.constant 0 : index
    %244 = vector.load %arg6[%c0_41, %c0_42] : memref<144x768xbf16, #tpu.memory_space<vmem>>, vector<144x768xbf16>
    %cst_43 = arith.constant dense<0.000000e+00> : vector<32x768xf32>
    %245 = tpu.matmul %243, %244, %cst_43 {dimension_numbers = #tpu.dot_dimension_numbers<[1], [0], [0], [1], [0, 0, 1, 1], [], []>} : vector<32x144xbf16>, vector<144x768xbf16>, vector<32x768xf32> -> vector<32x768xf32>
    %c0_44 = arith.constant 0 : index
    %c0_45 = arith.constant 0 : index
    %246 = vector.load %arg7[%c0_44, %c0_45] : memref<2x768xf32, #tpu.memory_space<vmem>>, vector<2x768xf32>
    %247 = vector.extract_strided_slice %246 {offsets = [0, 0], sizes = [1, 768], strides = [1, 1]} : vector<2x768xf32> to vector<1x768xf32>
    %248 = vector.shape_cast %247 : vector<1x768xf32> to vector<1x768xf32>
    %249 = vector.broadcast %248 : vector<1x768xf32> to vector<4x768xf32>
    %250 = vector.extract_strided_slice %246 {offsets = [1, 0], sizes = [1, 768], strides = [1, 1]} : vector<2x768xf32> to vector<1x768xf32>
    %251 = vector.shape_cast %250 : vector<1x768xf32> to vector<1x768xf32>
    %252 = vector.broadcast %251 : vector<1x768xf32> to vector<4x768xf32>
    %253 = tpu.concatenate %249, %252 in 0 : vector<4x768xf32>, vector<4x768xf32> -> vector<8x768xf32>
    %254 = vector.shape_cast %245 : vector<32x768xf32> to vector<4x8x768xf32>
    %255 = vector.shape_cast %253 : vector<8x768xf32> to vector<1x8x768xf32>
    %256 = vector.broadcast %255 : vector<1x8x768xf32> to vector<4x8x768xf32>
    %257 = arith.addf %254, %256 : vector<4x8x768xf32>
    %c0_46 = arith.constant 0 : index
    %c0_47 = arith.constant 0 : index
    %258 = vector.load %arg8[%c0_46, %c0_47] : memref<128x1024xbf16, #tpu.memory_space<vmem>>, vector<128x1024xbf16>
    %cst_48 = arith.constant 0.000000e+00 : f32
    %259 = vector.broadcast %cst_48 : f32 to vector<8x128xf32>
    %cst_49 = arith.constant 0.000000e+00 : f32
    %260 = vector.broadcast %cst_49 : f32 to vector<8x128xf32>
    %261 = arith.truncf %259 : vector<8x128xf32> to vector<8x128xbf16>
    %cst_50 = arith.constant dense<0.000000e+00> : vector<8x1024xf32>
    %262 = tpu.matmul %261, %258, %cst_50 {dimension_numbers = #tpu.dot_dimension_numbers<[1], [0], [0], [1], [0, 0, 1, 1], [], []>} : vector<8x128xbf16>, vector<128x1024xbf16>, vector<8x1024xf32> -> vector<8x1024xf32>
    %263 = vector.extract_strided_slice %262 {offsets = [0, 0], sizes = [8, 512], strides = [1, 1]} : vector<8x1024xf32> to vector<8x512xf32>
    %264 = vector.extract_strided_slice %262 {offsets = [0, 512], sizes = [8, 512], strides = [1, 1]} : vector<8x1024xf32> to vector<8x512xf32>
    %265 = arith.select %27, %263, %264 : vector<8x512xi1>, vector<8x512xf32>
    %266 = vector.extract_strided_slice %257 {offsets = [0, 0, 0], sizes = [1, 8, 512], strides = [1, 1, 1]} : vector<4x8x768xf32> to vector<1x8x512xf32>
    %267 = vector.shape_cast %266 : vector<1x8x512xf32> to vector<8x512xf32>
    %268 = arith.addf %267, %265 : vector<8x512xf32>
    %269 = vector.extract_strided_slice %257 {offsets = [0, 0, 512], sizes = [1, 8, 128], strides = [1, 1, 1]} : vector<4x8x768xf32> to vector<1x8x128xf32>
    %270 = vector.shape_cast %269 : vector<1x8x128xf32> to vector<8x128xf32>
    %271 = vector.extract_strided_slice %257 {offsets = [0, 0, 640], sizes = [1, 8, 128], strides = [1, 1, 1]} : vector<4x8x768xf32> to vector<1x8x128xf32>
    %272 = vector.shape_cast %271 : vector<1x8x128xf32> to vector<8x128xf32>
    %273 = vector.extract_strided_slice %268 {offsets = [0, 0], sizes = [8, 128], strides = [1, 1]} : vector<8x512xf32> to vector<8x128xf32>
    %274 = arith.negf %273 : vector<8x128xf32>
    %275 = math.exp %274 : vector<8x128xf32>
    %cst_51 = arith.constant 1.000000e+00 : f32
    %276 = vector.broadcast %cst_51 : f32 to vector<8x128xf32>
    %277 = arith.addf %276, %275 : vector<8x128xf32>
    %278 = arith.divf %276, %277 : vector<8x128xf32>
    %279 = vector.extract_strided_slice %268 {offsets = [0, 128], sizes = [8, 128], strides = [1, 1]} : vector<8x512xf32> to vector<8x128xf32>
    %280 = math.tanh %279 : vector<8x128xf32>
    %281 = vector.extract_strided_slice %268 {offsets = [0, 256], sizes = [8, 128], strides = [1, 1]} : vector<8x512xf32> to vector<8x128xf32>
    %282 = arith.negf %281 : vector<8x128xf32>
    %283 = math.exp %282 : vector<8x128xf32>
    %cst_52 = arith.constant 1.000000e+00 : f32
    %284 = vector.broadcast %cst_52 : f32 to vector<8x128xf32>
    %285 = arith.addf %284, %283 : vector<8x128xf32>
    %286 = arith.divf %284, %285 : vector<8x128xf32>
    %287 = vector.extract_strided_slice %268 {offsets = [0, 384], sizes = [8, 128], strides = [1, 1]} : vector<8x512xf32> to vector<8x128xf32>
    %288 = arith.negf %287 : vector<8x128xf32>
    %289 = math.exp %288 : vector<8x128xf32>
    %cst_53 = arith.constant 1.000000e+00 : f32
    %290 = vector.broadcast %cst_53 : f32 to vector<8x128xf32>
    %291 = arith.addf %290, %289 : vector<8x128xf32>
    %292 = arith.divf %290, %291 : vector<8x128xf32>
    %293 = arith.mulf %272, %270 : vector<8x128xf32>
    %294 = arith.mulf %292, %293 : vector<8x128xf32>
    %295 = arith.subf %272, %293 : vector<8x128xf32>
    %296 = arith.addf %294, %295 : vector<8x128xf32>
    %297 = arith.mulf %286, %293 : vector<8x128xf32>
    %298 = arith.subf %270, %293 : vector<8x128xf32>
    %299 = arith.addf %297, %298 : vector<8x128xf32>
    %300 = arith.mulf %296, %260 : vector<8x128xf32>
    %301 = arith.mulf %299, %280 : vector<8x128xf32>
    %302 = arith.addf %300, %301 : vector<8x128xf32>
    %303 = math.tanh %302 : vector<8x128xf32>
    %304 = arith.mulf %278, %303 : vector<8x128xf32>
    %305 = arith.truncf %304 : vector<8x128xf32> to vector<8x128xbf16>
    %cst_54 = arith.constant dense<0.000000e+00> : vector<8x1024xf32>
    %306 = tpu.matmul %305, %258, %cst_54 {dimension_numbers = #tpu.dot_dimension_numbers<[1], [0], [0], [1], [0, 0, 1, 1], [], []>} : vector<8x128xbf16>, vector<128x1024xbf16>, vector<8x1024xf32> -> vector<8x1024xf32>
    %307 = vector.extract_strided_slice %306 {offsets = [0, 0], sizes = [8, 512], strides = [1, 1]} : vector<8x1024xf32> to vector<8x512xf32>
    %308 = vector.extract_strided_slice %306 {offsets = [0, 512], sizes = [8, 512], strides = [1, 1]} : vector<8x1024xf32> to vector<8x512xf32>
    %309 = arith.select %27, %307, %308 : vector<8x512xi1>, vector<8x512xf32>
    %310 = vector.extract_strided_slice %257 {offsets = [1, 0, 0], sizes = [1, 8, 512], strides = [1, 1, 1]} : vector<4x8x768xf32> to vector<1x8x512xf32>
    %311 = vector.shape_cast %310 : vector<1x8x512xf32> to vector<8x512xf32>
    %312 = arith.addf %311, %309 : vector<8x512xf32>
    %313 = vector.extract_strided_slice %257 {offsets = [1, 0, 512], sizes = [1, 8, 128], strides = [1, 1, 1]} : vector<4x8x768xf32> to vector<1x8x128xf32>
    %314 = vector.shape_cast %313 : vector<1x8x128xf32> to vector<8x128xf32>
    %315 = vector.extract_strided_slice %257 {offsets = [1, 0, 640], sizes = [1, 8, 128], strides = [1, 1, 1]} : vector<4x8x768xf32> to vector<1x8x128xf32>
    %316 = vector.shape_cast %315 : vector<1x8x128xf32> to vector<8x128xf32>
    %317 = vector.extract_strided_slice %312 {offsets = [0, 0], sizes = [8, 128], strides = [1, 1]} : vector<8x512xf32> to vector<8x128xf32>
    %318 = arith.negf %317 : vector<8x128xf32>
    %319 = math.exp %318 : vector<8x128xf32>
    %cst_55 = arith.constant 1.000000e+00 : f32
    %320 = vector.broadcast %cst_55 : f32 to vector<8x128xf32>
    %321 = arith.addf %320, %319 : vector<8x128xf32>
    %322 = arith.divf %320, %321 : vector<8x128xf32>
    %323 = vector.extract_strided_slice %312 {offsets = [0, 128], sizes = [8, 128], strides = [1, 1]} : vector<8x512xf32> to vector<8x128xf32>
    %324 = math.tanh %323 : vector<8x128xf32>
    %325 = vector.extract_strided_slice %312 {offsets = [0, 256], sizes = [8, 128], strides = [1, 1]} : vector<8x512xf32> to vector<8x128xf32>
    %326 = arith.negf %325 : vector<8x128xf32>
    %327 = math.exp %326 : vector<8x128xf32>
    %cst_56 = arith.constant 1.000000e+00 : f32
    %328 = vector.broadcast %cst_56 : f32 to vector<8x128xf32>
    %329 = arith.addf %328, %327 : vector<8x128xf32>
    %330 = arith.divf %328, %329 : vector<8x128xf32>
    %331 = vector.extract_strided_slice %312 {offsets = [0, 384], sizes = [8, 128], strides = [1, 1]} : vector<8x512xf32> to vector<8x128xf32>
    %332 = arith.negf %331 : vector<8x128xf32>
    %333 = math.exp %332 : vector<8x128xf32>
    %cst_57 = arith.constant 1.000000e+00 : f32
    %334 = vector.broadcast %cst_57 : f32 to vector<8x128xf32>
    %335 = arith.addf %334, %333 : vector<8x128xf32>
    %336 = arith.divf %334, %335 : vector<8x128xf32>
    %337 = arith.mulf %316, %314 : vector<8x128xf32>
    %338 = arith.mulf %336, %337 : vector<8x128xf32>
    %339 = arith.subf %316, %337 : vector<8x128xf32>
    %340 = arith.addf %338, %339 : vector<8x128xf32>
    %341 = arith.mulf %330, %337 : vector<8x128xf32>
    %342 = arith.subf %314, %337 : vector<8x128xf32>
    %343 = arith.addf %341, %342 : vector<8x128xf32>
    %344 = arith.mulf %340, %302 : vector<8x128xf32>
    %345 = arith.mulf %343, %324 : vector<8x128xf32>
    %346 = arith.addf %344, %345 : vector<8x128xf32>
    %347 = math.tanh %346 : vector<8x128xf32>
    %348 = arith.mulf %322, %347 : vector<8x128xf32>
    %349 = arith.truncf %348 : vector<8x128xf32> to vector<8x128xbf16>
    %cst_58 = arith.constant dense<0.000000e+00> : vector<8x1024xf32>
    %350 = tpu.matmul %349, %258, %cst_58 {dimension_numbers = #tpu.dot_dimension_numbers<[1], [0], [0], [1], [0, 0, 1, 1], [], []>} : vector<8x128xbf16>, vector<128x1024xbf16>, vector<8x1024xf32> -> vector<8x1024xf32>
    %351 = vector.extract_strided_slice %350 {offsets = [0, 0], sizes = [8, 512], strides = [1, 1]} : vector<8x1024xf32> to vector<8x512xf32>
    %352 = vector.extract_strided_slice %350 {offsets = [0, 512], sizes = [8, 512], strides = [1, 1]} : vector<8x1024xf32> to vector<8x512xf32>
    %353 = arith.select %27, %351, %352 : vector<8x512xi1>, vector<8x512xf32>
    %354 = vector.extract_strided_slice %257 {offsets = [2, 0, 0], sizes = [1, 8, 512], strides = [1, 1, 1]} : vector<4x8x768xf32> to vector<1x8x512xf32>
    %355 = vector.shape_cast %354 : vector<1x8x512xf32> to vector<8x512xf32>
    %356 = arith.addf %355, %353 : vector<8x512xf32>
    %357 = vector.extract_strided_slice %257 {offsets = [2, 0, 512], sizes = [1, 8, 128], strides = [1, 1, 1]} : vector<4x8x768xf32> to vector<1x8x128xf32>
    %358 = vector.shape_cast %357 : vector<1x8x128xf32> to vector<8x128xf32>
    %359 = vector.extract_strided_slice %257 {offsets = [2, 0, 640], sizes = [1, 8, 128], strides = [1, 1, 1]} : vector<4x8x768xf32> to vector<1x8x128xf32>
    %360 = vector.shape_cast %359 : vector<1x8x128xf32> to vector<8x128xf32>
    %361 = vector.extract_strided_slice %356 {offsets = [0, 0], sizes = [8, 128], strides = [1, 1]} : vector<8x512xf32> to vector<8x128xf32>
    %362 = arith.negf %361 : vector<8x128xf32>
    %363 = math.exp %362 : vector<8x128xf32>
    %cst_59 = arith.constant 1.000000e+00 : f32
    %364 = vector.broadcast %cst_59 : f32 to vector<8x128xf32>
    %365 = arith.addf %364, %363 : vector<8x128xf32>
    %366 = arith.divf %364, %365 : vector<8x128xf32>
    %367 = vector.extract_strided_slice %356 {offsets = [0, 128], sizes = [8, 128], strides = [1, 1]} : vector<8x512xf32> to vector<8x128xf32>
    %368 = math.tanh %367 : vector<8x128xf32>
    %369 = vector.extract_strided_slice %356 {offsets = [0, 256], sizes = [8, 128], strides = [1, 1]} : vector<8x512xf32> to vector<8x128xf32>
    %370 = arith.negf %369 : vector<8x128xf32>
    %371 = math.exp %370 : vector<8x128xf32>
    %cst_60 = arith.constant 1.000000e+00 : f32
    %372 = vector.broadcast %cst_60 : f32 to vector<8x128xf32>
    %373 = arith.addf %372, %371 : vector<8x128xf32>
    %374 = arith.divf %372, %373 : vector<8x128xf32>
    %375 = vector.extract_strided_slice %356 {offsets = [0, 384], sizes = [8, 128], strides = [1, 1]} : vector<8x512xf32> to vector<8x128xf32>
    %376 = arith.negf %375 : vector<8x128xf32>
    %377 = math.exp %376 : vector<8x128xf32>
    %cst_61 = arith.constant 1.000000e+00 : f32
    %378 = vector.broadcast %cst_61 : f32 to vector<8x128xf32>
    %379 = arith.addf %378, %377 : vector<8x128xf32>
    %380 = arith.divf %378, %379 : vector<8x128xf32>
    %381 = arith.mulf %360, %358 : vector<8x128xf32>
    %382 = arith.mulf %380, %381 : vector<8x128xf32>
    %383 = arith.subf %360, %381 : vector<8x128xf32>
    %384 = arith.addf %382, %383 : vector<8x128xf32>
    %385 = arith.mulf %374, %381 : vector<8x128xf32>
    %386 = arith.subf %358, %381 : vector<8x128xf32>
    %387 = arith.addf %385, %386 : vector<8x128xf32>
    %388 = arith.mulf %384, %346 : vector<8x128xf32>
    %389 = arith.mulf %387, %368 : vector<8x128xf32>
    %390 = arith.addf %388, %389 : vector<8x128xf32>
    %391 = math.tanh %390 : vector<8x128xf32>
    %392 = arith.mulf %366, %391 : vector<8x128xf32>
    %393 = arith.truncf %392 : vector<8x128xf32> to vector<8x128xbf16>
    %cst_62 = arith.constant dense<0.000000e+00> : vector<8x1024xf32>
    %394 = tpu.matmul %393, %258, %cst_62 {dimension_numbers = #tpu.dot_dimension_numbers<[1], [0], [0], [1], [0, 0, 1, 1], [], []>} : vector<8x128xbf16>, vector<128x1024xbf16>, vector<8x1024xf32> -> vector<8x1024xf32>
    %395 = vector.extract_strided_slice %394 {offsets = [0, 0], sizes = [8, 512], strides = [1, 1]} : vector<8x1024xf32> to vector<8x512xf32>
    %396 = vector.extract_strided_slice %394 {offsets = [0, 512], sizes = [8, 512], strides = [1, 1]} : vector<8x1024xf32> to vector<8x512xf32>
    %397 = arith.select %27, %395, %396 : vector<8x512xi1>, vector<8x512xf32>
    %398 = vector.extract_strided_slice %257 {offsets = [3, 0, 0], sizes = [1, 8, 512], strides = [1, 1, 1]} : vector<4x8x768xf32> to vector<1x8x512xf32>
    %399 = vector.shape_cast %398 : vector<1x8x512xf32> to vector<8x512xf32>
    %400 = arith.addf %399, %397 : vector<8x512xf32>
    %401 = vector.extract_strided_slice %257 {offsets = [3, 0, 512], sizes = [1, 8, 128], strides = [1, 1, 1]} : vector<4x8x768xf32> to vector<1x8x128xf32>
    %402 = vector.shape_cast %401 : vector<1x8x128xf32> to vector<8x128xf32>
    %403 = vector.extract_strided_slice %257 {offsets = [3, 0, 640], sizes = [1, 8, 128], strides = [1, 1, 1]} : vector<4x8x768xf32> to vector<1x8x128xf32>
    %404 = vector.shape_cast %403 : vector<1x8x128xf32> to vector<8x128xf32>
    %405 = vector.extract_strided_slice %400 {offsets = [0, 0], sizes = [8, 128], strides = [1, 1]} : vector<8x512xf32> to vector<8x128xf32>
    %406 = arith.negf %405 : vector<8x128xf32>
    %407 = math.exp %406 : vector<8x128xf32>
    %cst_63 = arith.constant 1.000000e+00 : f32
    %408 = vector.broadcast %cst_63 : f32 to vector<8x128xf32>
    %409 = arith.addf %408, %407 : vector<8x128xf32>
    %410 = arith.divf %408, %409 : vector<8x128xf32>
    %411 = vector.extract_strided_slice %400 {offsets = [0, 128], sizes = [8, 128], strides = [1, 1]} : vector<8x512xf32> to vector<8x128xf32>
    %412 = math.tanh %411 : vector<8x128xf32>
    %413 = vector.extract_strided_slice %400 {offsets = [0, 256], sizes = [8, 128], strides = [1, 1]} : vector<8x512xf32> to vector<8x128xf32>
    %414 = arith.negf %413 : vector<8x128xf32>
    %415 = math.exp %414 : vector<8x128xf32>
    %cst_64 = arith.constant 1.000000e+00 : f32
    %416 = vector.broadcast %cst_64 : f32 to vector<8x128xf32>
    %417 = arith.addf %416, %415 : vector<8x128xf32>
    %418 = arith.divf %416, %417 : vector<8x128xf32>
    %419 = vector.extract_strided_slice %400 {offsets = [0, 384], sizes = [8, 128], strides = [1, 1]} : vector<8x512xf32> to vector<8x128xf32>
    %420 = arith.negf %419 : vector<8x128xf32>
    %421 = math.exp %420 : vector<8x128xf32>
    %cst_65 = arith.constant 1.000000e+00 : f32
    %422 = vector.broadcast %cst_65 : f32 to vector<8x128xf32>
    %423 = arith.addf %422, %421 : vector<8x128xf32>
    %424 = arith.divf %422, %423 : vector<8x128xf32>
    %425 = arith.mulf %404, %402 : vector<8x128xf32>
    %426 = arith.mulf %424, %425 : vector<8x128xf32>
    %427 = arith.subf %404, %425 : vector<8x128xf32>
    %428 = arith.addf %426, %427 : vector<8x128xf32>
    %429 = arith.mulf %418, %425 : vector<8x128xf32>
    %430 = arith.subf %402, %425 : vector<8x128xf32>
    %431 = arith.addf %429, %430 : vector<8x128xf32>
    %432 = arith.mulf %428, %390 : vector<8x128xf32>
    %433 = arith.mulf %431, %412 : vector<8x128xf32>
    %434 = arith.addf %432, %433 : vector<8x128xf32>
    %435 = math.tanh %434 : vector<8x128xf32>
    %436 = arith.mulf %410, %435 : vector<8x128xf32>
    %437 = vector.extract_strided_slice %436 {offsets = [0, 0], sizes = [4, 128], strides = [1, 1]} : vector<8x128xf32> to vector<4x128xf32>
    %438 = vector.extract_strided_slice %436 {offsets = [4, 0], sizes = [4, 128], strides = [1, 1]} : vector<8x128xf32> to vector<4x128xf32>
    %439 = tpu.concatenate %437, %438 in 1 : vector<4x128xf32>, vector<4x128xf32> -> vector<4x256xf32>
    %c0_66 = arith.constant 0 : index
    %c0_67 = arith.constant 0 : index
    %440 = vector.load %arg9[%c0_66, %c0_67] : memref<256x4xf32, #tpu.memory_space<vmem>>, vector<256x4xf32>
    %cst_68 = arith.constant dense<0.000000e+00> : vector<4x4xf32>
    %441 = tpu.matmul %439, %440, %cst_68 {dimension_numbers = #tpu.dot_dimension_numbers<[1], [0], [0], [1], [0, 0, 1, 1], [], []>} : vector<4x256xf32>, vector<256x4xf32>, vector<4x4xf32> -> vector<4x4xf32>
    %c0_69 = arith.constant 0 : index
    %c0_70 = arith.constant 0 : index
    %442 = vector.load %arg10[%c0_69, %c0_70] : memref<1x4xf32, #tpu.memory_space<vmem>>, vector<1x4xf32>
    %443 = vector.broadcast %442 : vector<1x4xf32> to vector<4x4xf32>
    %444 = arith.addf %441, %443 : vector<4x4xf32>
    %cst_71 = arith.constant dense<0xFF800000> : vector<4xf32>
    %445 = vector.multi_reduction <maximumf>, %444, %cst_71 [1] : vector<4x4xf32> to vector<4xf32>
    %446 = vector.shape_cast %445 : vector<4xf32> to vector<4x1xf32>
    %447 = vector.broadcast %446 : vector<4x1xf32> to vector<4x4xf32>
    %448 = arith.subf %444, %447 : vector<4x4xf32>
    %449 = math.exp %448 : vector<4x4xf32>
    %cst_72 = arith.constant dense<0.000000e+00> : vector<4xf32>
    %450 = vector.multi_reduction <add>, %449, %cst_72 [1] : vector<4x4xf32> to vector<4xf32>
    %451 = vector.shape_cast %450 : vector<4xf32> to vector<4x1xf32>
    %452 = vector.broadcast %451 : vector<4x1xf32> to vector<4x4xf32>
    %453 = arith.divf %449, %452 : vector<4x4xf32>
    %c0_73 = arith.constant 0 : index
    %c0_74 = arith.constant 0 : index
    %454 = vector.load %arg11[%c0_73, %c0_74] : memref<4x4xf32, #tpu.memory_space<vmem>>, vector<4x4xf32>
    tpu.vector_store %arg11[%c0_73, %c0_74], %453 {strides = array<i32>} : memref<4x4xf32, #tpu.memory_space<vmem>>, vector<4x4xf32>,
    return
  }
}

</mosaic_0001>

<llo_original>
// kernel: onlstm_stack_forward.1
$region0: #{onlstm_stack_forward.1}
  #allocation0 [shape = 'u32[]', space=smem, size = 0x4, offset = 0x4, fixed_abs, tag = 'smem constant byte address 0x4 - core index']
  #allocation1 [shape = 'u32[144,128]{1,0:T(1,128)}', space=vmem, size = 0x12000, scoped, tag = 'internal scratch']
  %s0 = inlined_call_operand.vmem [shape: f32[4,4,24], index: 0, kind: input, shape index: {}]
  %s1 = inlined_call_operand.vmem [shape: f32[4,4,24], index: 1, kind: input, shape index: {}]
  %s2 = inlined_call_operand.vmem [shape: f32[4,4,12], index: 2, kind: input, shape index: {}]
  %s3 = inlined_call_operand.hbm [shape: bf16[96,768], index: 3, kind: input, shape index: {}]
  %s4 = inlined_call_operand.vmem [shape: f32[2,768], index: 4, kind: input, shape index: {}]
  %s5 = inlined_call_operand.vmem [shape: bf16[128,1024], index: 5, kind: input, shape index: {}]
  %s6 = inlined_call_operand.hbm [shape: bf16[144,768], index: 6, kind: input, shape index: {}]
  %s7 = inlined_call_operand.vmem [shape: f32[2,768], index: 7, kind: input, shape index: {}]
  %s8 = inlined_call_operand.hbm [shape: bf16[128,1024], index: 8, kind: input, shape index: {}]
  %s9 = inlined_call_operand.vmem [shape: f32[256,4], index: 9, kind: input, shape index: {}]
  %s10 = inlined_call_operand.vmem [shape: f32[1,4], index: 10, kind: input, shape index: {}]
  %s11 = inlined_call_operand.hbm [shape: f32[4,4], index: 11, kind: output, shape index: {}]
  %s12 = sld [smem:[#allocation0]]
  $region66: #{onlstm_stack_forward.1} parent=0
    _
  %s14 = ssub.s32 1, %s12
  %s15 = scalar_select 0, %s14, %s12
  $region1: #{onlstm_stack_forward.1} parent=0
    #allocation2 [shape = 'u8[147456]{0}', space=vmem, size = 0x24000, scoped, tag = 'input window, operand 3, single buffered']
    #allocation3 [shape = 's32[1]{0}', space=sflag, size = 0x4, scoped, tag = 'scoped memory for onlstm_stack_forward.1']
    #allocation4 [shape = 's32[1]{0}', space=sflag, size = 0x4, scoped, tag = 'scoped memory for onlstm_stack_forward.1']
    #allocation5 [shape = 'u8[221184]{0}', space=vmem, size = 0x36000, scoped, tag = 'input window, operand 6, single buffered']
    #allocation6 [shape = 's32[1]{0}', space=sflag, size = 0x4, scoped, tag = 'scoped memory for onlstm_stack_forward.1']
    #allocation7 [shape = 'u8[262144]{0}', space=vmem, size = 0x40000, scoped, tag = 'input window, operand 8, single buffered']
    #allocation8 [shape = 'u8[2048]{0}', space=vmem, size = 0x800, scoped, tag = 'output window, operand 0, single buffered']
    %16 = vsyncpa [#allocation3], 0
    %17 = vsyncpa [#allocation6], 0
    %18 = vsyncpa [#allocation4], 0
    // Predicated region
    $region2: #{onlstm_stack_forward.1} parent=1 // pred_check
      _
    $region3: #{onlstm_stack_forward.1} parent=1 // pred_check_branch
      %20 = sbr.rel (0) target = $region5
    $region4: #{onlstm_stack_forward.1} parent=1 // pred_region
      _
    $region5: #{onlstm_stack_forward.1} parent=1 // pred_fallthru
      _
    // Predicated region
    $region6: #{onlstm_stack_forward.1} parent=1 // pred_check
      _
    $region7: #{onlstm_stack_forward.1} parent=1 // pred_check_branch
      %22 = sbr.rel (0) target = $region9
    $region8: #{onlstm_stack_forward.1} parent=1 // pred_region
      _
    $region9: #{onlstm_stack_forward.1} parent=1 // pred_fallthru
      _
    // Predicated region
    $region10: #{onlstm_stack_forward.1} parent=1 // pred_check
      _
    $region11: #{onlstm_stack_forward.1} parent=1 // pred_check_branch
      %24 = sbr.rel (0) target = $region13
    $region12: #{onlstm_stack_forward.1} parent=1 // pred_region
      _
    $region13: #{onlstm_stack_forward.1} parent=1 // pred_fallthru
      _
    // Predicated region
    $region14: #{onlstm_stack_forward.1} parent=1 // pred_check
      _
    $region15: #{onlstm_stack_forward.1} parent=1 // pred_check_branch
      %26 = sbr.rel (0) target = $region17
    $region16: #{onlstm_stack_forward.1} parent=1 // pred_region
      %s28 = ssub.s32 4608, 4608
      %29 = vsyncadd [#allocation3], %s28
      %s30 = sshll.u32 [#allocation2], 4
      %s31 = int_to_ptr.vmem [resolvable:$true] %s30
      %36 = dma.hbm_to_vmem [thread:$0]  %s3, 4608, %s31, [#allocation3], 384, 384, 24
    $region17: #{onlstm_stack_forward.1} parent=1 // pred_fallthru
      _
    // Predicated region
    $region18: #{onlstm_stack_forward.1} parent=1 // pred_check
      _
    $region19: #{onlstm_stack_forward.1} parent=1 // pred_check_branch
      %38 = sbr.rel (0) target = $region21
    $region20: #{onlstm_stack_forward.1} parent=1 // pred_region
      _
    $region21: #{onlstm_stack_forward.1} parent=1 // pred_fallthru
      _
    // Predicated region
    $region22: #{onlstm_stack_forward.1} parent=1 // pred_check
      _
    $region23: #{onlstm_stack_forward.1} parent=1 // pred_check_branch
      %40 = sbr.rel (0) target = $region25
    $region24: #{onlstm_stack_forward.1} parent=1 // pred_region
      _
    $region25: #{onlstm_stack_forward.1} parent=1 // pred_fallthru
      _
    // Predicated region
    $region26: #{onlstm_stack_forward.1} parent=1 // pred_check
      _
    $region27: #{onlstm_stack_forward.1} parent=1 // pred_check_branch
      %42 = sbr.rel (0) target = $region29
    $region28: #{onlstm_stack_forward.1} parent=1 // pred_region
      %s44 = ssub.s32 6912, 6912
      %45 = vsyncadd [#allocation6], %s44
      %s46 = sshll.u32 [#allocation5], 4
      %s47 = int_to_ptr.vmem [resolvable:$true] %s46
      %52 = dma.hbm_to_vmem [thread:$0]  %s6, 6912, %s47, [#allocation6], 384, 384, 24
    $region29: #{onlstm_stack_forward.1} parent=1 // pred_fallthru
      _
    // Predicated region
    $region30: #{onlstm_stack_forward.1} parent=1 // pred_check
      _
    $region31: #{onlstm_stack_forward.1} parent=1 // pred_check_branch
      %54 = sbr.rel (0) target = $region33
    $region32: #{onlstm_stack_forward.1} parent=1 // pred_region
      _
    $region33: #{onlstm_stack_forward.1} parent=1 // pred_fallthru
      _
    // Predicated region
    $region34: #{onlstm_stack_forward.1} parent=1 // pred_check
      _
    $region35: #{onlstm_stack_forward.1} parent=1 // pred_check_branch
      %56 = sbr.rel (0) target = $region37
    $region36: #{onlstm_stack_forward.1} parent=1 // pred_region
      %s58 = ssub.s32 8192, 8192
      %59 = vsyncadd [#allocation6], %s58
      %s60 = sshll.u32 [#allocation7], 4
      %s61 = int_to_ptr.vmem [resolvable:$true] %s60
      %66 = dma.hbm_to_vmem [thread:$0]  %s8, 8192, %s61, [#allocation6], 512, 512, 32
    $region37: #{onlstm_stack_forward.1} parent=1 // pred_fallthru
      _
    // Predicated region
    $region38: #{onlstm_stack_forward.1} parent=1 // pred_check
      _
    $region39: #{onlstm_stack_forward.1} parent=1 // pred_check_branch
      %68 = sbr.rel (0) target = $region41
    $region40: #{onlstm_stack_forward.1} parent=1 // pred_region
      _
    $region41: #{onlstm_stack_forward.1} parent=1 // pred_fallthru
      _
    // Predicated region
    $region42: #{onlstm_stack_forward.1} parent=1 // pred_check
      _
    $region43: #{onlstm_stack_forward.1} parent=1 // pred_check_branch
      %70 = sbr.rel (0) target = $region45
    $region44: #{onlstm_stack_forward.1} parent=1 // pred_region
      _
    $region45: #{onlstm_stack_forward.1} parent=1 // pred_fallthru
      _
    // Predicated region
    $region46: #{onlstm_stack_forward.1} parent=1 // pred_check
      _
    $region47: #{onlstm_stack_forward.1} parent=1 // pred_check_branch
      %72 = sbr.rel (0) target = $region49
    $region48: #{onlstm_stack_forward.1} parent=1 // pred_region
      %73 = dma.done [#allocation3], 4608
    $region49: #{onlstm_stack_forward.1} parent=1 // pred_fallthru
      _
    // Predicated region
    $region50: #{onlstm_stack_forward.1} parent=1 // pred_check
      _
    $region51: #{onlstm_stack_forward.1} parent=1 // pred_check_branch
      %75 = sbr.rel (0) target = $region53
    $region52: #{onlstm_stack_forward.1} parent=1 // pred_region
      %76 = dma.done [#allocation6], 6912
    $region53: #{onlstm_stack_forward.1} parent=1 // pred_fallthru
      _
    // Predicated region
    $region54: #{onlstm_stack_forward.1} parent=1 // pred_check
      _
    $region55: #{onlstm_stack_forward.1} parent=1 // pred_check_branch
      %78 = sbr.rel (0) target = $region57
    $region56: #{onlstm_stack_forward.1} parent=1 // pred_region
      %79 = dma.done [#allocation6], 8192
    $region57: #{onlstm_stack_forward.1} parent=1 // pred_fallthru
      _
    %v81 = vld [vmem:[%s2] sm:$0xf]
    %v82 = vld [vmem:[%s2 + $0x4] sm:$0xf]
    %v83 = vld [vmem:[%s2 + $0x8] sm:$0xf]
    %v84 = vld [vmem:[%s2 + $0xc] sm:$0xf]
    %vm85 = vcmask 44032
    %v86 = vsel %vm85, %v81, -inf
    %87 = vmax.xlane.f32.xlu0 %v86
    %v88 = vpop.xlane.xlu0 %87
    %v89 = vsel %vm85, %v82, -inf
    %90 = vmax.xlane.f32.xlu0 %v89
    %v91 = vpop.xlane.xlu0 %90
    %v92 = vsel %vm85, %v83, -inf
    %93 = vmax.xlane.f32.xlu0 %v92
    %v94 = vpop.xlane.xlu0 %93
    %v95 = vsel %vm85, %v84, -inf
    %96 = vmax.xlane.f32.xlu0 %v95
    %v97 = vpop.xlane.xlu0 %96
    %v98 = vsub.f32 %v81, %v88
    %v99 = vsub.f32 %v82, %v91
    %v100 = vsub.f32 %v83, %v94
    %v101 = vsub.f32 %v84, %v97
    %v102 = vmul.f32 %v98, 1.442695
    %v103 = vpow.pop %v102
    %v104 = vmul.f32 %v99, 1.442695
    %v105 = vpow.pop %v104
    %v106 = vmul.f32 %v100, 1.442695
    %v107 = vpow.pop %v106
    %v108 = vmul.f32 %v101, 1.442695
    %v109 = vpow.pop %v108
    %v110 = vsel %vm85, %v103, 0.0
    %111 = vadd.xlane.f32.xlu0 %v110
    %v112 = vpop.xlane.xlu0 %111
    %v113 = vsel %vm85, %v105, 0.0
    %114 = vadd.xlane.f32.xlu0 %v113
    %v115 = vpop.xlane.xlu0 %114
    %v116 = vsel %vm85, %v107, 0.0
    %117 = vadd.xlane.f32.xlu0 %v116
    %v118 = vpop.xlane.xlu0 %117
    %v119 = vsel %vm85, %v109, 0.0
    %120 = vadd.xlane.f32.xlu0 %v119
    %v121 = vpop.xlane.xlu0 %120
    %v122 = vrcp.pop %v112
    %v123 = vmul.f32 %v103, %v122
    %v124 = vrcp.pop %v115
    %v125 = vmul.f32 %v105, %v124
    %v126 = vrcp.pop %v118
    %v127 = vmul.f32 %v107, %v126
    %v128 = vrcp.pop %v121
    %v129 = vmul.f32 %v109, %v128
    %vm130 = vcmask 93232
    %v131 = vsel %vm130, %v81, -inf
    %132 = vmax.xlane.f32.xlu0 %v131
    %v133 = vpop.xlane.xlu0 %132
    %v134 = vsel %vm130, %v82, -inf
    %135 = vmax.xlane.f32.xlu0 %v134
    %v136 = vpop.xlane.xlu0 %135
    %v137 = vsel %vm130, %v83, -inf
    %138 = vmax.xlane.f32.xlu0 %v137
    %v139 = vpop.xlane.xlu0 %138
    %v140 = vsel %vm130, %v84, -inf
    %141 = vmax.xlane.f32.xlu0 %v140
    %v142 = vpop.xlane.xlu0 %141
    %v143 = vsub.f32 %v81, %v133
    %v144 = vsub.f32 %v82, %v136
    %v145 = vsub.f32 %v83, %v139
    %v146 = vsub.f32 %v84, %v142
    %v147 = vmul.f32 %v143, 1.442695
    %v148 = vpow.pop %v147
    %v149 = vmul.f32 %v144, 1.442695
    %v150 = vpow.pop %v149
    %v151 = vmul.f32 %v145, 1.442695
    %v152 = vpow.pop %v151
    %v153 = vmul.f32 %v146, 1.442695
    %v154 = vpow.pop %v153
    %159 = vrot.lane.b32.xlu0 %v148, 122
    %v160 = vpop.permute.xlu0 %159
    %161 = vrot.lane.b32.xlu0 %v150, 122
    %v162 = vpop.permute.xlu0 %161
    %163 = vrot.lane.b32.xlu0 %v152, 122
    %v164 = vpop.permute.xlu0 %163
    %165 = vrot.lane.b32.xlu0 %v154, 122
    %v166 = vpop.permute.xlu0 %165
    %v171 = vsel %vm85, %v160, 0.0
    %172 = vadd.xlane.f32.xlu0 %v171
    %v173 = vpop.xlane.xlu0 %172
    %v174 = vsel %vm85, %v162, 0.0
    %175 = vadd.xlane.f32.xlu0 %v174
    %v176 = vpop.xlane.xlu0 %175
    %v177 = vsel %vm85, %v164, 0.0
    %178 = vadd.xlane.f32.xlu0 %v177
    %v179 = vpop.xlane.xlu0 %178
    %v180 = vsel %vm85, %v166, 0.0
    %181 = vadd.xlane.f32.xlu0 %v180
    %v182 = vpop.xlane.xlu0 %181
    %v183 = vrcp.pop %v173
    %v184 = vmul.f32 %v148, %v183
    %v185 = vrcp.pop %v176
    %v186 = vmul.f32 %v150, %v185
    %v187 = vrcp.pop %v179
    %v188 = vmul.f32 %v152, %v187
    %v189 = vrcp.pop %v182
    %v190 = vmul.f32 %v154, %v189
    %vm191 = vcmask 48128
    %v192 = vsel %vm191, %v123, %v184
    %v193 = vsel %vm191, %v125, %v186
    %v194 = vsel %vm191, %v127, %v188
    %v195 = vsel %vm191, %v129, %v190
    %v196 = vlaneseq
    %v197 = vshrl.u32 %v196, 7
    %vm198 = vcmp.lt.s32.totalorder %v197, 4
    %v199 = vld [vmem:[%s0] sm:$0xf]
    %v200 = vld [vmem:[%s0 + $0x4] sm:$0xf]
    %v201 = vld [vmem:[%s0 + $0x8] sm:$0xf]
    %v202 = vld [vmem:[%s0 + $0xc] sm:$0xf]
    %v203 = vld [vmem:[%s1] sm:$0xf]
    %v204 = vld [vmem:[%s1 + $0x4] sm:$0xf]
    %v205 = vld [vmem:[%s1 + $0x8] sm:$0xf]
    %v206 = vld [vmem:[%s1 + $0xc] sm:$0xf]
    %211 = vrot.lane.b32.xlu0 %v192, 48
    %v212 = vpop.permute.xlu0 %211
    %213 = vrot.lane.b32.xlu0 %v193, 48
    %v214 = vpop.permute.xlu0 %213
    %215 = vrot.lane.b32.xlu0 %v194, 48
    %v216 = vpop.permute.xlu0 %215
    %217 = vrot.lane.b32.xlu0 %v195, 48
    %v218 = vpop.permute.xlu0 %217
    %224 = vrot.lane.b32.xlu0 0.16666667, 60
    %v225 = vpop.permute.xlu0 %224
    %226 = vrot.lane.b32.xlu0 %v192, 60
    %v227 = vpop.permute.xlu0 %226
    %228 = vrot.lane.b32.xlu0 %v193, 60
    %v229 = vpop.permute.xlu0 %228
    %230 = vrot.lane.b32.xlu0 %v194, 60
    %v231 = vpop.permute.xlu0 %230
    %vm236 = vcmask 195584
    %v237 = vsel %vm236, %v199, 0.0
    %v238 = vsel %vm236, %v200, 0.0
    %v239 = vsel %vm236, %v201, 0.0
    %v240 = vsel %vm236, %v202, 0.0
    %vm241 = vcmask 392192
    %v242 = vsel %vm241, %v237, %v212
    %v243 = vsel %vm241, %v238, %v214
    %v244 = vsel %vm241, %v239, %v216
    %v245 = vsel %vm241, %v240, %v218
    %vm246 = vcmask 490496
    %v247 = vsel %vm246, %v242, %v225
    %v248 = vsel %vm246, %v243, %v227
    %v249 = vsel %vm246, %v244, %v229
    %v250 = vsel %vm246, %v245, %v231
    %vm251 = vcmask 588800
    %v252 = vsel %vm251, %v247, 0.0
    %v253 = vsel %vm251, %v248, 0.0
    %v254 = vsel %vm251, %v249, 0.0
    %v255 = vsel %vm251, %v250, 0.0
    %vm256 = vcmask 687104
    %v257 = vsel %vm256, %v252, 0.0
    %v258 = vsel %vm256, %v253, 0.0
    %v259 = vsel %vm256, %v254, 0.0
    %v260 = vsel %vm256, %v255, 0.0
    %265 = vrot.lane.b32.xlu0 %v203, 24
    %v266 = vpop.permute.xlu0 %265
    %267 = vrot.lane.b32.xlu0 %v204, 24
    %v268 = vpop.permute.xlu0 %267
    %269 = vrot.lane.b32.xlu0 %v205, 24
    %v270 = vpop.permute.xlu0 %269
    %271 = vrot.lane.b32.xlu0 %v206, 24
    %v272 = vpop.permute.xlu0 %271
    %277 = vrot.lane.b32.xlu0 0.16666667, 72
    %v278 = vpop.permute.xlu0 %277
    %279 = vrot.lane.b32.xlu0 %v192, 72
    %v280 = vpop.permute.xlu0 %279
    %281 = vrot.lane.b32.xlu0 %v193, 72
    %v282 = vpop.permute.xlu0 %281
    %283 = vrot.lane.b32.xlu0 %v194, 72
    %v284 = vpop.permute.xlu0 %283
    %289 = vrot.lane.b32.xlu0 %v192, 84
    %v290 = vpop.permute.xlu0 %289
    %291 = vrot.lane.b32.xlu0 %v193, 84
    %v292 = vpop.permute.xlu0 %291
    %293 = vrot.lane.b32.xlu0 %v194, 84
    %v294 = vpop.permute.xlu0 %293
    %295 = vrot.lane.b32.xlu0 %v195, 84
    %v296 = vpop.permute.xlu0 %295
    %v301 = vsel %vm236, 0.0, %v266
    %v302 = vsel %vm236, 0.0, %v268
    %v303 = vsel %vm236, 0.0, %v270
    %v304 = vsel %vm236, 0.0, %v272
    %v305 = vsel %vm241, %v301, 0.0
    %v306 = vsel %vm241, %v302, 0.0
    %v307 = vsel %vm241, %v303, 0.0
    %v308 = vsel %vm241, %v304, 0.0
    %v309 = vsel %vm246, %v305, 0.0
    %v310 = vsel %vm246, %v306, 0.0
    %v311 = vsel %vm246, %v307, 0.0
    %v312 = vsel %vm246, %v308, 0.0
    %v313 = vsel %vm251, %v309, %v278
    %v314 = vsel %vm251, %v310, %v280
    %v315 = vsel %vm251, %v311, %v282
    %v316 = vsel %vm251, %v312, %v284
    %v317 = vsel %vm256, %v313, %v290
    %v318 = vsel %vm256, %v314, %v292
    %v319 = vsel %vm256, %v315, %v294
    %v320 = vsel %vm256, %v316, %v296
    %v325 = vrot.slane %v317, 4
    %v326 = vrot.slane %v318, 4
    %v327 = vrot.slane %v319, 4
    %v328 = vrot.slane %v320, 4
    %vm333 = vcmask 1043456
    %v334 = vsel %vm333, %v257, %v325
    %v335 = vsel %vm333, %v258, %v326
    %v336 = vsel %vm333, %v259, %v327
    %v337 = vsel %vm333, %v260, %v328
    %v338 = vpack.c.bf16 %v335, %v334
    %v339 = vpack.c.bf16 %v337, %v336
    %v340 = vld [vmem:[#allocation2] sm:$0xff]
    %v341 = vld [vmem:[#allocation2 + $0x8] sm:$0xff]
    %v342 = vld [vmem:[#allocation2 + $0x10] sm:$0xff]
    %v343 = vld [vmem:[#allocation2 + $0x18] sm:$0xff]
    %v344 = vld [vmem:[#allocation2 + $0x20] sm:$0xff]
    %v345 = vld [vmem:[#allocation2 + $0x28] sm:$0xff]
    %v346 = vld [vmem:[#allocation2 + $0x30] sm:$0xff]
    %v347 = vld [vmem:[#allocation2 + $0x38] sm:$0xff]
    %v348 = vld [vmem:[#allocation2 + $0x40] sm:$0xff]
    %v349 = vld [vmem:[#allocation2 + $0x48] sm:$0xff]
    %v350 = vld [vmem:[#allocation2 + $0x50] sm:$0xff]
    %v351 = vld [vmem:[#allocation2 + $0x58] sm:$0xff]
    %v352 = vld [vmem:[#allocation2 + $0x60] sm:$0xff]
    %v353 = vld [vmem:[#allocation2 + $0x68] sm:$0xff]
    %v354 = vld [vmem:[#allocation2 + $0x70] sm:$0xff]
    %v355 = vld [vmem:[#allocation2 + $0x78] sm:$0xff]
    %v356 = vld [vmem:[#allocation2 + $0x80] sm:$0xff]
    %v357 = vld [vmem:[#allocation2 + $0x88] sm:$0xff]
    %v358 = vld [vmem:[#allocation2 + $0x90] sm:$0xff]
    %v359 = vld [vmem:[#allocation2 + $0x98] sm:$0xff]
    %v360 = vld [vmem:[#allocation2 + $0xa0] sm:$0xff]
    %v361 = vld [vmem:[#allocation2 + $0xa8] sm:$0xff]
    %v362 = vld [vmem:[#allocation2 + $0xb0] sm:$0xff]
    %v363 = vld [vmem:[#allocation2 + $0xb8] sm:$0xff]
    %v364 = vld [vmem:[#allocation2 + $0xc0] sm:$0xff]
    %v365 = vld [vmem:[#allocation2 + $0xc8] sm:$0xff]
    %v366 = vld [vmem:[#allocation2 + $0xd0] sm:$0xff]
    %v367 = vld [vmem:[#allocation2 + $0xd8] sm:$0xff]
    %v368 = vld [vmem:[#allocation2 + $0xe0] sm:$0xff]
    %v369 = vld [vmem:[#allocation2 + $0xe8] sm:$0xff]
    %v370 = vld [vmem:[#allocation2 + $0xf0] sm:$0xff]
    %v371 = vld [vmem:[#allocation2 + $0xf8] sm:$0xff]
    %v372 = vld [vmem:[#allocation2 + $0x100] sm:$0xff]
    %v373 = vld [vmem:[#allocation2 + $0x108] sm:$0xff]
    %v374 = vld [vmem:[#allocation2 + $0x110] sm:$0xff]
    %v375 = vld [vmem:[#allocation2 + $0x118] sm:$0xff]
    %v412 = vunpack.c.l.b16 %v340
    %v413 = vunpack.c.h.b16 %v340
    %v414 = vunpack.c.l.b16 %v341
    %v415 = vunpack.c.h.b16 %v341
    %v416 = vunpack.c.l.b16 %v342
    %v417 = vunpack.c.h.b16 %v342
    %v418 = vunpack.c.l.b16 %v343
    %v419 = vunpack.c.h.b16 %v343
    %v420 = vunpack.c.l.b16 %v344
    %v421 = vunpack.c.h.b16 %v344
    %v422 = vunpack.c.l.b16 %v345
    %v423 = vunpack.c.h.b16 %v345
    %v424 = vunpack.c.l.b16 %v346
    %v425 = vunpack.c.h.b16 %v346
    %v426 = vunpack.c.l.b16 %v347
    %v427 = vunpack.c.h.b16 %v347
    %v428 = vunpack.c.l.b16 %v348
    %v429 = vunpack.c.h.b16 %v348
    %v430 = vunpack.c.l.b16 %v349
    %v431 = vunpack.c.h.b16 %v349
    %v432 = vunpack.c.l.b16 %v350
    %v433 = vunpack.c.h.b16 %v350
    %v434 = vunpack.c.l.b16 %v351
    %v435 = vunpack.c.h.b16 %v351
    %v436 = vunpack.c.l.b16 %v352
    %v437 = vunpack.c.h.b16 %v352
    %v438 = vunpack.c.l.b16 %v353
    %v439 = vunpack.c.h.b16 %v353
    %v440 = vunpack.c.l.b16 %v354
    %v441 = vunpack.c.h.b16 %v354
    %v442 = vunpack.c.l.b16 %v355
    %v443 = vunpack.c.h.b16 %v355
    %v444 = vunpack.c.l.b16 %v356
    %v445 = vunpack.c.h.b16 %v356
    %v446 = vunpack.c.l.b16 %v357
    %v447 = vunpack.c.h.b16 %v357
    %v448 = vunpack.c.l.b16 %v358
    %v449 = vunpack.c.h.b16 %v358
    %v450 = vunpack.c.l.b16 %v359
    %v451 = vunpack.c.h.b16 %v359
    %v452 = vunpack.c.l.b16 %v360
    %v453 = vunpack.c.h.b16 %v360
    %v454 = vunpack.c.l.b16 %v361
    %v455 = vunpack.c.h.b16 %v361
    %v456 = vunpack.c.l.b16 %v362
    %v457 = vunpack.c.h.b16 %v362
    %v458 = vunpack.c.l.b16 %v363
    %v459 = vunpack.c.h.b16 %v363
    %v460 = vunpack.c.l.b16 %v364
    %v461 = vunpack.c.h.b16 %v364
    %v462 = vunpack.c.l.b16 %v365
    %v463 = vunpack.c.h.b16 %v365
    %v464 = vunpack.c.l.b16 %v366
    %v465 = vunpack.c.h.b16 %v366
    %v466 = vunpack.c.l.b16 %v367
    %v467 = vunpack.c.h.b16 %v367
    %v468 = vunpack.c.l.b16 %v368
    %v469 = vunpack.c.h.b16 %v368
    %v470 = vunpack.c.l.b16 %v369
    %v471 = vunpack.c.h.b16 %v369
    %v472 = vunpack.c.l.b16 %v370
    %v473 = vunpack.c.h.b16 %v370
    %v474 = vunpack.c.l.b16 %v371
    %v475 = vunpack.c.h.b16 %v371
    %v476 = vunpack.c.l.b16 %v372
    %v477 = vunpack.c.h.b16 %v372
    %v478 = vunpack.c.l.b16 %v373
    %v479 = vunpack.c.h.b16 %v373
    %v480 = vunpack.c.l.b16 %v374
    %v481 = vunpack.c.h.b16 %v374
    %v482 = vunpack.c.l.b16 %v375
    %v483 = vunpack.c.h.b16 %v375
    %v484 = vpack.c.b16 %v418, %v412
    %v485 = vpack.c.b16 %v419, %v413
    %v486 = vpack.c.b16 %v420, %v414
    %v487 = vpack.c.b16 %v421, %v415
    %v488 = vpack.c.b16 %v422, %v416
    %v489 = vpack.c.b16 %v423, %v417
    %v490 = vpack.c.b16 %v430, %v424
    %v491 = vpack.c.b16 %v431, %v425
    %v492 = vpack.c.b16 %v432, %v426
    %v493 = vpack.c.b16 %v433, %v427
    %v494 = vpack.c.b16 %v434, %v428
    %v495 = vpack.c.b16 %v435, %v429
    %v496 = vpack.c.b16 %v442, %v436
    %v497 = vpack.c.b16 %v443, %v437
    %v498 = vpack.c.b16 %v444, %v438
    %v499 = vpack.c.b16 %v445, %v439
    %v500 = vpack.c.b16 %v446, %v440
    %v501 = vpack.c.b16 %v447, %v441
    %v502 = vpack.c.b16 %v454, %v448
    %v503 = vpack.c.b16 %v455, %v449
    %v504 = vpack.c.b16 %v456, %v450
    %v505 = vpack.c.b16 %v457, %v451
    %v506 = vpack.c.b16 %v458, %v452
    %v507 = vpack.c.b16 %v459, %v453
    %v508 = vpack.c.b16 %v466, %v460
    %v509 = vpack.c.b16 %v467, %v461
    %v510 = vpack.c.b16 %v468, %v462
    %v511 = vpack.c.b16 %v469, %v463
    %v512 = vpack.c.b16 %v470, %v464
    %v513 = vpack.c.b16 %v471, %v465
    %v514 = vpack.c.b16 %v478, %v472
    %v515 = vpack.c.b16 %v479, %v473
    %v516 = vpack.c.b16 %v480, %v474
    %v517 = vpack.c.b16 %v481, %v475
    %v518 = vpack.c.b16 %v482, %v476
    %v519 = vpack.c.b16 %v483, %v477
    %vm556 = vcmask 785408
    %v558 = vsel %vm556, %v338, 0
    %v561 = vsel %vm556, %v339, 0
    %563 = vmatprep.subr.bf16.mxu0 %v485
    %564 = vmatpush1.bf16.msra.mxu0 %v484
    %565 = vmatprep.subr.bf16.mxu0 %v491
    %566 = vmatpush1.bf16.msra.mxu0 %v490
    %567 = vmatprep.subr.bf16.mxu0 %v497
    %568 = vmatpush1.bf16.msra.mxu0 %v496
    %569 = vmatprep.subr.bf16.mxu0 %v503
    %570 = vmatpush1.bf16.msra.mxu0 %v502
    %571 = vmatprep.subr.bf16.mxu0 %v509
    %572 = vmatpush1.bf16.msra.mxu0 %v508
    %573 = vmatprep.subr.bf16.mxu0 %v515
    %574 = vmatpush1.bf16.msra.mxu0 %v514
    %575 = vmatprep.subr.bf16.mxu0 0
    %576 = vmatpush1.bf16.msra.mxu0 0
    %577 = vmatprep.subr.bf16.mxu0 0
    %578 = vmatpush1.bf16.msra.mxu0 0
    %579 = vmatprep.subr.bf16.mxu0 0
    %580 = vmatpush1.bf16.msra.mxu0 0
    %581 = vmatprep.subr.bf16.mxu0 0
    %582 = vmatpush1.bf16.msra.mxu0 0
    %583 = vmatprep.subr.bf16.mxu0 0
    %584 = vmatpush1.bf16.msra.mxu0 0
    %585 = vmatprep.subr.bf16.mxu0 0
    %586 = vmatpush1.bf16.msra.mxu0 0
    %587 = vmatprep.subr.bf16.mxu0 0
    %588 = vmatpush1.bf16.msra.mxu0 0
    %589 = vmatprep.subr.bf16.mxu0 0
    %590 = vmatpush1.bf16.msra.mxu0 0
    %591 = vmatprep.subr.bf16.mxu0 0
    %592 = vmatpush1.bf16.msra.mxu0 0
    %593 = vmatprep.subr.bf16.mxu0 0
    %594 = vmatpush1.bf16.msra.mxu0 0
    %595 = vmatprep.mubr.bf16.mxu0 0
    %596 = vmatmul.mubr.bf16.gmra.mrb[0].mxu0 %v558
    %v597 = vpop.f32.mrb[0].mxu0
    %v598 = vadd.f32 0.0, %v597
    %v599 = vpop.f32.mrb[0].mxu0
    %v600 = vadd.f32 0.0, %v599
    %v601 = vpop.f32.mrb[0].mxu0
    %v602 = vadd.f32 0.0, %v601
    %v603 = vpop.f32.mrb[0].mxu0
    %v604 = vadd.f32 0.0, %v603
    %605 = vmatprep.mubr.bf16.mxu0 0
    %606 = vmatmul.mubr.bf16.gmra.mrb[0].mxu0 %v561
    %v607 = vpop.f32.mrb[0].mxu0
    %v608 = vadd.f32 0.0, %v607
    %v609 = vpop.f32.mrb[0].mxu0
    %v610 = vadd.f32 0.0, %v609
    %v611 = vpop.f32.mrb[0].mxu0
    %v612 = vadd.f32 0.0, %v611
    %v613 = vpop.f32.mrb[0].mxu0
    %v614 = vadd.f32 0.0, %v613
    %615 = vdwg.mxu0
    %616 = vmatprep.subr.bf16.mxu0 %v487
    %617 = vmatpush1.bf16.msra.mxu0 %v486
    %618 = vmatprep.subr.bf16.mxu0 %v493
    %619 = vmatpush1.bf16.msra.mxu0 %v492
    %620 = vmatprep.subr.bf16.mxu0 %v499
    %621 = vmatpush1.bf16.msra.mxu0 %v498
    %622 = vmatprep.subr.bf16.mxu0 %v505
    %623 = vmatpush1.bf16.msra.mxu0 %v504
    %624 = vmatprep.subr.bf16.mxu0 %v511
    %625 = vmatpush1.bf16.msra.mxu0 %v510
    %626 = vmatprep.subr.bf16.mxu0 %v517
    %627 = vmatpush1.bf16.msra.mxu0 %v516
    %628 = vmatprep.subr.bf16.mxu0 0
    %629 = vmatpush1.bf16.msra.mxu0 0
    %630 = vmatprep.subr.bf16.mxu0 0
    %631 = vmatpush1.bf16.msra.mxu0 0
    %632 = vmatprep.subr.bf16.mxu0 0
    %633 = vmatpush1.bf16.msra.mxu0 0
    %634 = vmatprep.subr.bf16.mxu0 0
    %635 = vmatpush1.bf16.msra.mxu0 0
    %636 = vmatprep.subr.bf16.mxu0 0
    %637 = vmatpush1.bf16.msra.mxu0 0
    %638 = vmatprep.subr.bf16.mxu0 0
    %639 = vmatpush1.bf16.msra.mxu0 0
    %640 = vmatprep.subr.bf16.mxu0 0
    %641 = vmatpush1.bf16.msra.mxu0 0
    %642 = vmatprep.subr.bf16.mxu0 0
    %643 = vmatpush1.bf16.msra.mxu0 0
    %644 = vmatprep.subr.bf16.mxu0 0
    %645 = vmatpush1.bf16.msra.mxu0 0
    %646 = vmatprep.subr.bf16.mxu0 0
    %647 = vmatpush1.bf16.msra.mxu0 0
    %648 = vmatprep.mubr.bf16.mxu0 0
    %649 = vmatmul.mubr.bf16.gmra.mrb[0].mxu0 %v558
    %v650 = vpop.f32.mrb[0].mxu0
    %v651 = vadd.f32 0.0, %v650
    %v652 = vpop.f32.mrb[0].mxu0
    %v653 = vadd.f32 0.0, %v652
    %v654 = vpop.f32.mrb[0].mxu0
    %v655 = vadd.f32 0.0, %v654
    %v656 = vpop.f32.mrb[0].mxu0
    %v657 = vadd.f32 0.0, %v656
    %658 = vmatprep.mubr.bf16.mxu0 0
    %659 = vmatmul.mubr.bf16.gmra.mrb[0].mxu0 %v561
    %v660 = vpop.f32.mrb[0].mxu0
    %v661 = vadd.f32 0.0, %v660
    %v662 = vpop.f32.mrb[0].mxu0
    %v663 = vadd.f32 0.0, %v662
    %v664 = vpop.f32.mrb[0].mxu0
    %v665 = vadd.f32 0.0, %v664
    %v666 = vpop.f32.mrb[0].mxu0
    %v667 = vadd.f32 0.0, %v666
    %668 = vdwg.mxu0
    %669 = vmatprep.subr.bf16.mxu0 %v489
    %670 = vmatpush1.bf16.msra.mxu0 %v488
    %671 = vmatprep.subr.bf16.mxu0 %v495
    %672 = vmatpush1.bf16.msra.mxu0 %v494
    %673 = vmatprep.subr.bf16.mxu0 %v501
    %674 = vmatpush1.bf16.msra.mxu0 %v500
    %675 = vmatprep.subr.bf16.mxu0 %v507
    %676 = vmatpush1.bf16.msra.mxu0 %v506
    %677 = vmatprep.subr.bf16.mxu0 %v513
    %678 = vmatpush1.bf16.msra.mxu0 %v512
    %679 = vmatprep.subr.bf16.mxu0 %v519
    %680 = vmatpush1.bf16.msra.mxu0 %v518
    %681 = vmatprep.subr.bf16.mxu0 0
    %682 = vmatpush1.bf16.msra.mxu0 0
    %683 = vmatprep.subr.bf16.mxu0 0
    %684 = vmatpush1.bf16.msra.mxu0 0
    %685 = vmatprep.subr.bf16.mxu0 0
    %686 = vmatpush1.bf16.msra.mxu0 0
    %687 = vmatprep.subr.bf16.mxu0 0
    %688 = vmatpush1.bf16.msra.mxu0 0
    %689 = vmatprep.subr.bf16.mxu0 0
    %690 = vmatpush1.bf16.msra.mxu0 0
    %691 = vmatprep.subr.bf16.mxu0 0
    %692 = vmatpush1.bf16.msra.mxu0 0
    %693 = vmatprep.subr.bf16.mxu0 0
    %694 = vmatpush1.bf16.msra.mxu0 0
    %695 = vmatprep.subr.bf16.mxu0 0
    %696 = vmatpush1.bf16.msra.mxu0 0
    %697 = vmatprep.subr.bf16.mxu0 0
    %698 = vmatpush1.bf16.msra.mxu0 0
    %699 = vmatprep.subr.bf16.mxu0 0
    %700 = vmatpush1.bf16.msra.mxu0 0
    %701 = vmatprep.mubr.bf16.mxu0 0
    %702 = vmatmul.mubr.bf16.gmra.mrb[0].mxu0 %v558
    %v703 = vpop.f32.mrb[0].mxu0
    %v704 = vadd.f32 0.0, %v703
    %v705 = vpop.f32.mrb[0].mxu0
    %v706 = vadd.f32 0.0, %v705
    %v707 = vpop.f32.mrb[0].mxu0
    %v708 = vadd.f32 0.0, %v707
    %v709 = vpop.f32.mrb[0].mxu0
    %v710 = vadd.f32 0.0, %v709
    %711 = vmatprep.mubr.bf16.mxu0 0
    %712 = vmatmul.mubr.bf16.gmra.mrb[0].mxu0 %v561
    %v713 = vpop.f32.mrb[0].mxu0
    %v714 = vadd.f32 0.0, %v713
    %v715 = vpop.f32.mrb[0].mxu0
    %v716 = vadd.f32 0.0, %v715
    %v717 = vpop.f32.mrb[0].mxu0
    %v718 = vadd.f32 0.0, %v717
    %v719 = vpop.f32.mrb[0].mxu0
    %v720 = vadd.f32 0.0, %v719
    %721 = vdwg.mxu0
    %v722 = vld [vmem:[%s4] sm:$0xff]
    %v723 = vld [vmem:[%s4 + $0x8] sm:$0xf]
    %v726 = vlaneseq
    %v727 = vshrl.u32 %v726, 7
    %v728 = vsub.s32 0, %v727
    %v729 = vrot.slane %v722, %v728
    %v730 = vlaneseq
    %v731 = vshrl.u32 %v730, 7
    %v732 = vsub.s32 2, %v731
    %v733 = vrot.slane %v722, %v732
    %v734 = vlaneseq
    %v735 = vshrl.u32 %v734, 7
    %v736 = vsub.s32 4, %v735
    %v737 = vrot.slane %v722, %v736
    %v738 = vlaneseq
    %v739 = vshrl.u32 %v738, 7
    %v740 = vsub.s32 6, %v739
    %v741 = vrot.slane %v722, %v740
    %v742 = vlaneseq
    %v743 = vshrl.u32 %v742, 7
    %v744 = vsub.s32 0, %v743
    %v745 = vrot.slane %v723, %v744
    %v746 = vlaneseq
    %v747 = vshrl.u32 %v746, 7
    %v748 = vsub.s32 2, %v747
    %v749 = vrot.slane %v723, %v748
    %v756 = vlaneseq
    %v757 = vshrl.u32 %v756, 7
    %v758 = vsub.s32 0, %v757
    %v759 = vrot.slane %v729, %v758
    %v760 = vlaneseq
    %v761 = vshrl.u32 %v760, 7
    %v762 = vsub.s32 0, %v761
    %v763 = vrot.slane %v733, %v762
    %v764 = vlaneseq
    %v765 = vshrl.u32 %v764, 7
    %v766 = vsub.s32 0, %v765
    %v767 = vrot.slane %v737, %v766
    %v768 = vlaneseq
    %v769 = vshrl.u32 %v768, 7
    %v770 = vsub.s32 0, %v769
    %v771 = vrot.slane %v741, %v770
    %v772 = vlaneseq
    %v773 = vshrl.u32 %v772, 7
    %v774 = vsub.s32 0, %v773
    %v775 = vrot.slane %v745, %v774
    %v776 = vlaneseq
    %v777 = vshrl.u32 %v776, 7
    %v778 = vsub.s32 0, %v777
    %v779 = vrot.slane %v749, %v778
    %v780 = vlaneseq
    %v781 = vshrl.u32 %v780, 7
    %v782 = vsub.s32 1, %v781
    %v783 = vrot.slane %v722, %v782
    %v784 = vlaneseq
    %v785 = vshrl.u32 %v784, 7
    %v786 = vsub.s32 3, %v785
    %v787 = vrot.slane %v722, %v786
    %v788 = vlaneseq
    %v789 = vshrl.u32 %v788, 7
    %v790 = vsub.s32 5, %v789
    %v791 = vrot.slane %v722, %v790
    %v792 = vlaneseq
    %v793 = vshrl.u32 %v792, 7
    %v794 = vsub.s32 7, %v793
    %v795 = vrot.slane %v722, %v794
    %v796 = vlaneseq
    %v797 = vshrl.u32 %v796, 7
    %v798 = vsub.s32 1, %v797
    %v799 = vrot.slane %v723, %v798
    %v800 = vlaneseq
    %v801 = vshrl.u32 %v800, 7
    %v802 = vsub.s32 3, %v801
    %v803 = vrot.slane %v723, %v802
    %v810 = vlaneseq
    %v811 = vshrl.u32 %v810, 7
    %v812 = vsub.s32 1, %v811
    %v813 = vrot.slane %v783, %v812
    %v814 = vlaneseq
    %v815 = vshrl.u32 %v814, 7
    %v816 = vsub.s32 1, %v815
    %v817 = vrot.slane %v787, %v816
    %v818 = vlaneseq
    %v819 = vshrl.u32 %v818, 7
    %v820 = vsub.s32 1, %v819
    %v821 = vrot.slane %v791, %v820
    %v822 = vlaneseq
    %v823 = vshrl.u32 %v822, 7
    %v824 = vsub.s32 1, %v823
    %v825 = vrot.slane %v795, %v824
    %v826 = vlaneseq
    %v827 = vshrl.u32 %v826, 7
    %v828 = vsub.s32 1, %v827
    %v829 = vrot.slane %v799, %v828
    %v830 = vlaneseq
    %v831 = vshrl.u32 %v830, 7
    %v832 = vsub.s32 1, %v831
    %v833 = vrot.slane %v803, %v832
    %v834 = vsel %vm333, %v759, %v813
    %v835 = vsel %vm333, %v763, %v817
    %v836 = vsel %vm333, %v767, %v821
    %v837 = vsel %vm333, %v771, %v825
    %v838 = vsel %vm333, %v775, %v829
    %v839 = vsel %vm333, %v779, %v833
    %v840 = vadd.f32 %v598, %v834
    %v841 = vadd.f32 %v600, %v835
    %v842 = vadd.f32 %v651, %v836
    %v843 = vadd.f32 %v653, %v837
    %v844 = vadd.f32 %v704, %v838
    %v845 = vadd.f32 %v706, %v839
    %v846 = vadd.f32 %v602, %v834
    %v847 = vadd.f32 %v604, %v835
    %v848 = vadd.f32 %v655, %v836
    %v849 = vadd.f32 %v657, %v837
    %v850 = vadd.f32 %v708, %v838
    %v851 = vadd.f32 %v710, %v839
    %v852 = vadd.f32 %v608, %v834
    %v853 = vadd.f32 %v610, %v835
    %v854 = vadd.f32 %v661, %v836
    %v855 = vadd.f32 %v663, %v837
    %v856 = vadd.f32 %v714, %v838
    %v857 = vadd.f32 %v716, %v839
    %v858 = vadd.f32 %v612, %v834
    %v859 = vadd.f32 %v614, %v835
    %v860 = vadd.f32 %v665, %v836
    %v861 = vadd.f32 %v667, %v837
    %v862 = vadd.f32 %v718, %v838
    %v863 = vadd.f32 %v720, %v839
    %v864 = vld [vmem:[%s5] sm:$0xff]
    %v865 = vld [vmem:[%s5 + $0x8] sm:$0xff]
    %v866 = vld [vmem:[%s5 + $0x10] sm:$0xff]
    %v867 = vld [vmem:[%s5 + $0x18] sm:$0xff]
    %v868 = vld [vmem:[%s5 + $0x20] sm:$0xff]
    %v869 = vld [vmem:[%s5 + $0x28] sm:$0xff]
    %v870 = vld [vmem:[%s5 + $0x30] sm:$0xff]
    %v871 = vld [vmem:[%s5 + $0x38] sm:$0xff]
    %v872 = vld [vmem:[%s5 + $0x40] sm:$0xff]
    %v873 = vld [vmem:[%s5 + $0x48] sm:$0xff]
    %v874 = vld [vmem:[%s5 + $0x50] sm:$0xff]
    %v875 = vld [vmem:[%s5 + $0x58] sm:$0xff]
    %v876 = vld [vmem:[%s5 + $0x60] sm:$0xff]
    %v877 = vld [vmem:[%s5 + $0x68] sm:$0xff]
    %v878 = vld [vmem:[%s5 + $0x70] sm:$0xff]
    %v879 = vld [vmem:[%s5 + $0x78] sm:$0xff]
    %v880 = vld [vmem:[%s5 + $0x80] sm:$0xff]
    %v881 = vld [vmem:[%s5 + $0x88] sm:$0xff]
    %v882 = vld [vmem:[%s5 + $0x90] sm:$0xff]
    %v883 = vld [vmem:[%s5 + $0x98] sm:$0xff]
    %v884 = vld [vmem:[%s5 + $0xa0] sm:$0xff]
    %v885 = vld [vmem:[%s5 + $0xa8] sm:$0xff]
    %v886 = vld [vmem:[%s5 + $0xb0] sm:$0xff]
    %v887 = vld [vmem:[%s5 + $0xb8] sm:$0xff]
    %v888 = vld [vmem:[%s5 + $0xc0] sm:$0xff]
    %v889 = vld [vmem:[%s5 + $0xc8] sm:$0xff]
    %v890 = vld [vmem:[%s5 + $0xd0] sm:$0xff]
    %v891 = vld [vmem:[%s5 + $0xd8] sm:$0xff]
    %v892 = vld [vmem:[%s5 + $0xe0] sm:$0xff]
    %v893 = vld [vmem:[%s5 + $0xe8] sm:$0xff]
    %v894 = vld [vmem:[%s5 + $0xf0] sm:$0xff]
    %v895 = vld [vmem:[%s5 + $0xf8] sm:$0xff]
    %v896 = vld [vmem:[%s5 + $0x100] sm:$0xff]
    %v897 = vld [vmem:[%s5 + $0x108] sm:$0xff]
    %v898 = vld [vmem:[%s5 + $0x110] sm:$0xff]
    %v899 = vld [vmem:[%s5 + $0x118] sm:$0xff]
    %v900 = vld [vmem:[%s5 + $0x120] sm:$0xff]
    %v901 = vld [vmem:[%s5 + $0x128] sm:$0xff]
    %v902 = vld [vmem:[%s5 + $0x130] sm:$0xff]
    %v903 = vld [vmem:[%s5 + $0x138] sm:$0xff]
    %v904 = vld [vmem:[%s5 + $0x140] sm:$0xff]
    %v905 = vld [vmem:[%s5 + $0x148] sm:$0xff]
    %v906 = vld [vmem:[%s5 + $0x150] sm:$0xff]
    %v907 = vld [vmem:[%s5 + $0x158] sm:$0xff]
    %v908 = vld [vmem:[%s5 + $0x160] sm:$0xff]
    %v909 = vld [vmem:[%s5 + $0x168] sm:$0xff]
    %v910 = vld [vmem:[%s5 + $0x170] sm:$0xff]
    %v911 = vld [vmem:[%s5 + $0x178] sm:$0xff]
    %v912 = vld [vmem:[%s5 + $0x180] sm:$0xff]
    %v913 = vld [vmem:[%s5 + $0x188] sm:$0xff]
    %v914 = vld [vmem:[%s5 + $0x190] sm:$0xff]
    %v915 = vld [vmem:[%s5 + $0x198] sm:$0xff]
    %v916 = vld [vmem:[%s5 + $0x1a0] sm:$0xff]
    %v917 = vld [vmem:[%s5 + $0x1a8] sm:$0xff]
    %v918 = vld [vmem:[%s5 + $0x1b0] sm:$0xff]
    %v919 = vld [vmem:[%s5 + $0x1b8] sm:$0xff]
    %v920 = vld [vmem:[%s5 + $0x1c0] sm:$0xff]
    %v921 = vld [vmem:[%s5 + $0x1c8] sm:$0xff]
    %v922 = vld [vmem:[%s5 + $0x1d0] sm:$0xff]
    %v923 = vld [vmem:[%s5 + $0x1d8] sm:$0xff]
    %v924 = vld [vmem:[%s5 + $0x1e0] sm:$0xff]
    %v925 = vld [vmem:[%s5 + $0x1e8] sm:$0xff]
    %v926 = vld [vmem:[%s5 + $0x1f0] sm:$0xff]
    %v927 = vld [vmem:[%s5 + $0x1f8] sm:$0xff]
    %v992 = vunpack.c.l.b16 %v864
    %v993 = vunpack.c.h.b16 %v864
    %v994 = vunpack.c.l.b16 %v865
    %v995 = vunpack.c.h.b16 %v865
    %v996 = vunpack.c.l.b16 %v866
    %v997 = vunpack.c.h.b16 %v866
    %v998 = vunpack.c.l.b16 %v867
    %v999 = vunpack.c.h.b16 %v867
    %v1000 = vunpack.c.l.b16 %v868
    %v1001 = vunpack.c.h.b16 %v868
    %v1002 = vunpack.c.l.b16 %v869
    %v1003 = vunpack.c.h.b16 %v869
    %v1004 = vunpack.c.l.b16 %v870
    %v1005 = vunpack.c.h.b16 %v870
    %v1006 = vunpack.c.l.b16 %v871
    %v1007 = vunpack.c.h.b16 %v871
    %v1008 = vunpack.c.l.b16 %v872
    %v1009 = vunpack.c.h.b16 %v872
    %v1010 = vunpack.c.l.b16 %v873
    %v1011 = vunpack.c.h.b16 %v873
    %v1012 = vunpack.c.l.b16 %v874
    %v1013 = vunpack.c.h.b16 %v874
    %v1014 = vunpack.c.l.b16 %v875
    %v1015 = vunpack.c.h.b16 %v875
    %v1016 = vunpack.c.l.b16 %v876
    %v1017 = vunpack.c.h.b16 %v876
    %v1018 = vunpack.c.l.b16 %v877
    %v1019 = vunpack.c.h.b16 %v877
    %v1020 = vunpack.c.l.b16 %v878
    %v1021 = vunpack.c.h.b16 %v878
    %v1022 = vunpack.c.l.b16 %v879
    %v1023 = vunpack.c.h.b16 %v879
    %v1024 = vunpack.c.l.b16 %v880
    %v1025 = vunpack.c.h.b16 %v880
    %v1026 = vunpack.c.l.b16 %v881
    %v1027 = vunpack.c.h.b16 %v881
    %v1028 = vunpack.c.l.b16 %v882
    %v1029 = vunpack.c.h.b16 %v882
    %v1030 = vunpack.c.l.b16 %v883
    %v1031 = vunpack.c.h.b16 %v883
    %v1032 = vunpack.c.l.b16 %v884
    %v1033 = vunpack.c.h.b16 %v884
    %v1034 = vunpack.c.l.b16 %v885
    %v1035 = vunpack.c.h.b16 %v885
    %v1036 = vunpack.c.l.b16 %v886
    %v1037 = vunpack.c.h.b16 %v886
    %v1038 = vunpack.c.l.b16 %v887
    %v1039 = vunpack.c.h.b16 %v887
    %v1040 = vunpack.c.l.b16 %v888
    %v1041 = vunpack.c.h.b16 %v888
    %v1042 = vunpack.c.l.b16 %v889
    %v1043 = vunpack.c.h.b16 %v889
    %v1044 = vunpack.c.l.b16 %v890
    %v1045 = vunpack.c.h.b16 %v890
    %v1046 = vunpack.c.l.b16 %v891
    %v1047 = vunpack.c.h.b16 %v891
    %v1048 = vunpack.c.l.b16 %v892
    %v1049 = vunpack.c.h.b16 %v892
    %v1050 = vunpack.c.l.b16 %v893
    %v1051 = vunpack.c.h.b16 %v893
    %v1052 = vunpack.c.l.b16 %v894
    %v1053 = vunpack.c.h.b16 %v894
    %v1054 = vunpack.c.l.b16 %v895
    %v1055 = vunpack.c.h.b16 %v895
    %v1056 = vunpack.c.l.b16 %v896
    %v1057 = vunpack.c.h.b16 %v896
    %v1058 = vunpack.c.l.b16 %v897
    %v1059 = vunpack.c.h.b16 %v897
    %v1060 = vunpack.c.l.b16 %v898
    %v1061 = vunpack.c.h.b16 %v898
    %v1062 = vunpack.c.l.b16 %v899
    %v1063 = vunpack.c.h.b16 %v899
    %v1064 = vunpack.c.l.b16 %v900
    %v1065 = vunpack.c.h.b16 %v900
    %v1066 = vunpack.c.l.b16 %v901
    %v1067 = vunpack.c.h.b16 %v901
    %v1068 = vunpack.c.l.b16 %v902
    %v1069 = vunpack.c.h.b16 %v902
    %v1070 = vunpack.c.l.b16 %v903
    %v1071 = vunpack.c.h.b16 %v903
    %v1072 = vunpack.c.l.b16 %v904
    %v1073 = vunpack.c.h.b16 %v904
    %v1074 = vunpack.c.l.b16 %v905
    %v1075 = vunpack.c.h.b16 %v905
    %v1076 = vunpack.c.l.b16 %v906
    %v1077 = vunpack.c.h.b16 %v906
    %v1078 = vunpack.c.l.b16 %v907
    %v1079 = vunpack.c.h.b16 %v907
    %v1080 = vunpack.c.l.b16 %v908
    %v1081 = vunpack.c.h.b16 %v908
    %v1082 = vunpack.c.l.b16 %v909
    %v1083 = vunpack.c.h.b16 %v909
    %v1084 = vunpack.c.l.b16 %v910
    %v1085 = vunpack.c.h.b16 %v910
    %v1086 = vunpack.c.l.b16 %v911
    %v1087 = vunpack.c.h.b16 %v911
    %v1088 = vunpack.c.l.b16 %v912
    %v1089 = vunpack.c.h.b16 %v912
    %v1090 = vunpack.c.l.b16 %v913
    %v1091 = vunpack.c.h.b16 %v913
    %v1092 = vunpack.c.l.b16 %v914
    %v1093 = vunpack.c.h.b16 %v914
    %v1094 = vunpack.c.l.b16 %v915
    %v1095 = vunpack.c.h.b16 %v915
    %v1096 = vunpack.c.l.b16 %v916
    %v1097 = vunpack.c.h.b16 %v916
    %v1098 = vunpack.c.l.b16 %v917
    %v1099 = vunpack.c.h.b16 %v917
    %v1100 = vunpack.c.l.b16 %v918
    %v1101 = vunpack.c.h.b16 %v918
    %v1102 = vunpack.c.l.b16 %v919
    %v1103 = vunpack.c.h.b16 %v919
    %v1104 = vunpack.c.l.b16 %v920
    %v1105 = vunpack.c.h.b16 %v920
    %v1106 = vunpack.c.l.b16 %v921
    %v1107 = vunpack.c.h.b16 %v921
    %v1108 = vunpack.c.l.b16 %v922
    %v1109 = vunpack.c.h.b16 %v922
    %v1110 = vunpack.c.l.b16 %v923
    %v1111 = vunpack.c.h.b16 %v923
    %v1112 = vunpack.c.l.b16 %v924
    %v1113 = vunpack.c.h.b16 %v924
    %v1114 = vunpack.c.l.b16 %v925
    %v1115 = vunpack.c.h.b16 %v925
    %v1116 = vunpack.c.l.b16 %v926
    %v1117 = vunpack.c.h.b16 %v926
    %v1118 = vunpack.c.l.b16 %v927
    %v1119 = vunpack.c.h.b16 %v927
    %v1120 = vpack.c.b16 %v1000, %v992
    %v1121 = vpack.c.b16 %v1001, %v993
    %v1122 = vpack.c.b16 %v1002, %v994
    %v1123 = vpack.c.b16 %v1003, %v995
    %v1124 = vpack.c.b16 %v1004, %v996
    %v1125 = vpack.c.b16 %v1005, %v997
    %v1126 = vpack.c.b16 %v1006, %v998
    %v1127 = vpack.c.b16 %v1007, %v999
    %v1128 = vpack.c.b16 %v1016, %v1008
    %v1129 = vpack.c.b16 %v1017, %v1009
    %v1130 = vpack.c.b16 %v1018, %v1010
    %v1131 = vpack.c.b16 %v1019, %v1011
    %v1132 = vpack.c.b16 %v1020, %v1012
    %v1133 = vpack.c.b16 %v1021, %v1013
    %v1134 = vpack.c.b16 %v1022, %v1014
    %v1135 = vpack.c.b16 %v1023, %v1015
    %v1136 = vpack.c.b16 %v1032, %v1024
    %v1137 = vpack.c.b16 %v1033, %v1025
    %v1138 = vpack.c.b16 %v1034, %v1026
    %v1139 = vpack.c.b16 %v1035, %v1027
    %v1140 = vpack.c.b16 %v1036, %v1028
    %v1141 = vpack.c.b16 %v1037, %v1029
    %v1142 = vpack.c.b16 %v1038, %v1030
    %v1143 = vpack.c.b16 %v1039, %v1031
    %v1144 = vpack.c.b16 %v1048, %v1040
    %v1145 = vpack.c.b16 %v1049, %v1041
    %v1146 = vpack.c.b16 %v1050, %v1042
    %v1147 = vpack.c.b16 %v1051, %v1043
    %v1148 = vpack.c.b16 %v1052, %v1044
    %v1149 = vpack.c.b16 %v1053, %v1045
    %v1150 = vpack.c.b16 %v1054, %v1046
    %v1151 = vpack.c.b16 %v1055, %v1047
    %v1152 = vpack.c.b16 %v1064, %v1056
    %v1153 = vpack.c.b16 %v1065, %v1057
    %v1154 = vpack.c.b16 %v1066, %v1058
    %v1155 = vpack.c.b16 %v1067, %v1059
    %v1156 = vpack.c.b16 %v1068, %v1060
    %v1157 = vpack.c.b16 %v1069, %v1061
    %v1158 = vpack.c.b16 %v1070, %v1062
    %v1159 = vpack.c.b16 %v1071, %v1063
    %v1160 = vpack.c.b16 %v1080, %v1072
    %v1161 = vpack.c.b16 %v1081, %v1073
    %v1162 = vpack.c.b16 %v1082, %v1074
    %v1163 = vpack.c.b16 %v1083, %v1075
    %v1164 = vpack.c.b16 %v1084, %v1076
    %v1165 = vpack.c.b16 %v1085, %v1077
    %v1166 = vpack.c.b16 %v1086, %v1078
    %v1167 = vpack.c.b16 %v1087, %v1079
    %v1168 = vpack.c.b16 %v1096, %v1088
    %v1169 = vpack.c.b16 %v1097, %v1089
    %v1170 = vpack.c.b16 %v1098, %v1090
    %v1171 = vpack.c.b16 %v1099, %v1091
    %v1172 = vpack.c.b16 %v1100, %v1092
    %v1173 = vpack.c.b16 %v1101, %v1093
    %v1174 = vpack.c.b16 %v1102, %v1094
    %v1175 = vpack.c.b16 %v1103, %v1095
    %v1176 = vpack.c.b16 %v1112, %v1104
    %v1177 = vpack.c.b16 %v1113, %v1105
    %v1178 = vpack.c.b16 %v1114, %v1106
    %v1179 = vpack.c.b16 %v1115, %v1107
    %v1180 = vpack.c.b16 %v1116, %v1108
    %v1181 = vpack.c.b16 %v1117, %v1109
    %v1182 = vpack.c.b16 %v1118, %v1110
    %v1183 = vpack.c.b16 %v1119, %v1111
    %1248 = vmatprep.subr.bf16.mxu0 %v1121
    %1249 = vmatpush1.bf16.msra.mxu0 %v1120
    %1250 = vmatprep.subr.bf16.mxu0 %v1129
    %1251 = vmatpush1.bf16.msra.mxu0 %v1128
    %1252 = vmatprep.subr.bf16.mxu0 %v1137
    %1253 = vmatpush1.bf16.msra.mxu0 %v1136
    %1254 = vmatprep.subr.bf16.mxu0 %v1145
    %1255 = vmatpush1.bf16.msra.mxu0 %v1144
    %1256 = vmatprep.subr.bf16.mxu0 %v1153
    %1257 = vmatpush1.bf16.msra.mxu0 %v1152
    %1258 = vmatprep.subr.bf16.mxu0 %v1161
    %1259 = vmatpush1.bf16.msra.mxu0 %v1160
    %1260 = vmatprep.subr.bf16.mxu0 %v1169
    %1261 = vmatpush1.bf16.msra.mxu0 %v1168
    %1262 = vmatprep.subr.bf16.mxu0 %v1177
    %1263 = vmatpush1.bf16.msra.mxu0 %v1176
    %1264 = vmatprep.subr.bf16.mxu0 0
    %1265 = vmatpush1.bf16.msra.mxu0 0
    %1266 = vmatprep.subr.bf16.mxu0 0
    %1267 = vmatpush1.bf16.msra.mxu0 0
    %1268 = vmatprep.subr.bf16.mxu0 0
    %1269 = vmatpush1.bf16.msra.mxu0 0
    %1270 = vmatprep.subr.bf16.mxu0 0
    %1271 = vmatpush1.bf16.msra.mxu0 0
    %1272 = vmatprep.subr.bf16.mxu0 0
    %1273 = vmatpush1.bf16.msra.mxu0 0
    %1274 = vmatprep.subr.bf16.mxu0 0
    %1275 = vmatpush1.bf16.msra.mxu0 0
    %1276 = vmatprep.subr.bf16.mxu0 0
    %1277 = vmatpush1.bf16.msra.mxu0 0
    %1278 = vmatprep.subr.bf16.mxu0 0
    %1279 = vmatpush1.bf16.msra.mxu0 0
    %1280 = vmatprep.mubr.bf16.mxu0 0
    %1281 = vmatmul.mubr.bf16.gmra.mrb[0].mxu0 0
    %v1282 = vpop.f32.mrb[0].mxu0
    %v1283 = vadd.f32 0.0, %v1282
    %v1284 = vpop.f32.mrb[0].mxu0
    %v1285 = vadd.f32 0.0, %v1284
    %v1286 = vpop.f32.mrb[0].mxu0
    %v1287 = vpop.f32.mrb[0].mxu0
    %1288 = vdwg.mxu0
    %1289 = vmatprep.subr.bf16.mxu0 %v1123
    %1290 = vmatpush1.bf16.msra.mxu0 %v1122
    %1291 = vmatprep.subr.bf16.mxu0 %v1131
    %1292 = vmatpush1.bf16.msra.mxu0 %v1130
    %1293 = vmatprep.subr.bf16.mxu0 %v1139
    %1294 = vmatpush1.bf16.msra.mxu0 %v1138
    %1295 = vmatprep.subr.bf16.mxu0 %v1147
    %1296 = vmatpush1.bf16.msra.mxu0 %v1146
    %1297 = vmatprep.subr.bf16.mxu0 %v1155
    %1298 = vmatpush1.bf16.msra.mxu0 %v1154
    %1299 = vmatprep.subr.bf16.mxu0 %v1163
    %1300 = vmatpush1.bf16.msra.mxu0 %v1162
    %1301 = vmatprep.subr.bf16.mxu0 %v1171
    %1302 = vmatpush1.bf16.msra.mxu0 %v1170
    %1303 = vmatprep.subr.bf16.mxu0 %v1179
    %1304 = vmatpush1.bf16.msra.mxu0 %v1178
    %1305 = vmatprep.subr.bf16.mxu0 0
    %1306 = vmatpush1.bf16.msra.mxu0 0
    %1307 = vmatprep.subr.bf16.mxu0 0
    %1308 = vmatpush1.bf16.msra.mxu0 0
    %1309 = vmatprep.subr.bf16.mxu0 0
    %1310 = vmatpush1.bf16.msra.mxu0 0
    %1311 = vmatprep.subr.bf16.mxu0 0
    %1312 = vmatpush1.bf16.msra.mxu0 0
    %1313 = vmatprep.subr.bf16.mxu0 0
    %1314 = vmatpush1.bf16.msra.mxu0 0
    %1315 = vmatprep.subr.bf16.mxu0 0
    %1316 = vmatpush1.bf16.msra.mxu0 0
    %1317 = vmatprep.subr.bf16.mxu0 0
    %1318 = vmatpush1.bf16.msra.mxu0 0
    %1319 = vmatprep.subr.bf16.mxu0 0
    %1320 = vmatpush1.bf16.msra.mxu0 0
    %1321 = vmatprep.mubr.bf16.mxu0 0
    %1322 = vmatmul.mubr.bf16.gmra.mrb[0].mxu0 0
    %v1323 = vpop.f32.mrb[0].mxu0
    %v1324 = vadd.f32 0.0, %v1323
    %v1325 = vpop.f32.mrb[0].mxu0
    %v1326 = vadd.f32 0.0, %v1325
    %v1327 = vpop.f32.mrb[0].mxu0
    %v1328 = vpop.f32.mrb[0].mxu0
    %1329 = vdwg.mxu0
    %1330 = vmatprep.subr.bf16.mxu0 %v1125
    %1331 = vmatpush1.bf16.msra.mxu0 %v1124
    %1332 = vmatprep.subr.bf16.mxu0 %v1133
    %1333 = vmatpush1.bf16.msra.mxu0 %v1132
    %1334 = vmatprep.subr.bf16.mxu0 %v1141
    %1335 = vmatpush1.bf16.msra.mxu0 %v1140
    %1336 = vmatprep.subr.bf16.mxu0 %v1149
    %1337 = vmatpush1.bf16.msra.mxu0 %v1148
    %1338 = vmatprep.subr.bf16.mxu0 %v1157
    %1339 = vmatpush1.bf16.msra.mxu0 %v1156
    %1340 = vmatprep.subr.bf16.mxu0 %v1165
    %1341 = vmatpush1.bf16.msra.mxu0 %v1164
    %1342 = vmatprep.subr.bf16.mxu0 %v1173
    %1343 = vmatpush1.bf16.msra.mxu0 %v1172
    %1344 = vmatprep.subr.bf16.mxu0 %v1181
    %1345 = vmatpush1.bf16.msra.mxu0 %v1180
    %1346 = vmatprep.subr.bf16.mxu0 0
    %1347 = vmatpush1.bf16.msra.mxu0 0
    %1348 = vmatprep.subr.bf16.mxu0 0
    %1349 = vmatpush1.bf16.msra.mxu0 0
    %1350 = vmatprep.subr.bf16.mxu0 0
    %1351 = vmatpush1.bf16.msra.mxu0 0
    %1352 = vmatprep.subr.bf16.mxu0 0
    %1353 = vmatpush1.bf16.msra.mxu0 0
    %1354 = vmatprep.subr.bf16.mxu0 0
    %1355 = vmatpush1.bf16.msra.mxu0 0
    %1356 = vmatprep.subr.bf16.mxu0 0
    %1357 = vmatpush1.bf16.msra.mxu0 0
    %1358 = vmatprep.subr.bf16.mxu0 0
    %1359 = vmatpush1.bf16.msra.mxu0 0
    %1360 = vmatprep.subr.bf16.mxu0 0
    %1361 = vmatpush1.bf16.msra.mxu0 0
    %1362 = vmatprep.mubr.bf16.mxu0 0
    %1363 = vmatmul.mubr.bf16.gmra.mrb[0].mxu0 0
    %v1364 = vpop.f32.mrb[0].mxu0
    %v1365 = vadd.f32 0.0, %v1364
    %v1366 = vpop.f32.mrb[0].mxu0
    %v1367 = vadd.f32 0.0, %v1366
    %v1368 = vpop.f32.mrb[0].mxu0
    %v1369 = vpop.f32.mrb[0].mxu0
    %1370 = vdwg.mxu0
    %1371 = vmatprep.subr.bf16.mxu0 %v1127
    %1372 = vmatpush1.bf16.msra.mxu0 %v1126
    %1373 = vmatprep.subr.bf16.mxu0 %v1135
    %1374 = vmatpush1.bf16.msra.mxu0 %v1134
    %1375 = vmatprep.subr.bf16.mxu0 %v1143
    %1376 = vmatpush1.bf16.msra.mxu0 %v1142
    %1377 = vmatprep.subr.bf16.mxu0 %v1151
    %1378 = vmatpush1.bf16.msra.mxu0 %v1150
    %1379 = vmatprep.subr.bf16.mxu0 %v1159
    %1380 = vmatpush1.bf16.msra.mxu0 %v1158
    %1381 = vmatprep.subr.bf16.mxu0 %v1167
    %1382 = vmatpush1.bf16.msra.mxu0 %v1166
    %1383 = vmatprep.subr.bf16.mxu0 %v1175
    %1384 = vmatpush1.bf16.msra.mxu0 %v1174
    %1385 = vmatprep.subr.bf16.mxu0 %v1183
    %1386 = vmatpush1.bf16.msra.mxu0 %v1182
    %1387 = vmatprep.subr.bf16.mxu0 0
    %1388 = vmatpush1.bf16.msra.mxu0 0
    %1389 = vmatprep.subr.bf16.mxu0 0
    %1390 = vmatpush1.bf16.msra.mxu0 0
    %1391 = vmatprep.subr.bf16.mxu0 0
    %1392 = vmatpush1.bf16.msra.mxu0 0
    %1393 = vmatprep.subr.bf16.mxu0 0
    %1394 = vmatpush1.bf16.msra.mxu0 0
    %1395 = vmatprep.subr.bf16.mxu0 0
    %1396 = vmatpush1.bf16.msra.mxu0 0
    %1397 = vmatprep.subr.bf16.mxu0 0
    %1398 = vmatpush1.bf16.msra.mxu0 0
    %1399 = vmatprep.subr.bf16.mxu0 0
    %1400 = vmatpush1.bf16.msra.mxu0 0
    %1401 = vmatprep.subr.bf16.mxu0 0
    %1402 = vmatpush1.bf16.msra.mxu0 0
    %1403 = vmatprep.mubr.bf16.mxu0 0
    %1404 = vmatmul.mubr.bf16.gmra.mrb[0].mxu0 0
    %v1405 = vpop.f32.mrb[0].mxu0
    %v1406 = vadd.f32 0.0, %v1405
    %v1407 = vpop.f32.mrb[0].mxu0
    %v1408 = vadd.f32 0.0, %v1407
    %v1409 = vpop.f32.mrb[0].mxu0
    %v1410 = vpop.f32.mrb[0].mxu0
    %1411 = vdwg.mxu0
    %v1412 = vsel %vm198, %v1283, %v1365
    %v1413 = vsel %vm198, %v1285, %v1367
    %v1414 = vsel %vm198, %v1324, %v1406
    %v1415 = vsel %vm198, %v1326, %v1408
    %v1416 = vadd.f32 %v840, %v1412
    %v1417 = vadd.f32 %v841, %v1413
    %v1418 = vadd.f32 %v842, %v1414
    %v1419 = vadd.f32 %v843, %v1415
    %v1420 = vxor.u32 %v1416, 2147483648
    %v1421 = vmul.f32 %v1420, 1.442695
    %v1422 = vpow.pop %v1421
    %v1423 = vadd.f32 %v1422, 1.0
    %v1424 = vrcp.pop %v1423
    %v1425 = vmul.f32 1.0, %v1424
    %v1426 = vtanh.pop %v1417
    %v1427 = vxor.u32 %v1418, 2147483648
    %v1428 = vmul.f32 %v1427, 1.442695
    %v1429 = vpow.pop %v1428
    %v1430 = vadd.f32 %v1429, 1.0
    %v1431 = vrcp.pop %v1430
    %v1432 = vmul.f32 1.0, %v1431
    %v1433 = vxor.u32 %v1419, 2147483648
    %v1434 = vmul.f32 %v1433, 1.442695
    %v1435 = vpow.pop %v1434
    %v1436 = vadd.f32 %v1435, 1.0
    %v1437 = vrcp.pop %v1436
    %v1438 = vmul.f32 1.0, %v1437
    %v1439 = vmul.f32 %v845, %v844
    %v1440 = vmul.f32 %v1438, %v1439
    %v1441 = vsub.f32 %v845, %v1439
    %v1442 = vadd.f32 %v1440, %v1441
    %v1443 = vmul.f32 %v1432, %v1439
    %v1444 = vsub.f32 %v844, %v1439
    %v1445 = vadd.f32 %v1443, %v1444
    %v1446 = vmul.f32 %v1442, 0.0
    %v1447 = vmul.f32 %v1445, %v1426
    %v1448 = vadd.f32 %v1446, %v1447
    %v1449 = vtanh.pop %v1448
    %v1450 = vmul.f32 %v1425, %v1449
    %v1451 = vpack.c.bf16 %v1450, %v1450
    %1452 = vmatprep.subr.bf16.mxu0 %v1121
    %1453 = vmatpush1.bf16.msra.mxu0 %v1120
    %1454 = vmatprep.subr.bf16.mxu0 %v1129
    %1455 = vmatpush1.bf16.msra.mxu0 %v1128
    %1456 = vmatprep.subr.bf16.mxu0 %v1137
    %1457 = vmatpush1.bf16.msra.mxu0 %v1136
    %1458 = vmatprep.subr.bf16.mxu0 %v1145
    %1459 = vmatpush1.bf16.msra.mxu0 %v1144
    %1460 = vmatprep.subr.bf16.mxu0 %v1153
    %1461 = vmatpush1.bf16.msra.mxu0 %v1152
    %1462 = vmatprep.subr.bf16.mxu0 %v1161
    %1463 = vmatpush1.bf16.msra.mxu0 %v1160
    %1464 = vmatprep.subr.bf16.mxu0 %v1169
    %1465 = vmatpush1.bf16.msra.mxu0 %v1168
    %1466 = vmatprep.subr.bf16.mxu0 %v1177
    %1467 = vmatpush1.bf16.msra.mxu0 %v1176
    %1468 = vmatprep.subr.bf16.mxu0 0
    %1469 = vmatpush1.bf16.msra.mxu0 0
    %1470 = vmatprep.subr.bf16.mxu0 0
    %1471 = vmatpush1.bf16.msra.mxu0 0
    %1472 = vmatprep.subr.bf16.mxu0 0
    %1473 = vmatpush1.bf16.msra.mxu0 0
    %1474 = vmatprep.subr.bf16.mxu0 0
    %1475 = vmatpush1.bf16.msra.mxu0 0
    %1476 = vmatprep.subr.bf16.mxu0 0
    %1477 = vmatpush1.bf16.msra.mxu0 0
    %1478 = vmatprep.subr.bf16.mxu0 0
    %1479 = vmatpush1.bf16.msra.mxu0 0
    %1480 = vmatprep.subr.bf16.mxu0 0
    %1481 = vmatpush1.bf16.msra.mxu0 0
    %1482 = vmatprep.subr.bf16.mxu0 0
    %1483 = vmatpush1.bf16.msra.mxu0 0
    %1484 = vmatprep.mubr.bf16.mxu0 0
    %1485 = vmatmul.mubr.bf16.gmra.mrb[0].mxu0 %v1451
    %v1486 = vpop.f32.mrb[0].mxu0
    %v1487 = vadd.f32 0.0, %v1486
    %v1488 = vpop.f32.mrb[0].mxu0
    %v1489 = vadd.f32 0.0, %v1488
    %v1490 = vpop.f32.mrb[0].mxu0
    %v1491 = vpop.f32.mrb[0].mxu0
    %1492 = vdwg.mxu0
    %1493 = vmatprep.subr.bf16.mxu0 %v1123
    %1494 = vmatpush1.bf16.msra.mxu0 %v1122
    %1495 = vmatprep.subr.bf16.mxu0 %v1131
    %1496 = vmatpush1.bf16.msra.mxu0 %v1130
    %1497 = vmatprep.subr.bf16.mxu0 %v1139
    %1498 = vmatpush1.bf16.msra.mxu0 %v1138
    %1499 = vmatprep.subr.bf16.mxu0 %v1147
    %1500 = vmatpush1.bf16.msra.mxu0 %v1146
    %1501 = vmatprep.subr.bf16.mxu0 %v1155
    %1502 = vmatpush1.bf16.msra.mxu0 %v1154
    %1503 = vmatprep.subr.bf16.mxu0 %v1163
    %1504 = vmatpush1.bf16.msra.mxu0 %v1162
    %1505 = vmatprep.subr.bf16.mxu0 %v1171
    %1506 = vmatpush1.bf16.msra.mxu0 %v1170
    %1507 = vmatprep.subr.bf16.mxu0 %v1179
    %1508 = vmatpush1.bf16.msra.mxu0 %v1178
    %1509 = vmatprep.subr.bf16.mxu0 0
    %1510 = vmatpush1.bf16.msra.mxu0 0
    %1511 = vmatprep.subr.bf16.mxu0 0
    %1512 = vmatpush1.bf16.msra.mxu0 0
    %1513 = vmatprep.subr.bf16.mxu0 0
    %1514 = vmatpush1.bf16.msra.mxu0 0
    %1515 = vmatprep.subr.bf16.mxu0 0
    %1516 = vmatpush1.bf16.msra.mxu0 0
    %1517 = vmatprep.subr.bf16.mxu0 0
    %1518 = vmatpush1.bf16.msra.mxu0 0
    %1519 = vmatprep.subr.bf16.mxu0 0
    %1520 = vmatpush1.bf16.msra.mxu0 0
    %1521 = vmatprep.subr.bf16.mxu0 0
    %1522 = vmatpush1.bf16.msra.mxu0 0
    %1523 = vmatprep.subr.bf16.mxu0 0
    %1524 = vmatpush1.bf16.msra.mxu0 0
    %1525 = vmatprep.mubr.bf16.mxu0 0
    %1526 = vmatmul.mubr.bf16.gmra.mrb[0].mxu0 %v1451
    %v1527 = vpop.f32.mrb[0].mxu0
    %v1528 = vadd.f32 0.0, %v1527
    %v1529 = vpop.f32.mrb[0].mxu0
    %v1530 = vadd.f32 0.0, %v1529
    %v1531 = vpop.f32.mrb[0].mxu0
    %v1532 = vpop.f32.mrb[0].mxu0
    %1533 = vdwg.mxu0
    %1534 = vmatprep.subr.bf16.mxu0 %v1125
    %1535 = vmatpush1.bf16.msra.mxu0 %v1124
    %1536 = vmatprep.subr.bf16.mxu0 %v1133
    %1537 = vmatpush1.bf16.msra.mxu0 %v1132
    %1538 = vmatprep.subr.bf16.mxu0 %v1141
    %1539 = vmatpush1.bf16.msra.mxu0 %v1140
    %1540 = vmatprep.subr.bf16.mxu0 %v1149
    %1541 = vmatpush1.bf16.msra.mxu0 %v1148
    %1542 = vmatprep.subr.bf16.mxu0 %v1157
    %1543 = vmatpush1.bf16.msra.mxu0 %v1156
    %1544 = vmatprep.subr.bf16.mxu0 %v1165
    %1545 = vmatpush1.bf16.msra.mxu0 %v1164
    %1546 = vmatprep.subr.bf16.mxu0 %v1173
    %1547 = vmatpush1.bf16.msra.mxu0 %v1172
    %1548 = vmatprep.subr.bf16.mxu0 %v1181
    %1549 = vmatpush1.bf16.msra.mxu0 %v1180
    %1550 = vmatprep.subr.bf16.mxu0 0
    %1551 = vmatpush1.bf16.msra.mxu0 0
    %1552 = vmatprep.subr.bf16.mxu0 0
    %1553 = vmatpush1.bf16.msra.mxu0 0
    %1554 = vmatprep.subr.bf16.mxu0 0
    %1555 = vmatpush1.bf16.msra.mxu0 0
    %1556 = vmatprep.subr.bf16.mxu0 0
    %1557 = vmatpush1.bf16.msra.mxu0 0
    %1558 = vmatprep.subr.bf16.mxu0 0
    %1559 = vmatpush1.bf16.msra.mxu0 0
    %1560 = vmatprep.subr.bf16.mxu0 0
    %1561 = vmatpush1.bf16.msra.mxu0 0
    %1562 = vmatprep.subr.bf16.mxu0 0
    %1563 = vmatpush1.bf16.msra.mxu0 0
    %1564 = vmatprep.subr.bf16.mxu0 0
    %1565 = vmatpush1.bf16.msra.mxu0 0
    %1566 = vmatprep.mubr.bf16.mxu0 0
    %1567 = vmatmul.mubr.bf16.gmra.mrb[0].mxu0 %v1451
    %v1568 = vpop.f32.mrb[0].mxu0
    %v1569 = vadd.f32 0.0, %v1568
    %v1570 = vpop.f32.mrb[0].mxu0
    %v1571 = vadd.f32 0.0, %v1570
    %v1572 = vpop.f32.mrb[0].mxu0
    %v1573 = vpop.f32.mrb[0].mxu0
    %1574 = vdwg.mxu0
    %1575 = vmatprep.subr.bf16.mxu0 %v1127
    %1576 = vmatpush1.bf16.msra.mxu0 %v1126
    %1577 = vmatprep.subr.bf16.mxu0 %v1135
    %1578 = vmatpush1.bf16.msra.mxu0 %v1134
    %1579 = vmatprep.subr.bf16.mxu0 %v1143
    %1580 = vmatpush1.bf16.msra.mxu0 %v1142
    %1581 = vmatprep.subr.bf16.mxu0 %v1151
    %1582 = vmatpush1.bf16.msra.mxu0 %v1150
    %1583 = vmatprep.subr.bf16.mxu0 %v1159
    %1584 = vmatpush1.bf16.msra.mxu0 %v1158
    %1585 = vmatprep.subr.bf16.mxu0 %v1167
    %1586 = vmatpush1.bf16.msra.mxu0 %v1166
    %1587 = vmatprep.subr.bf16.mxu0 %v1175
    %1588 = vmatpush1.bf16.msra.mxu0 %v1174
    %1589 = vmatprep.subr.bf16.mxu0 %v1183
    %1590 = vmatpush1.bf16.msra.mxu0 %v1182
    %1591 = vmatprep.subr.bf16.mxu0 0
    %1592 = vmatpush1.bf16.msra.mxu0 0
    %1593 = vmatprep.subr.bf16.mxu0 0
    %1594 = vmatpush1.bf16.msra.mxu0 0
    %1595 = vmatprep.subr.bf16.mxu0 0
    %1596 = vmatpush1.bf16.msra.mxu0 0
    %1597 = vmatprep.subr.bf16.mxu0 0
    %1598 = vmatpush1.bf16.msra.mxu0 0
    %1599 = vmatprep.subr.bf16.mxu0 0
    %1600 = vmatpush1.bf16.msra.mxu0 0
    %1601 = vmatprep.subr.bf16.mxu0 0
    %1602 = vmatpush1.bf16.msra.mxu0 0
    %1603 = vmatprep.subr.bf16.mxu0 0
    %1604 = vmatpush1.bf16.msra.mxu0 0
    %1605 = vmatprep.subr.bf16.mxu0 0
    %1606 = vmatpush1.bf16.msra.mxu0 0
    %1607 = vmatprep.mubr.bf16.mxu0 0
    %1608 = vmatmul.mubr.bf16.gmra.mrb[0].mxu0 %v1451
    %v1609 = vpop.f32.mrb[0].mxu0
    %v1610 = vadd.f32 0.0, %v1609
    %v1611 = vpop.f32.mrb[0].mxu0
    %v1612 = vadd.f32 0.0, %v1611
    %v1613 = vpop.f32.mrb[0].mxu0
    %v1614 = vpop.f32.mrb[0].mxu0
    %1615 = vdwg.mxu0
    %v1616 = vsel %vm198, %v1487, %v1569
    %v1617 = vsel %vm198, %v1489, %v1571
    %v1618 = vsel %vm198, %v1528, %v1610
    %v1619 = vsel %vm198, %v1530, %v1612
    %v1620 = vadd.f32 %v846, %v1616
    %v1621 = vadd.f32 %v847, %v1617
    %v1622 = vadd.f32 %v848, %v1618
    %v1623 = vadd.f32 %v849, %v1619
    %v1624 = vxor.u32 %v1620, 2147483648
    %v1625 = vmul.f32 %v1624, 1.442695
    %v1626 = vpow.pop %v1625
    %v1627 = vadd.f32 %v1626, 1.0
    %v1628 = vrcp.pop %v1627
    %v1629 = vmul.f32 1.0, %v1628
    %v1630 = vtanh.pop %v1621
    %v1631 = vxor.u32 %v1622, 2147483648
    %v1632 = vmul.f32 %v1631, 1.442695
    %v1633 = vpow.pop %v1632
    %v1634 = vadd.f32 %v1633, 1.0
    %v1635 = vrcp.pop %v1634
    %v1636 = vmul.f32 1.0, %v1635
    %v1637 = vxor.u32 %v1623, 2147483648
    %v1638 = vmul.f32 %v1637, 1.442695
    %v1639 = vpow.pop %v1638
    %v1640 = vadd.f32 %v1639, 1.0
    %v1641 = vrcp.pop %v1640
    %v1642 = vmul.f32 1.0, %v1641
    %v1643 = vmul.f32 %v851, %v850
    %v1644 = vmul.f32 %v1642, %v1643
    %v1645 = vsub.f32 %v851, %v1643
    %v1646 = vadd.f32 %v1644, %v1645
    %v1647 = vmul.f32 %v1636, %v1643
    %v1648 = vsub.f32 %v850, %v1643
    %v1649 = vadd.f32 %v1647, %v1648
    %v1650 = vmul.f32 %v1646, %v1448
    %v1651 = vmul.f32 %v1649, %v1630
    %v1652 = vadd.f32 %v1650, %v1651
    %v1653 = vtanh.pop %v1652
    %v1654 = vmul.f32 %v1629, %v1653
    %v1655 = vpack.c.bf16 %v1654, %v1654
    %1656 = vmatprep.subr.bf16.mxu0 %v1121
    %1657 = vmatpush1.bf16.msra.mxu0 %v1120
    %1658 = vmatprep.subr.bf16.mxu0 %v1129
    %1659 = vmatpush1.bf16.msra.mxu0 %v1128
    %1660 = vmatprep.subr.bf16.mxu0 %v1137
    %1661 = vmatpush1.bf16.msra.mxu0 %v1136
    %1662 = vmatprep.subr.bf16.mxu0 %v1145
    %1663 = vmatpush1.bf16.msra.mxu0 %v1144
    %1664 = vmatprep.subr.bf16.mxu0 %v1153
    %1665 = vmatpush1.bf16.msra.mxu0 %v1152
    %1666 = vmatprep.subr.bf16.mxu0 %v1161
    %1667 = vmatpush1.bf16.msra.mxu0 %v1160
    %1668 = vmatprep.subr.bf16.mxu0 %v1169
    %1669 = vmatpush1.bf16.msra.mxu0 %v1168
    %1670 = vmatprep.subr.bf16.mxu0 %v1177
    %1671 = vmatpush1.bf16.msra.mxu0 %v1176
    %1672 = vmatprep.subr.bf16.mxu0 0
    %1673 = vmatpush1.bf16.msra.mxu0 0
    %1674 = vmatprep.subr.bf16.mxu0 0
    %1675 = vmatpush1.bf16.msra.mxu0 0
    %1676 = vmatprep.subr.bf16.mxu0 0
    %1677 = vmatpush1.bf16.msra.mxu0 0
    %1678 = vmatprep.subr.bf16.mxu0 0
    %1679 = vmatpush1.bf16.msra.mxu0 0
    %1680 = vmatprep.subr.bf16.mxu0 0
    %1681 = vmatpush1.bf16.msra.mxu0 0
    %1682 = vmatprep.subr.bf16.mxu0 0
    %1683 = vmatpush1.bf16.msra.mxu0 0
    %1684 = vmatprep.subr.bf16.mxu0 0
    %1685 = vmatpush1.bf16.msra.mxu0 0
    %1686 = vmatprep.subr.bf16.mxu0 0
    %1687 = vmatpush1.bf16.msra.mxu0 0
    %1688 = vmatprep.mubr.bf16.mxu0 0
    %1689 = vmatmul.mubr.bf16.gmra.mrb[0].mxu0 %v1655
    %v1690 = vpop.f32.mrb[0].mxu0
    %v1691 = vadd.f32 0.0, %v1690
    %v1692 = vpop.f32.mrb[0].mxu0
    %v1693 = vadd.f32 0.0, %v1692
    %v1694 = vpop.f32.mrb[0].mxu0
    %v1695 = vpop.f32.mrb[0].mxu0
    %1696 = vdwg.mxu0
    %1697 = vmatprep.subr.bf16.mxu0 %v1123
    %1698 = vmatpush1.bf16.msra.mxu0 %v1122
    %1699 = vmatprep.subr.bf16.mxu0 %v1131
    %1700 = vmatpush1.bf16.msra.mxu0 %v1130
    %1701 = vmatprep.subr.bf16.mxu0 %v1139
    %1702 = vmatpush1.bf16.msra.mxu0 %v1138
    %1703 = vmatprep.subr.bf16.mxu0 %v1147
    %1704 = vmatpush1.bf16.msra.mxu0 %v1146
    %1705 = vmatprep.subr.bf16.mxu0 %v1155
    %1706 = vmatpush1.bf16.msra.mxu0 %v1154
    %1707 = vmatprep.subr.bf16.mxu0 %v1163
    %1708 = vmatpush1.bf16.msra.mxu0 %v1162
    %1709 = vmatprep.subr.bf16.mxu0 %v1171
    %1710 = vmatpush1.bf16.msra.mxu0 %v1170
    %1711 = vmatprep.subr.bf16.mxu0 %v1179
    %1712 = vmatpush1.bf16.msra.mxu0 %v1178
    %1713 = vmatprep.subr.bf16.mxu0 0
    %1714 = vmatpush1.bf16.msra.mxu0 0
    %1715 = vmatprep.subr.bf16.mxu0 0
    %1716 = vmatpush1.bf16.msra.mxu0 0
    %1717 = vmatprep.subr.bf16.mxu0 0
    %1718 = vmatpush1.bf16.msra.mxu0 0
    %1719 = vmatprep.subr.bf16.mxu0 0
    %1720 = vmatpush1.bf16.msra.mxu0 0
    %1721 = vmatprep.subr.bf16.mxu0 0
    %1722 = vmatpush1.bf16.msra.mxu0 0
    %1723 = vmatprep.subr.bf16.mxu0 0
    %1724 = vmatpush1.bf16.msra.mxu0 0
    %1725 = vmatprep.subr.bf16.mxu0 0
    %1726 = vmatpush1.bf16.msra.mxu0 0
    %1727 = vmatprep.subr.bf16.mxu0 0
    %1728 = vmatpush1.bf16.msra.mxu0 0
    %1729 = vmatprep.mubr.bf16.mxu0 0
    %1730 = vmatmul.mubr.bf16.gmra.mrb[0].mxu0 %v1655
    %v1731 = vpop.f32.mrb[0].mxu0
    %v1732 = vadd.f32 0.0, %v1731
    %v1733 = vpop.f32.mrb[0].mxu0
    %v1734 = vadd.f32 0.0, %v1733
    %v1735 = vpop.f32.mrb[0].mxu0
    %v1736 = vpop.f32.mrb[0].mxu0
    %1737 = vdwg.mxu0
    %1738 = vmatprep.subr.bf16.mxu0 %v1125
    %1739 = vmatpush1.bf16.msra.mxu0 %v1124
    %1740 = vmatprep.subr.bf16.mxu0 %v1133
    %1741 = vmatpush1.bf16.msra.mxu0 %v1132
    %1742 = vmatprep.subr.bf16.mxu0 %v1141
    %1743 = vmatpush1.bf16.msra.mxu0 %v1140
    %1744 = vmatprep.subr.bf16.mxu0 %v1149
    %1745 = vmatpush1.bf16.msra.mxu0 %v1148
    %1746 = vmatprep.subr.bf16.mxu0 %v1157
    %1747 = vmatpush1.bf16.msra.mxu0 %v1156
    %1748 = vmatprep.subr.bf16.mxu0 %v1165
    %1749 = vmatpush1.bf16.msra.mxu0 %v1164
    %1750 = vmatprep.subr.bf16.mxu0 %v1173
    %1751 = vmatpush1.bf16.msra.mxu0 %v1172
    %1752 = vmatprep.subr.bf16.mxu0 %v1181
    %1753 = vmatpush1.bf16.msra.mxu0 %v1180
    %1754 = vmatprep.subr.bf16.mxu0 0
    %1755 = vmatpush1.bf16.msra.mxu0 0
    %1756 = vmatprep.subr.bf16.mxu0 0
    %1757 = vmatpush1.bf16.msra.mxu0 0
    %1758 = vmatprep.subr.bf16.mxu0 0
    %1759 = vmatpush1.bf16.msra.mxu0 0
    %1760 = vmatprep.subr.bf16.mxu0 0
    %1761 = vmatpush1.bf16.msra.mxu0 0
    %1762 = vmatprep.subr.bf16.mxu0 0
    %1763 = vmatpush1.bf16.msra.mxu0 0
    %1764 = vmatprep.subr.bf16.mxu0 0
    %1765 = vmatpush1.bf16.msra.mxu0 0
    %1766 = vmatprep.subr.bf16.mxu0 0
    %1767 = vmatpush1.bf16.msra.mxu0 0
    %1768 = vmatprep.subr.bf16.mxu0 0
    %1769 = vmatpush1.bf16.msra.mxu0 0
    %1770 = vmatprep.mubr.bf16.mxu0 0
    %1771 = vmatmul.mubr.bf16.gmra.mrb[0].mxu0 %v1655
    %v1772 = vpop.f32.mrb[0].mxu0
    %v1773 = vadd.f32 0.0, %v1772
    %v1774 = vpop.f32.mrb[0].mxu0
    %v1775 = vadd.f32 0.0, %v1774
    %v1776 = vpop.f32.mrb[0].mxu0
    %v1777 = vpop.f32.mrb[0].mxu0
    %1778 = vdwg.mxu0
    %1779 = vmatprep.subr.bf16.mxu0 %v1127
    %1780 = vmatpush1.bf16.msra.mxu0 %v1126
    %1781 = vmatprep.subr.bf16.mxu0 %v1135
    %1782 = vmatpush1.bf16.msra.mxu0 %v1134
    %1783 = vmatprep.subr.bf16.mxu0 %v1143
    %1784 = vmatpush1.bf16.msra.mxu0 %v1142
    %1785 = vmatprep.subr.bf16.mxu0 %v1151
    %1786 = vmatpush1.bf16.msra.mxu0 %v1150
    %1787 = vmatprep.subr.bf16.mxu0 %v1159
    %1788 = vmatpush1.bf16.msra.mxu0 %v1158
    %1789 = vmatprep.subr.bf16.mxu0 %v1167
    %1790 = vmatpush1.bf16.msra.mxu0 %v1166
    %1791 = vmatprep.subr.bf16.mxu0 %v1175
    %1792 = vmatpush1.bf16.msra.mxu0 %v1174
    %1793 = vmatprep.subr.bf16.mxu0 %v1183
    %1794 = vmatpush1.bf16.msra.mxu0 %v1182
    %1795 = vmatprep.subr.bf16.mxu0 0
    %1796 = vmatpush1.bf16.msra.mxu0 0
    %1797 = vmatprep.subr.bf16.mxu0 0
    %1798 = vmatpush1.bf16.msra.mxu0 0
    %1799 = vmatprep.subr.bf16.mxu0 0
    %1800 = vmatpush1.bf16.msra.mxu0 0
    %1801 = vmatprep.subr.bf16.mxu0 0
    %1802 = vmatpush1.bf16.msra.mxu0 0
    %1803 = vmatprep.subr.bf16.mxu0 0
    %1804 = vmatpush1.bf16.msra.mxu0 0
    %1805 = vmatprep.subr.bf16.mxu0 0
    %1806 = vmatpush1.bf16.msra.mxu0 0
    %1807 = vmatprep.subr.bf16.mxu0 0
    %1808 = vmatpush1.bf16.msra.mxu0 0
    %1809 = vmatprep.subr.bf16.mxu0 0
    %1810 = vmatpush1.bf16.msra.mxu0 0
    %1811 = vmatprep.mubr.bf16.mxu0 0
    %1812 = vmatmul.mubr.bf16.gmra.mrb[0].mxu0 %v1655
    %v1813 = vpop.f32.mrb[0].mxu0
    %v1814 = vadd.f32 0.0, %v1813
    %v1815 = vpop.f32.mrb[0].mxu0
    %v1816 = vadd.f32 0.0, %v1815
    %v1817 = vpop.f32.mrb[0].mxu0
    %v1818 = vpop.f32.mrb[0].mxu0
    %1819 = vdwg.mxu0
    %v1820 = vsel %vm198, %v1691, %v1773
    %v1821 = vsel %vm198, %v1693, %v1775
    %v1822 = vsel %vm198, %v1732, %v1814
    %v1823 = vsel %vm198, %v1734, %v1816
    %v1824 = vadd.f32 %v852, %v1820
    %v1825 = vadd.f32 %v853, %v1821
    %v1826 = vadd.f32 %v854, %v1822
    %v1827 = vadd.f32 %v855, %v1823
    %v1828 = vxor.u32 %v1824, 2147483648
    %v1829 = vmul.f32 %v1828, 1.442695
    %v1830 = vpow.pop %v1829
    %v1831 = vadd.f32 %v1830, 1.0
    %v1832 = vrcp.pop %v1831
    %v1833 = vmul.f32 1.0, %v1832
    %v1834 = vtanh.pop %v1825
    %v1835 = vxor.u32 %v1826, 2147483648
    %v1836 = vmul.f32 %v1835, 1.442695
    %v1837 = vpow.pop %v1836
    %v1838 = vadd.f32 %v1837, 1.0
    %v1839 = vrcp.pop %v1838
    %v1840 = vmul.f32 1.0, %v1839
    %v1841 = vxor.u32 %v1827, 2147483648
    %v1842 = vmul.f32 %v1841, 1.442695
    %v1843 = vpow.pop %v1842
    %v1844 = vadd.f32 %v1843, 1.0
    %v1845 = vrcp.pop %v1844
    %v1846 = vmul.f32 1.0, %v1845
    %v1847 = vmul.f32 %v857, %v856
    %v1848 = vmul.f32 %v1846, %v1847
    %v1849 = vsub.f32 %v857, %v1847
    %v1850 = vadd.f32 %v1848, %v1849
    %v1851 = vmul.f32 %v1840, %v1847
    %v1852 = vsub.f32 %v856, %v1847
    %v1853 = vadd.f32 %v1851, %v1852
    %v1854 = vmul.f32 %v1850, %v1652
    %v1855 = vmul.f32 %v1853, %v1834
    %v1856 = vadd.f32 %v1854, %v1855
    %v1857 = vtanh.pop %v1856
    %v1858 = vmul.f32 %v1833, %v1857
    %v1859 = vpack.c.bf16 %v1858, %v1858
    %1860 = vmatprep.subr.bf16.mxu0 %v1121
    %1861 = vmatpush1.bf16.msra.mxu0 %v1120
    %1862 = vmatprep.subr.bf16.mxu0 %v1129
    %1863 = vmatpush1.bf16.msra.mxu0 %v1128
    %1864 = vmatprep.subr.bf16.mxu0 %v1137
    %1865 = vmatpush1.bf16.msra.mxu0 %v1136
    %1866 = vmatprep.subr.bf16.mxu0 %v1145
    %1867 = vmatpush1.bf16.msra.mxu0 %v1144
    %1868 = vmatprep.subr.bf16.mxu0 %v1153
    %1869 = vmatpush1.bf16.msra.mxu0 %v1152
    %1870 = vmatprep.subr.bf16.mxu0 %v1161
    %1871 = vmatpush1.bf16.msra.mxu0 %v1160
    %1872 = vmatprep.subr.bf16.mxu0 %v1169
    %1873 = vmatpush1.bf16.msra.mxu0 %v1168
    %1874 = vmatprep.subr.bf16.mxu0 %v1177
    %1875 = vmatpush1.bf16.msra.mxu0 %v1176
    %1876 = vmatprep.subr.bf16.mxu0 0
    %1877 = vmatpush1.bf16.msra.mxu0 0
    %1878 = vmatprep.subr.bf16.mxu0 0
    %1879 = vmatpush1.bf16.msra.mxu0 0
    %1880 = vmatprep.subr.bf16.mxu0 0
    %1881 = vmatpush1.bf16.msra.mxu0 0
    %1882 = vmatprep.subr.bf16.mxu0 0
    %1883 = vmatpush1.bf16.msra.mxu0 0
    %1884 = vmatprep.subr.bf16.mxu0 0
    %1885 = vmatpush1.bf16.msra.mxu0 0
    %1886 = vmatprep.subr.bf16.mxu0 0
    %1887 = vmatpush1.bf16.msra.mxu0 0
    %1888 = vmatprep.subr.bf16.mxu0 0
    %1889 = vmatpush1.bf16.msra.mxu0 0
    %1890 = vmatprep.subr.bf16.mxu0 0
    %1891 = vmatpush1.bf16.msra.mxu0 0
    %1892 = vmatprep.mubr.bf16.mxu0 0
    %1893 = vmatmul.mubr.bf16.gmra.mrb[0].mxu0 %v1859
    %v1894 = vpop.f32.mrb[0].mxu0
    %v1895 = vadd.f32 0.0, %v1894
    %v1896 = vpop.f32.mrb[0].mxu0
    %v1897 = vadd.f32 0.0, %v1896
    %v1898 = vpop.f32.mrb[0].mxu0
    %v1899 = vpop.f32.mrb[0].mxu0
    %1900 = vdwg.mxu0
    %1901 = vmatprep.subr.bf16.mxu0 %v1123
    %1902 = vmatpush1.bf16.msra.mxu0 %v1122
    %1903 = vmatprep.subr.bf16.mxu0 %v1131
    %1904 = vmatpush1.bf16.msra.mxu0 %v1130
    %1905 = vmatprep.subr.bf16.mxu0 %v1139
    %1906 = vmatpush1.bf16.msra.mxu0 %v1138
    %1907 = vmatprep.subr.bf16.mxu0 %v1147
    %1908 = vmatpush1.bf16.msra.mxu0 %v1146
    %1909 = vmatprep.subr.bf16.mxu0 %v1155
    %1910 = vmatpush1.bf16.msra.mxu0 %v1154
    %1911 = vmatprep.subr.bf16.mxu0 %v1163
    %1912 = vmatpush1.bf16.msra.mxu0 %v1162
    %1913 = vmatprep.subr.bf16.mxu0 %v1171
    %1914 = vmatpush1.bf16.msra.mxu0 %v1170
    %1915 = vmatprep.subr.bf16.mxu0 %v1179
    %1916 = vmatpush1.bf16.msra.mxu0 %v1178
    %1917 = vmatprep.subr.bf16.mxu0 0
    %1918 = vmatpush1.bf16.msra.mxu0 0
    %1919 = vmatprep.subr.bf16.mxu0 0
    %1920 = vmatpush1.bf16.msra.mxu0 0
    %1921 = vmatprep.subr.bf16.mxu0 0
    %1922 = vmatpush1.bf16.msra.mxu0 0
    %1923 = vmatprep.subr.bf16.mxu0 0
    %1924 = vmatpush1.bf16.msra.mxu0 0
    %1925 = vmatprep.subr.bf16.mxu0 0
    %1926 = vmatpush1.bf16.msra.mxu0 0
    %1927 = vmatprep.subr.bf16.mxu0 0
    %1928 = vmatpush1.bf16.msra.mxu0 0
    %1929 = vmatprep.subr.bf16.mxu0 0
    %1930 = vmatpush1.bf16.msra.mxu0 0
    %1931 = vmatprep.subr.bf16.mxu0 0
    %1932 = vmatpush1.bf16.msra.mxu0 0
    %1933 = vmatprep.mubr.bf16.mxu0 0
    %1934 = vmatmul.mubr.bf16.gmra.mrb[0].mxu0 %v1859
    %v1935 = vpop.f32.mrb[0].mxu0
    %v1936 = vadd.f32 0.0, %v1935
    %v1937 = vpop.f32.mrb[0].mxu0
    %v1938 = vadd.f32 0.0, %v1937
    %v1939 = vpop.f32.mrb[0].mxu0
    %v1940 = vpop.f32.mrb[0].mxu0
    %1941 = vdwg.mxu0
    %1942 = vmatprep.subr.bf16.mxu0 %v1125
    %1943 = vmatpush1.bf16.msra.mxu0 %v1124
    %1944 = vmatprep.subr.bf16.mxu0 %v1133
    %1945 = vmatpush1.bf16.msra.mxu0 %v1132
    %1946 = vmatprep.subr.bf16.mxu0 %v1141
    %1947 = vmatpush1.bf16.msra.mxu0 %v1140
    %1948 = vmatprep.subr.bf16.mxu0 %v1149
    %1949 = vmatpush1.bf16.msra.mxu0 %v1148
    %1950 = vmatprep.subr.bf16.mxu0 %v1157
    %1951 = vmatpush1.bf16.msra.mxu0 %v1156
    %1952 = vmatprep.subr.bf16.mxu0 %v1165
    %1953 = vmatpush1.bf16.msra.mxu0 %v1164
    %1954 = vmatprep.subr.bf16.mxu0 %v1173
    %1955 = vmatpush1.bf16.msra.mxu0 %v1172
    %1956 = vmatprep.subr.bf16.mxu0 %v1181
    %1957 = vmatpush1.bf16.msra.mxu0 %v1180
    %1958 = vmatprep.subr.bf16.mxu0 0
    %1959 = vmatpush1.bf16.msra.mxu0 0
    %1960 = vmatprep.subr.bf16.mxu0 0
    %1961 = vmatpush1.bf16.msra.mxu0 0
    %1962 = vmatprep.subr.bf16.mxu0 0
    %1963 = vmatpush1.bf16.msra.mxu0 0
    %1964 = vmatprep.subr.bf16.mxu0 0
    %1965 = vmatpush1.bf16.msra.mxu0 0
    %1966 = vmatprep.subr.bf16.mxu0 0
    %1967 = vmatpush1.bf16.msra.mxu0 0
    %1968 = vmatprep.subr.bf16.mxu0 0
    %1969 = vmatpush1.bf16.msra.mxu0 0
    %1970 = vmatprep.subr.bf16.mxu0 0
    %1971 = vmatpush1.bf16.msra.mxu0 0
    %1972 = vmatprep.subr.bf16.mxu0 0
    %1973 = vmatpush1.bf16.msra.mxu0 0
    %1974 = vmatprep.mubr.bf16.mxu0 0
    %1975 = vmatmul.mubr.bf16.gmra.mrb[0].mxu0 %v1859
    %v1976 = vpop.f32.mrb[0].mxu0
    %v1977 = vadd.f32 0.0, %v1976
    %v1978 = vpop.f32.mrb[0].mxu0
    %v1979 = vadd.f32 0.0, %v1978
    %v1980 = vpop.f32.mrb[0].mxu0
    %v1981 = vpop.f32.mrb[0].mxu0
    %1982 = vdwg.mxu0
    %1983 = vmatprep.subr.bf16.mxu0 %v1127
    %1984 = vmatpush1.bf16.msra.mxu0 %v1126
    %1985 = vmatprep.subr.bf16.mxu0 %v1135
    %1986 = vmatpush1.bf16.msra.mxu0 %v1134
    %1987 = vmatprep.subr.bf16.mxu0 %v1143
    %1988 = vmatpush1.bf16.msra.mxu0 %v1142
    %1989 = vmatprep.subr.bf16.mxu0 %v1151
    %1990 = vmatpush1.bf16.msra.mxu0 %v1150
    %1991 = vmatprep.subr.bf16.mxu0 %v1159
    %1992 = vmatpush1.bf16.msra.mxu0 %v1158
    %1993 = vmatprep.subr.bf16.mxu0 %v1167
    %1994 = vmatpush1.bf16.msra.mxu0 %v1166
    %1995 = vmatprep.subr.bf16.mxu0 %v1175
    %1996 = vmatpush1.bf16.msra.mxu0 %v1174
    %1997 = vmatprep.subr.bf16.mxu0 %v1183
    %1998 = vmatpush1.bf16.msra.mxu0 %v1182
    %1999 = vmatprep.subr.bf16.mxu0 0
    %2000 = vmatpush1.bf16.msra.mxu0 0
    %2001 = vmatprep.subr.bf16.mxu0 0
    %2002 = vmatpush1.bf16.msra.mxu0 0
    %2003 = vmatprep.subr.bf16.mxu0 0
    %2004 = vmatpush1.bf16.msra.mxu0 0
    %2005 = vmatprep.subr.bf16.mxu0 0
    %2006 = vmatpush1.bf16.msra.mxu0 0
    %2007 = vmatprep.subr.bf16.mxu0 0
    %2008 = vmatpush1.bf16.msra.mxu0 0
    %2009 = vmatprep.subr.bf16.mxu0 0
    %2010 = vmatpush1.bf16.msra.mxu0 0
    %2011 = vmatprep.subr.bf16.mxu0 0
    %2012 = vmatpush1.bf16.msra.mxu0 0
    %2013 = vmatprep.subr.bf16.mxu0 0
    %2014 = vmatpush1.bf16.msra.mxu0 0
    %2015 = vmatprep.mubr.bf16.mxu0 0
    %2016 = vmatmul.mubr.bf16.gmra.mrb[0].mxu0 %v1859
    %v2017 = vpop.f32.mrb[0].mxu0
    %v2018 = vadd.f32 0.0, %v2017
    %v2019 = vpop.f32.mrb[0].mxu0
    %v2020 = vadd.f32 0.0, %v2019
    %v2021 = vpop.f32.mrb[0].mxu0
    %v2022 = vpop.f32.mrb[0].mxu0
    %2023 = vdwg.mxu0
    %v2024 = vsel %vm198, %v1895, %v1977
    %v2025 = vsel %vm198, %v1897, %v1979
    %v2026 = vsel %vm198, %v1936, %v2018
    %v2027 = vsel %vm198, %v1938, %v2020
    %v2028 = vadd.f32 %v858, %v2024
    %v2029 = vadd.f32 %v859, %v2025
    %v2030 = vadd.f32 %v860, %v2026
    %v2031 = vadd.f32 %v861, %v2027
    %v2032 = vxor.u32 %v2028, 2147483648
    %v2033 = vmul.f32 %v2032, 1.442695
    %v2034 = vpow.pop %v2033
    %v2035 = vadd.f32 %v2034, 1.0
    %v2036 = vrcp.pop %v2035
    %v2037 = vmul.f32 1.0, %v2036
    %v2038 = vtanh.pop %v2029
    %v2039 = vxor.u32 %v2030, 2147483648
    %v2040 = vmul.f32 %v2039, 1.442695
    %v2041 = vpow.pop %v2040
    %v2042 = vadd.f32 %v2041, 1.0
    %v2043 = vrcp.pop %v2042
    %v2044 = vmul.f32 1.0, %v2043
    %v2045 = vxor.u32 %v2031, 2147483648
    %v2046 = vmul.f32 %v2045, 1.442695
    %v2047 = vpow.pop %v2046
    %v2048 = vadd.f32 %v2047, 1.0
    %v2049 = vrcp.pop %v2048
    %v2050 = vmul.f32 1.0, %v2049
    %v2051 = vmul.f32 %v863, %v862
    %v2052 = vmul.f32 %v2050, %v2051
    %v2053 = vsub.f32 %v863, %v2051
    %v2054 = vadd.f32 %v2052, %v2053
    %v2055 = vmul.f32 %v2044, %v2051
    %v2056 = vsub.f32 %v862, %v2051
    %v2057 = vadd.f32 %v2055, %v2056
    %v2058 = vmul.f32 %v2054, %v1856
    %v2059 = vmul.f32 %v2057, %v2038
    %v2060 = vadd.f32 %v2058, %v2059
    %v2061 = vtanh.pop %v2060
    %v2062 = vmul.f32 %v2037, %v2061
    %2063 = vrot.lane.b32.xlu0 %v192, 96
    %v2064 = vpop.permute.xlu0 %2063
    %2065 = vrot.lane.b32.xlu0 %v193, 96
    %v2066 = vpop.permute.xlu0 %2065
    %2067 = vrot.lane.b32.xlu0 %v194, 96
    %v2068 = vpop.permute.xlu0 %2067
    %2069 = vrot.lane.b32.xlu0 %v195, 96
    %v2070 = vpop.permute.xlu0 %2069
    %2075 = vrot.lane.b32.xlu0 0.16666667, 108
    %v2076 = vpop.permute.xlu0 %2075
    %2077 = vrot.lane.b32.xlu0 %v192, 108
    %v2078 = vpop.permute.xlu0 %2077
    %2079 = vrot.lane.b32.xlu0 %v193, 108
    %v2080 = vpop.permute.xlu0 %2079
    %2081 = vrot.lane.b32.xlu0 %v194, 108
    %v2082 = vpop.permute.xlu0 %2081
    %v2087 = vsel %vm241, %v1450, 0.0
    %v2088 = vsel %vm241, %v1654, 0.0
    %v2089 = vsel %vm241, %v1858, 0.0
    %v2090 = vsel %vm241, %v2062, 0.0
    %v2091 = vsel %vm556, %v2087, %v2064
    %v2092 = vsel %vm556, %v2088, %v2066
    %v2093 = vsel %vm556, %v2089, %v2068
    %v2094 = vsel %vm556, %v2090, %v2070
    %vm2095 = vcmask 883712
    %v2096 = vsel %vm2095, %v2091, %v2076
    %v2097 = vsel %vm2095, %v2092, %v2078
    %v2098 = vsel %vm2095, %v2093, %v2080
    %v2099 = vsel %vm2095, %v2094, %v2082
    %vm2100 = vcmask 982016
    %v2101 = vsel %vm2100, %v2096, 0.0
    %v2102 = vsel %vm2100, %v2097, 0.0
    %v2103 = vsel %vm2100, %v2098, 0.0
    %v2104 = vsel %vm2100, %v2099, 0.0
    %v2109 = vrot.slane %v1450, 4
    %v2110 = vrot.slane %v1654, 4
    %v2111 = vrot.slane %v1858, 4
    %v2112 = vrot.slane %v2062, 4
    %2113 = vrot.lane.b32.xlu0 %v2109, 48
    %v2114 = vpop.permute.xlu0 %2113
    %2115 = vrot.lane.b32.xlu0 %v2110, 48
    %v2116 = vpop.permute.xlu0 %2115
    %2117 = vrot.lane.b32.xlu0 %v2111, 48
    %v2118 = vpop.permute.xlu0 %2117
    %2119 = vrot.lane.b32.xlu0 %v2112, 48
    %v2120 = vpop.permute.xlu0 %2119
    %2125 = vrot.lane.b32.xlu0 0.16666667, 120
    %v2126 = vpop.permute.xlu0 %2125
    %2127 = vrot.lane.b32.xlu0 %v192, 120
    %v2128 = vpop.permute.xlu0 %2127
    %2129 = vrot.lane.b32.xlu0 %v193, 120
    %v2130 = vpop.permute.xlu0 %2129
    %2131 = vrot.lane.b32.xlu0 %v194, 120
    %v2132 = vpop.permute.xlu0 %2131
    %2137 = vrot.lane.b32.xlu0 %v192, 4
    %v2138 = vpop.permute.xlu0 %2137
    %2139 = vrot.lane.b32.xlu0 %v193, 4
    %v2140 = vpop.permute.xlu0 %2139
    %2141 = vrot.lane.b32.xlu0 %v194, 4
    %v2142 = vpop.permute.xlu0 %2141
    %2143 = vrot.lane.b32.xlu0 %v195, 4
    %v2144 = vpop.permute.xlu0 %2143
    %v2149 = vsel %vm241, 0.0, %v2114
    %v2150 = vsel %vm241, 0.0, %v2116
    %v2151 = vsel %vm241, 0.0, %v2118
    %v2152 = vsel %vm241, 0.0, %v2120
    %v2153 = vsel %vm556, %v2149, 0.0
    %v2154 = vsel %vm556, %v2150, 0.0
    %v2155 = vsel %vm556, %v2151, 0.0
    %v2156 = vsel %vm556, %v2152, 0.0
    %v2157 = vsel %vm2095, %v2153, 0.0
    %v2158 = vsel %vm2095, %v2154, 0.0
    %v2159 = vsel %vm2095, %v2155, 0.0
    %v2160 = vsel %vm2095, %v2156, 0.0
    %v2161 = vsel %vm2100, %v2157, %v2126
    %v2162 = vsel %vm2100, %v2158, %v2128
    %v2163 = vsel %vm2100, %v2159, %v2130
    %v2164 = vsel %vm2100, %v2160, %v2132
    %vm2165 = vcmask 31744
    %v2166 = vsel %vm2165, %v2126, %v2138
    %v2167 = vsel %vm2165, %v2128, %v2140
    %v2168 = vsel %vm2165, %v2130, %v2142
    %v2169 = vsel %vm2165, %v2132, %v2144
    %v2178 = vrot.slane %v2161, 4
    %v2179 = vrot.slane %v2166, 4
    %v2180 = vrot.slane %v2162, 4
    %v2181 = vrot.slane %v2167, 4
    %v2182 = vrot.slane %v2163, 4
    %v2183 = vrot.slane %v2168, 4
    %v2184 = vrot.slane %v2164, 4
    %v2185 = vrot.slane %v2169, 4
    %v2194 = vsel %vm333, %v2101, %v2178
    %v2195 = vsel %vm333, 0.0, %v2179
    %v2196 = vsel %vm333, %v2102, %v2180
    %v2197 = vsel %vm333, 0.0, %v2181
    %v2198 = vsel %vm333, %v2103, %v2182
    %v2199 = vsel %vm333, 0.0, %v2183
    %v2200 = vsel %vm333, %v2104, %v2184
    %v2201 = vsel %vm333, 0.0, %v2185
    %v2202 = vpack.c.bf16 %v2196, %v2194
    %v2203 = vpack.c.bf16 %v2197, %v2195
    %v2204 = vpack.c.bf16 %v2200, %v2198
    %v2205 = vpack.c.bf16 %v2201, %v2199
    %v2206 = vld [vmem:[#allocation5] sm:$0xff]
    %v2207 = vld [vmem:[#allocation5 + $0x8] sm:$0xff]
    %v2208 = vld [vmem:[#allocation5 + $0x10] sm:$0xff]
    %v2209 = vld [vmem:[#allocation5 + $0x18] sm:$0xff]
    %v2210 = vld [vmem:[#allocation5 + $0x20] sm:$0xff]
    %v2211 = vld [vmem:[#allocation5 + $0x28] sm:$0xff]
    %v2212 = vld [vmem:[#allocation5 + $0x30] sm:$0xff]
    %v2213 = vld [vmem:[#allocation5 + $0x38] sm:$0xff]
    %v2214 = vld [vmem:[#allocation5 + $0x40] sm:$0xff]
    %v2215 = vld [vmem:[#allocation5 + $0x48] sm:$0xff]
    %v2216 = vld [vmem:[#allocation5 + $0x50] sm:$0xff]
    %v2217 = vld [vmem:[#allocation5 + $0x58] sm:$0xff]
    %v2218 = vld [vmem:[#allocation5 + $0x60] sm:$0xff]
    %v2219 = vld [vmem:[#allocation5 + $0x68] sm:$0xff]
    %v2220 = vld [vmem:[#allocation5 + $0x70] sm:$0xff]
    %v2221 = vld [vmem:[#allocation5 + $0x78] sm:$0xff]
    %v2222 = vld [vmem:[#allocation5 + $0x80] sm:$0xff]
    %v2223 = vld [vmem:[#allocation5 + $0x88] sm:$0xff]
    %v2224 = vld [vmem:[#allocation5 + $0x90] sm:$0xff]
    %v2225 = vld [vmem:[#allocation5 + $0x98] sm:$0xff]
    %v2226 = vld [vmem:[#allocation5 + $0xa0] sm:$0xff]
    %v2227 = vld [vmem:[#allocation5 + $0xa8] sm:$0xff]
    %v2228 = vld [vmem:[#allocation5 + $0xb0] sm:$0xff]
    %v2229 = vld [vmem:[#allocation5 + $0xb8] sm:$0xff]
    %v2230 = vld [vmem:[#allocation5 + $0xc0] sm:$0xff]
    %v2231 = vld [vmem:[#allocation5 + $0xc8] sm:$0xff]
    %v2232 = vld [vmem:[#allocation5 + $0xd0] sm:$0xff]
    %v2233 = vld [vmem:[#allocation5 + $0xd8] sm:$0xff]
    %v2234 = vld [vmem:[#allocation5 + $0xe0] sm:$0xff]
    %v2235 = vld [vmem:[#allocation5 + $0xe8] sm:$0xff]
    %v2236 = vld [vmem:[#allocation5 + $0xf0] sm:$0xff]
    %v2237 = vld [vmem:[#allocation5 + $0xf8] sm:$0xff]
    %v2238 = vld [vmem:[#allocation5 + $0x100] sm:$0xff]
    %v2239 = vld [vmem:[#allocation5 + $0x108] sm:$0xff]
    %v2240 = vld [vmem:[#allocation5 + $0x110] sm:$0xff]
    %v2241 = vld [vmem:[#allocation5 + $0x118] sm:$0xff]
    %v2242 = vld [vmem:[#allocation5 + $0x120] sm:$0xff]
    %v2243 = vld [vmem:[#allocation5 + $0x128] sm:$0xff]
    %v2244 = vld [vmem:[#allocation5 + $0x130] sm:$0xff]
    %v2245 = vld [vmem:[#allocation5 + $0x138] sm:$0xff]
    %v2246 = vld [vmem:[#allocation5 + $0x140] sm:$0xff]
    %v2247 = vld [vmem:[#allocation5 + $0x148] sm:$0xff]
    %v2248 = vld [vmem:[#allocation5 + $0x150] sm:$0xff]
    %v2249 = vld [vmem:[#allocation5 + $0x158] sm:$0xff]
    %v2250 = vld [vmem:[#allocation5 + $0x160] sm:$0xff]
    %v2251 = vld [vmem:[#allocation5 + $0x168] sm:$0xff]
    %v2252 = vld [vmem:[#allocation5 + $0x170] sm:$0xff]
    %v2253 = vld [vmem:[#allocation5 + $0x178] sm:$0xff]
    %v2254 = vld [vmem:[#allocation5 + $0x180] sm:$0xff]
    %v2255 = vld [vmem:[#allocation5 + $0x188] sm:$0xff]
    %v2256 = vld [vmem:[#allocation5 + $0x190] sm:$0xff]
    %v2257 = vld [vmem:[#allocation5 + $0x198] sm:$0xff]
    %v2258 = vld [vmem:[#allocation5 + $0x1a0] sm:$0xff]
    %v2259 = vld [vmem:[#allocation5 + $0x1a8] sm:$0xff]
    %v2314 = vunpack.c.l.b16 %v2206
    %v2315 = vunpack.c.h.b16 %v2206
    %v2316 = vunpack.c.l.b16 %v2207
    %v2317 = vunpack.c.h.b16 %v2207
    %v2318 = vunpack.c.l.b16 %v2208
    %v2319 = vunpack.c.h.b16 %v2208
    %v2320 = vunpack.c.l.b16 %v2209
    %v2321 = vunpack.c.h.b16 %v2209
    %v2322 = vunpack.c.l.b16 %v2210
    %v2323 = vunpack.c.h.b16 %v2210
    %v2324 = vunpack.c.l.b16 %v2211
    %v2325 = vunpack.c.h.b16 %v2211
    %v2326 = vunpack.c.l.b16 %v2212
    %v2327 = vunpack.c.h.b16 %v2212
    %v2328 = vunpack.c.l.b16 %v2213
    %v2329 = vunpack.c.h.b16 %v2213
    %v2330 = vunpack.c.l.b16 %v2214
    %v2331 = vunpack.c.h.b16 %v2214
    %v2332 = vunpack.c.l.b16 %v2215
    %v2333 = vunpack.c.h.b16 %v2215
    %v2334 = vunpack.c.l.b16 %v2216
    %v2335 = vunpack.c.h.b16 %v2216
    %v2336 = vunpack.c.l.b16 %v2217
    %v2337 = vunpack.c.h.b16 %v2217
    %v2338 = vunpack.c.l.b16 %v2218
    %v2339 = vunpack.c.h.b16 %v2218
    %v2340 = vunpack.c.l.b16 %v2219
    %v2341 = vunpack.c.h.b16 %v2219
    %v2342 = vunpack.c.l.b16 %v2220
    %v2343 = vunpack.c.h.b16 %v2220
    %v2344 = vunpack.c.l.b16 %v2221
    %v2345 = vunpack.c.h.b16 %v2221
    %v2346 = vunpack.c.l.b16 %v2222
    %v2347 = vunpack.c.h.b16 %v2222
    %v2348 = vunpack.c.l.b16 %v2223
    %v2349 = vunpack.c.h.b16 %v2223
    %v2350 = vunpack.c.l.b16 %v2224
    %v2351 = vunpack.c.h.b16 %v2224
    %v2352 = vunpack.c.l.b16 %v2225
    %v2353 = vunpack.c.h.b16 %v2225
    %v2354 = vunpack.c.l.b16 %v2226
    %v2355 = vunpack.c.h.b16 %v2226
    %v2356 = vunpack.c.l.b16 %v2227
    %v2357 = vunpack.c.h.b16 %v2227
    %v2358 = vunpack.c.l.b16 %v2228
    %v2359 = vunpack.c.h.b16 %v2228
    %v2360 = vunpack.c.l.b16 %v2229
    %v2361 = vunpack.c.h.b16 %v2229
    %v2362 = vunpack.c.l.b16 %v2230
    %v2363 = vunpack.c.h.b16 %v2230
    %v2364 = vunpack.c.l.b16 %v2231
    %v2365 = vunpack.c.h.b16 %v2231
    %v2366 = vunpack.c.l.b16 %v2232
    %v2367 = vunpack.c.h.b16 %v2232
    %v2368 = vunpack.c.l.b16 %v2233
    %v2369 = vunpack.c.h.b16 %v2233
    %v2370 = vunpack.c.l.b16 %v2234
    %v2371 = vunpack.c.h.b16 %v2234
    %v2372 = vunpack.c.l.b16 %v2235
    %v2373 = vunpack.c.h.b16 %v2235
    %v2374 = vunpack.c.l.b16 %v2236
    %v2375 = vunpack.c.h.b16 %v2236
    %v2376 = vunpack.c.l.b16 %v2237
    %v2377 = vunpack.c.h.b16 %v2237
    %v2378 = vunpack.c.l.b16 %v2238
    %v2379 = vunpack.c.h.b16 %v2238
    %v2380 = vunpack.c.l.b16 %v2239
    %v2381 = vunpack.c.h.b16 %v2239
    %v2382 = vunpack.c.l.b16 %v2240
    %v2383 = vunpack.c.h.b16 %v2240
    %v2384 = vunpack.c.l.b16 %v2241
    %v2385 = vunpack.c.h.b16 %v2241
    %v2386 = vunpack.c.l.b16 %v2242
    %v2387 = vunpack.c.h.b16 %v2242
    %v2388 = vunpack.c.l.b16 %v2243
    %v2389 = vunpack.c.h.b16 %v2243
    %v2390 = vunpack.c.l.b16 %v2244
    %v2391 = vunpack.c.h.b16 %v2244
    %v2392 = vunpack.c.l.b16 %v2245
    %v2393 = vunpack.c.h.b16 %v2245
    %v2394 = vunpack.c.l.b16 %v2246
    %v2395 = vunpack.c.h.b16 %v2246
    %v2396 = vunpack.c.l.b16 %v2247
    %v2397 = vunpack.c.h.b16 %v2247
    %v2398 = vunpack.c.l.b16 %v2248
    %v2399 = vunpack.c.h.b16 %v2248
    %v2400 = vunpack.c.l.b16 %v2249
    %v2401 = vunpack.c.h.b16 %v2249
    %v2402 = vunpack.c.l.b16 %v2250
    %v2403 = vunpack.c.h.b16 %v2250
    %v2404 = vunpack.c.l.b16 %v2251
    %v2405 = vunpack.c.h.b16 %v2251
    %v2406 = vunpack.c.l.b16 %v2252
    %v2407 = vunpack.c.h.b16 %v2252
    %v2408 = vunpack.c.l.b16 %v2253
    %v2409 = vunpack.c.h.b16 %v2253
    %v2410 = vunpack.c.l.b16 %v2254
    %v2411 = vunpack.c.h.b16 %v2254
    %v2412 = vunpack.c.l.b16 %v2255
    %v2413 = vunpack.c.h.b16 %v2255
    %v2414 = vunpack.c.l.b16 %v2256
    %v2415 = vunpack.c.h.b16 %v2256
    %v2416 = vunpack.c.l.b16 %v2257
    %v2417 = vunpack.c.h.b16 %v2257
    %v2418 = vunpack.c.l.b16 %v2258
    %v2419 = vunpack.c.h.b16 %v2258
    %v2420 = vunpack.c.l.b16 %v2259
    %v2421 = vunpack.c.h.b16 %v2259
    %v2422 = vpack.c.b16 %v2320, %v2314
    %v2423 = vpack.c.b16 %v2321, %v2315
    %v2424 = vpack.c.b16 %v2322, %v2316
    %v2425 = vpack.c.b16 %v2323, %v2317
    %v2426 = vpack.c.b16 %v2324, %v2318
    %v2427 = vpack.c.b16 %v2325, %v2319
    %v2428 = vpack.c.b16 %v2332, %v2326
    %v2429 = vpack.c.b16 %v2333, %v2327
    %v2430 = vpack.c.b16 %v2334, %v2328
    %v2431 = vpack.c.b16 %v2335, %v2329
    %v2432 = vpack.c.b16 %v2336, %v2330
    %v2433 = vpack.c.b16 %v2337, %v2331
    %v2434 = vpack.c.b16 %v2344, %v2338
    %v2435 = vpack.c.b16 %v2345, %v2339
    %v2436 = vpack.c.b16 %v2346, %v2340
    %v2437 = vpack.c.b16 %v2347, %v2341
    %v2438 = vpack.c.b16 %v2348, %v2342
    %v2439 = vpack.c.b16 %v2349, %v2343
    %v2440 = vpack.c.b16 %v2356, %v2350
    %v2441 = vpack.c.b16 %v2357, %v2351
    %v2442 = vpack.c.b16 %v2358, %v2352
    %v2443 = vpack.c.b16 %v2359, %v2353
    %v2444 = vpack.c.b16 %v2360, %v2354
    %v2445 = vpack.c.b16 %v2361, %v2355
    %v2446 = vpack.c.b16 %v2368, %v2362
    %v2447 = vpack.c.b16 %v2369, %v2363
    %v2448 = vpack.c.b16 %v2370, %v2364
    %v2449 = vpack.c.b16 %v2371, %v2365
    %v2450 = vpack.c.b16 %v2372, %v2366
    %v2451 = vpack.c.b16 %v2373, %v2367
    %v2452 = vpack.c.b16 %v2380, %v2374
    %v2453 = vpack.c.b16 %v2381, %v2375
    %v2454 = vpack.c.b16 %v2382, %v2376
    %v2455 = vpack.c.b16 %v2383, %v2377
    %v2456 = vpack.c.b16 %v2384, %v2378
    %v2457 = vpack.c.b16 %v2385, %v2379
    %v2458 = vpack.c.b16 %v2392, %v2386
    %v2459 = vpack.c.b16 %v2393, %v2387
    %v2460 = vpack.c.b16 %v2394, %v2388
    %v2461 = vpack.c.b16 %v2395, %v2389
    %v2462 = vpack.c.b16 %v2396, %v2390
    %v2463 = vpack.c.b16 %v2397, %v2391
    %v2464 = vpack.c.b16 %v2404, %v2398
    %v2465 = vpack.c.b16 %v2405, %v2399
    %v2466 = vpack.c.b16 %v2406, %v2400
    %v2467 = vpack.c.b16 %v2407, %v2401
    %v2468 = vpack.c.b16 %v2408, %v2402
    %v2469 = vpack.c.b16 %v2409, %v2403
    %v2470 = vpack.c.b16 %v2416, %v2410
    %v2471 = vpack.c.b16 %v2417, %v2411
    %v2472 = vpack.c.b16 %v2418, %v2412
    %v2473 = vpack.c.b16 %v2419, %v2413
    %v2474 = vpack.c.b16 %v2420, %v2414
    %v2475 = vpack.c.b16 %v2421, %v2415
    %vm2530 = vcmask 130048
    %v2532 = vsel %vm2530, %v2203, 0
    %v2535 = vsel %vm2530, %v2205, 0
    %2537 = vmatprep.subr.bf16.mxu0 %v2423
    %2538 = vmatpush1.bf16.msra.mxu0 %v2422
    %2539 = vmatprep.subr.bf16.mxu0 %v2429
    %2540 = vmatpush1.bf16.msra.mxu0 %v2428
    %2541 = vmatprep.subr.bf16.mxu0 %v2435
    %2542 = vmatpush1.bf16.msra.mxu0 %v2434
    %2543 = vmatprep.subr.bf16.mxu0 %v2441
    %2544 = vmatpush1.bf16.msra.mxu0 %v2440
    %2545 = vmatprep.subr.bf16.mxu0 %v2447
    %2546 = vmatpush1.bf16.msra.mxu0 %v2446
    %2547 = vmatprep.subr.bf16.mxu0 %v2453
    %2548 = vmatpush1.bf16.msra.mxu0 %v2452
    %2549 = vmatprep.subr.bf16.mxu0 %v2459
    %2550 = vmatpush1.bf16.msra.mxu0 %v2458
    %2551 = vmatprep.subr.bf16.mxu0 %v2465
    %2552 = vmatpush1.bf16.msra.mxu0 %v2464
    %2553 = vmatprep.subr.bf16.mxu0 %v2471
    %2554 = vmatpush1.bf16.msra.mxu0 %v2470
    %2555 = vmatprep.subr.bf16.mxu0 0
    %2556 = vmatpush1.bf16.msra.mxu0 0
    %2557 = vmatprep.subr.bf16.mxu0 0
    %2558 = vmatpush1.bf16.msra.mxu0 0
    %2559 = vmatprep.subr.bf16.mxu0 0
    %2560 = vmatpush1.bf16.msra.mxu0 0
    %2561 = vmatprep.subr.bf16.mxu0 0
    %2562 = vmatpush1.bf16.msra.mxu0 0
    %2563 = vmatprep.subr.bf16.mxu0 0
    %2564 = vmatpush1.bf16.msra.mxu0 0
    %2565 = vmatprep.subr.bf16.mxu0 0
    %2566 = vmatpush1.bf16.msra.mxu0 0
    %2567 = vmatprep.subr.bf16.mxu0 0
    %2568 = vmatpush1.bf16.msra.mxu0 0
    %2569 = vmatprep.mubr.bf16.mxu0 %v2532
    %2570 = vmatmul.mubr.bf16.gmra.mrb[0].mxu0 %v2202
    %v2571 = vpop.f32.mrb[0].mxu0
    %v2572 = vadd.f32 0.0, %v2571
    %v2573 = vpop.f32.mrb[0].mxu0
    %v2574 = vadd.f32 0.0, %v2573
    %v2575 = vpop.f32.mrb[0].mxu0
    %v2576 = vadd.f32 0.0, %v2575
    %v2577 = vpop.f32.mrb[0].mxu0
    %v2578 = vadd.f32 0.0, %v2577
    %2579 = vmatprep.mubr.bf16.mxu0 %v2535
    %2580 = vmatmul.mubr.bf16.gmra.mrb[0].mxu0 %v2204
    %v2581 = vpop.f32.mrb[0].mxu0
    %v2582 = vadd.f32 0.0, %v2581
    %v2583 = vpop.f32.mrb[0].mxu0
    %v2584 = vadd.f32 0.0, %v2583
    %v2585 = vpop.f32.mrb[0].mxu0
    %v2586 = vadd.f32 0.0, %v2585
    %v2587 = vpop.f32.mrb[0].mxu0
    %v2588 = vadd.f32 0.0, %v2587
    %2589 = vdwg.mxu0
    %2590 = vmatprep.subr.bf16.mxu0 %v2425
    %2591 = vmatpush1.bf16.msra.mxu0 %v2424
    %2592 = vmatprep.subr.bf16.mxu0 %v2431
    %2593 = vmatpush1.bf16.msra.mxu0 %v2430
    %2594 = vmatprep.subr.bf16.mxu0 %v2437
    %2595 = vmatpush1.bf16.msra.mxu0 %v2436
    %2596 = vmatprep.subr.bf16.mxu0 %v2443
    %2597 = vmatpush1.bf16.msra.mxu0 %v2442
    %2598 = vmatprep.subr.bf16.mxu0 %v2449
    %2599 = vmatpush1.bf16.msra.mxu0 %v2448
    %2600 = vmatprep.subr.bf16.mxu0 %v2455
    %2601 = vmatpush1.bf16.msra.mxu0 %v2454
    %2602 = vmatprep.subr.bf16.mxu0 %v2461
    %2603 = vmatpush1.bf16.msra.mxu0 %v2460
    %2604 = vmatprep.subr.bf16.mxu0 %v2467
    %2605 = vmatpush1.bf16.msra.mxu0 %v2466
    %2606 = vmatprep.subr.bf16.mxu0 %v2473
    %2607 = vmatpush1.bf16.msra.mxu0 %v2472
    %2608 = vmatprep.subr.bf16.mxu0 0
    %2609 = vmatpush1.bf16.msra.mxu0 0
    %2610 = vmatprep.subr.bf16.mxu0 0
    %2611 = vmatpush1.bf16.msra.mxu0 0
    %2612 = vmatprep.subr.bf16.mxu0 0
    %2613 = vmatpush1.bf16.msra.mxu0 0
    %2614 = vmatprep.subr.bf16.mxu0 0
    %2615 = vmatpush1.bf16.msra.mxu0 0
    %2616 = vmatprep.subr.bf16.mxu0 0
    %2617 = vmatpush1.bf16.msra.mxu0 0
    %2618 = vmatprep.subr.bf16.mxu0 0
    %2619 = vmatpush1.bf16.msra.mxu0 0
    %2620 = vmatprep.subr.bf16.mxu0 0
    %2621 = vmatpush1.bf16.msra.mxu0 0
    %2622 = vmatprep.mubr.bf16.mxu0 %v2532
    %2623 = vmatmul.mubr.bf16.gmra.mrb[0].mxu0 %v2202
    %v2624 = vpop.f32.mrb[0].mxu0
    %v2625 = vadd.f32 0.0, %v2624
    %v2626 = vpop.f32.mrb[0].mxu0
    %v2627 = vadd.f32 0.0, %v2626
    %v2628 = vpop.f32.mrb[0].mxu0
    %v2629 = vadd.f32 0.0, %v2628
    %v2630 = vpop.f32.mrb[0].mxu0
    %v2631 = vadd.f32 0.0, %v2630
    %2632 = vmatprep.mubr.bf16.mxu0 %v2535
    %2633 = vmatmul.mubr.bf16.gmra.mrb[0].mxu0 %v2204
    %v2634 = vpop.f32.mrb[0].mxu0
    %v2635 = vadd.f32 0.0, %v2634
    %v2636 = vpop.f32.mrb[0].mxu0
    %v2637 = vadd.f32 0.0, %v2636
    %v2638 = vpop.f32.mrb[0].mxu0
    %v2639 = vadd.f32 0.0, %v2638
    %v2640 = vpop.f32.mrb[0].mxu0
    %v2641 = vadd.f32 0.0, %v2640
    %2642 = vdwg.mxu0
    %2643 = vmatprep.subr.bf16.mxu0 %v2427
    %2644 = vmatpush1.bf16.msra.mxu0 %v2426
    %2645 = vmatprep.subr.bf16.mxu0 %v2433
    %2646 = vmatpush1.bf16.msra.mxu0 %v2432
    %2647 = vmatprep.subr.bf16.mxu0 %v2439
    %2648 = vmatpush1.bf16.msra.mxu0 %v2438
    %2649 = vmatprep.subr.bf16.mxu0 %v2445
    %2650 = vmatpush1.bf16.msra.mxu0 %v2444
    %2651 = vmatprep.subr.bf16.mxu0 %v2451
    %2652 = vmatpush1.bf16.msra.mxu0 %v2450
    %2653 = vmatprep.subr.bf16.mxu0 %v2457
    %2654 = vmatpush1.bf16.msra.mxu0 %v2456
    %2655 = vmatprep.subr.bf16.mxu0 %v2463
    %2656 = vmatpush1.bf16.msra.mxu0 %v2462
    %2657 = vmatprep.subr.bf16.mxu0 %v2469
    %2658 = vmatpush1.bf16.msra.mxu0 %v2468
    %2659 = vmatprep.subr.bf16.mxu0 %v2475
    %2660 = vmatpush1.bf16.msra.mxu0 %v2474
    %2661 = vmatprep.subr.bf16.mxu0 0
    %2662 = vmatpush1.bf16.msra.mxu0 0
    %2663 = vmatprep.subr.bf16.mxu0 0
    %2664 = vmatpush1.bf16.msra.mxu0 0
    %2665 = vmatprep.subr.bf16.mxu0 0
    %2666 = vmatpush1.bf16.msra.mxu0 0
    %2667 = vmatprep.subr.bf16.mxu0 0
    %2668 = vmatpush1.bf16.msra.mxu0 0
    %2669 = vmatprep.subr.bf16.mxu0 0
    %2670 = vmatpush1.bf16.msra.mxu0 0
    %2671 = vmatprep.subr.bf16.mxu0 0
    %2672 = vmatpush1.bf16.msra.mxu0 0
    %2673 = vmatprep.subr.bf16.mxu0 0
    %2674 = vmatpush1.bf16.msra.mxu0 0
    %2675 = vmatprep.mubr.bf16.mxu0 %v2532
    %2676 = vmatmul.mubr.bf16.gmra.mrb[0].mxu0 %v2202
    %v2677 = vpop.f32.mrb[0].mxu0
    %v2678 = vadd.f32 0.0, %v2677
    %v2679 = vpop.f32.mrb[0].mxu0
    %v2680 = vadd.f32 0.0, %v2679
    %v2681 = vpop.f32.mrb[0].mxu0
    %v2682 = vadd.f32 0.0, %v2681
    %v2683 = vpop.f32.mrb[0].mxu0
    %v2684 = vadd.f32 0.0, %v2683
    %2685 = vmatprep.mubr.bf16.mxu0 %v2535
    %2686 = vmatmul.mubr.bf16.gmra.mrb[0].mxu0 %v2204
    %v2687 = vpop.f32.mrb[0].mxu0
    %v2688 = vadd.f32 0.0, %v2687
    %v2689 = vpop.f32.mrb[0].mxu0
    %v2690 = vadd.f32 0.0, %v2689
    %v2691 = vpop.f32.mrb[0].mxu0
    %v2692 = vadd.f32 0.0, %v2691
    %v2693 = vpop.f32.mrb[0].mxu0
    %v2694 = vadd.f32 0.0, %v2693
    %2695 = vdwg.mxu0
    %v2696 = vld [vmem:[%s7] sm:$0xff]
    %v2697 = vld [vmem:[%s7 + $0x8] sm:$0xf]
    %v2700 = vlaneseq
    %v2701 = vshrl.u32 %v2700, 7
    %v2702 = vsub.s32 0, %v2701
    %v2703 = vrot.slane %v2696, %v2702
    %v2704 = vlaneseq
    %v2705 = vshrl.u32 %v2704, 7
    %v2706 = vsub.s32 2, %v2705
    %v2707 = vrot.slane %v2696, %v2706
    %v2708 = vlaneseq
    %v2709 = vshrl.u32 %v2708, 7
    %v2710 = vsub.s32 4, %v2709
    %v2711 = vrot.slane %v2696, %v2710
    %v2712 = vlaneseq
    %v2713 = vshrl.u32 %v2712, 7
    %v2714 = vsub.s32 6, %v2713
    %v2715 = vrot.slane %v2696, %v2714
    %v2716 = vlaneseq
    %v2717 = vshrl.u32 %v2716, 7
    %v2718 = vsub.s32 0, %v2717
    %v2719 = vrot.slane %v2697, %v2718
    %v2720 = vlaneseq
    %v2721 = vshrl.u32 %v2720, 7
    %v2722 = vsub.s32 2, %v2721
    %v2723 = vrot.slane %v2697, %v2722
    %v2730 = vlaneseq
    %v2731 = vshrl.u32 %v2730, 7
    %v2732 = vsub.s32 0, %v2731
    %v2733 = vrot.slane %v2703, %v2732
    %v2734 = vlaneseq
    %v2735 = vshrl.u32 %v2734, 7
    %v2736 = vsub.s32 0, %v2735
    %v2737 = vrot.slane %v2707, %v2736
    %v2738 = vlaneseq
    %v2739 = vshrl.u32 %v2738, 7
    %v2740 = vsub.s32 0, %v2739
    %v2741 = vrot.slane %v2711, %v2740
    %v2742 = vlaneseq
    %v2743 = vshrl.u32 %v2742, 7
    %v2744 = vsub.s32 0, %v2743
    %v2745 = vrot.slane %v2715, %v2744
    %v2746 = vlaneseq
    %v2747 = vshrl.u32 %v2746, 7
    %v2748 = vsub.s32 0, %v2747
    %v2749 = vrot.slane %v2719, %v2748
    %v2750 = vlaneseq
    %v2751 = vshrl.u32 %v2750, 7
    %v2752 = vsub.s32 0, %v2751
    %v2753 = vrot.slane %v2723, %v2752
    %v2754 = vlaneseq
    %v2755 = vshrl.u32 %v2754, 7
    %v2756 = vsub.s32 1, %v2755
    %v2757 = vrot.slane %v2696, %v2756
    %v2758 = vlaneseq
    %v2759 = vshrl.u32 %v2758, 7
    %v2760 = vsub.s32 3, %v2759
    %v2761 = vrot.slane %v2696, %v2760
    %v2762 = vlaneseq
    %v2763 = vshrl.u32 %v2762, 7
    %v2764 = vsub.s32 5, %v2763
    %v2765 = vrot.slane %v2696, %v2764
    %v2766 = vlaneseq
    %v2767 = vshrl.u32 %v2766, 7
    %v2768 = vsub.s32 7, %v2767
    %v2769 = vrot.slane %v2696, %v2768
    %v2770 = vlaneseq
    %v2771 = vshrl.u32 %v2770, 7
    %v2772 = vsub.s32 1, %v2771
    %v2773 = vrot.slane %v2697, %v2772
    %v2774 = vlaneseq
    %v2775 = vshrl.u32 %v2774, 7
    %v2776 = vsub.s32 3, %v2775
    %v2777 = vrot.slane %v2697, %v2776
    %v2784 = vlaneseq
    %v2785 = vshrl.u32 %v2784, 7
    %v2786 = vsub.s32 1, %v2785
    %v2787 = vrot.slane %v2757, %v2786
    %v2788 = vlaneseq
    %v2789 = vshrl.u32 %v2788, 7
    %v2790 = vsub.s32 1, %v2789
    %v2791 = vrot.slane %v2761, %v2790
    %v2792 = vlaneseq
    %v2793 = vshrl.u32 %v2792, 7
    %v2794 = vsub.s32 1, %v2793
    %v2795 = vrot.slane %v2765, %v2794
    %v2796 = vlaneseq
    %v2797 = vshrl.u32 %v2796, 7
    %v2798 = vsub.s32 1, %v2797
    %v2799 = vrot.slane %v2769, %v2798
    %v2800 = vlaneseq
    %v2801 = vshrl.u32 %v2800, 7
    %v2802 = vsub.s32 1, %v2801
    %v2803 = vrot.slane %v2773, %v2802
    %v2804 = vlaneseq
    %v2805 = vshrl.u32 %v2804, 7
    %v2806 = vsub.s32 1, %v2805
    %v2807 = vrot.slane %v2777, %v2806
    %v2808 = vsel %vm333, %v2733, %v2787
    %v2809 = vsel %vm333, %v2737, %v2791
    %v2810 = vsel %vm333, %v2741, %v2795
    %v2811 = vsel %vm333, %v2745, %v2799
    %v2812 = vsel %vm333, %v2749, %v2803
    %v2813 = vsel %vm333, %v2753, %v2807
    %v2814 = vadd.f32 %v2572, %v2808
    %v2815 = vadd.f32 %v2574, %v2809
    %v2816 = vadd.f32 %v2625, %v2810
    %v2817 = vadd.f32 %v2627, %v2811
    %v2818 = vadd.f32 %v2678, %v2812
    %v2819 = vadd.f32 %v2680, %v2813
    %v2820 = vadd.f32 %v2576, %v2808
    %v2821 = vadd.f32 %v2578, %v2809
    %v2822 = vadd.f32 %v2629, %v2810
    %v2823 = vadd.f32 %v2631, %v2811
    %v2824 = vadd.f32 %v2682, %v2812
    %v2825 = vadd.f32 %v2684, %v2813
    %v2826 = vadd.f32 %v2582, %v2808
    %v2827 = vadd.f32 %v2584, %v2809
    %v2828 = vadd.f32 %v2635, %v2810
    %v2829 = vadd.f32 %v2637, %v2811
    %v2830 = vadd.f32 %v2688, %v2812
    %v2831 = vadd.f32 %v2690, %v2813
    %v2832 = vadd.f32 %v2586, %v2808
    %v2833 = vadd.f32 %v2588, %v2809
    %v2834 = vadd.f32 %v2639, %v2810
    %v2835 = vadd.f32 %v2641, %v2811
    %v2836 = vadd.f32 %v2692, %v2812
    %v2837 = vadd.f32 %v2694, %v2813
    %v2838 = vld [vmem:[#allocation7] sm:$0xff]
    %v2839 = vld [vmem:[#allocation7 + $0x8] sm:$0xff]
    %v2840 = vld [vmem:[#allocation7 + $0x10] sm:$0xff]
    %v2841 = vld [vmem:[#allocation7 + $0x18] sm:$0xff]
    %v2842 = vld [vmem:[#allocation7 + $0x20] sm:$0xff]
    %v2843 = vld [vmem:[#allocation7 + $0x28] sm:$0xff]
    %v2844 = vld [vmem:[#allocation7 + $0x30] sm:$0xff]
    %v2845 = vld [vmem:[#allocation7 + $0x38] sm:$0xff]
    %v2846 = vld [vmem:[#allocation7 + $0x40] sm:$0xff]
    %v2847 = vld [vmem:[#allocation7 + $0x48] sm:$0xff]
    %v2848 = vld [vmem:[#allocation7 + $0x50] sm:$0xff]
    %v2849 = vld [vmem:[#allocation7 + $0x58] sm:$0xff]
    %v2850 = vld [vmem:[#allocation7 + $0x60] sm:$0xff]
    %v2851 = vld [vmem:[#allocation7 + $0x68] sm:$0xff]
    %v2852 = vld [vmem:[#allocation7 + $0x70] sm:$0xff]
    %v2853 = vld [vmem:[#allocation7 + $0x78] sm:$0xff]
    %v2854 = vld [vmem:[#allocation7 + $0x80] sm:$0xff]
    %v2855 = vld [vmem:[#allocation7 + $0x88] sm:$0xff]
    %v2856 = vld [vmem:[#allocation7 + $0x90] sm:$0xff]
    %v2857 = vld [vmem:[#allocation7 + $0x98] sm:$0xff]
    %v2858 = vld [vmem:[#allocation7 + $0xa0] sm:$0xff]
    %v2859 = vld [vmem:[#allocation7 + $0xa8] sm:$0xff]
    %v2860 = vld [vmem:[#allocation7 + $0xb0] sm:$0xff]
    %v2861 = vld [vmem:[#allocation7 + $0xb8] sm:$0xff]
    %v2862 = vld [vmem:[#allocation7 + $0xc0] sm:$0xff]
    %v2863 = vld [vmem:[#allocation7 + $0xc8] sm:$0xff]
    %v2864 = vld [vmem:[#allocation7 + $0xd0] sm:$0xff]
    %v2865 = vld [vmem:[#allocation7 + $0xd8] sm:$0xff]
    %v2866 = vld [vmem:[#allocation7 + $0xe0] sm:$0xff]
    %v2867 = vld [vmem:[#allocation7 + $0xe8] sm:$0xff]
    %v2868 = vld [vmem:[#allocation7 + $0xf0] sm:$0xff]
    %v2869 = vld [vmem:[#allocation7 + $0xf8] sm:$0xff]
    %v2870 = vld [vmem:[#allocation7 + $0x100] sm:$0xff]
    %v2871 = vld [vmem:[#allocation7 + $0x108] sm:$0xff]
    %v2872 = vld [vmem:[#allocation7 + $0x110] sm:$0xff]
    %v2873 = vld [vmem:[#allocation7 + $0x118] sm:$0xff]
    %v2874 = vld [vmem:[#allocation7 + $0x120] sm:$0xff]
    %v2875 = vld [vmem:[#allocation7 + $0x128] sm:$0xff]
    %v2876 = vld [vmem:[#allocation7 + $0x130] sm:$0xff]
    %v2877 = vld [vmem:[#allocation7 + $0x138] sm:$0xff]
    %v2878 = vld [vmem:[#allocation7 + $0x140] sm:$0xff]
    %v2879 = vld [vmem:[#allocation7 + $0x148] sm:$0xff]
    %v2880 = vld [vmem:[#allocation7 + $0x150] sm:$0xff]
    %v2881 = vld [vmem:[#allocation7 + $0x158] sm:$0xff]
    %v2882 = vld [vmem:[#allocation7 + $0x160] sm:$0xff]
    %v2883 = vld [vmem:[#allocation7 + $0x168] sm:$0xff]
    %v2884 = vld [vmem:[#allocation7 + $0x170] sm:$0xff]
    %v2885 = vld [vmem:[#allocation7 + $0x178] sm:$0xff]
    %v2886 = vld [vmem:[#allocation7 + $0x180] sm:$0xff]
    %v2887 = vld [vmem:[#allocation7 + $0x188] sm:$0xff]
    %v2888 = vld [vmem:[#allocation7 + $0x190] sm:$0xff]
    %v2889 = vld [vmem:[#allocation7 + $0x198] sm:$0xff]
    %v2890 = vld [vmem:[#allocation7 + $0x1a0] sm:$0xff]
    %v2891 = vld [vmem:[#allocation7 + $0x1a8] sm:$0xff]
    %v2892 = vld [vmem:[#allocation7 + $0x1b0] sm:$0xff]
    %v2893 = vld [vmem:[#allocation7 + $0x1b8] sm:$0xff]
    %v2894 = vld [vmem:[#allocation7 + $0x1c0] sm:$0xff]
    %v2895 = vld [vmem:[#allocation7 + $0x1c8] sm:$0xff]
    %v2896 = vld [vmem:[#allocation7 + $0x1d0] sm:$0xff]
    %v2897 = vld [vmem:[#allocation7 + $0x1d8] sm:$0xff]
    %v2898 = vld [vmem:[#allocation7 + $0x1e0] sm:$0xff]
    %v2899 = vld [vmem:[#allocation7 + $0x1e8] sm:$0xff]
    %v2900 = vld [vmem:[#allocation7 + $0x1f0] sm:$0xff]
    %v2901 = vld [vmem:[#allocation7 + $0x1f8] sm:$0xff]
    %v2966 = vunpack.c.l.b16 %v2838
    %v2967 = vunpack.c.h.b16 %v2838
    %v2968 = vunpack.c.l.b16 %v2839
    %v2969 = vunpack.c.h.b16 %v2839
    %v2970 = vunpack.c.l.b16 %v2840
    %v2971 = vunpack.c.h.b16 %v2840
    %v2972 = vunpack.c.l.b16 %v2841
    %v2973 = vunpack.c.h.b16 %v2841
    %v2974 = vunpack.c.l.b16 %v2842
    %v2975 = vunpack.c.h.b16 %v2842
    %v2976 = vunpack.c.l.b16 %v2843
    %v2977 = vunpack.c.h.b16 %v2843
    %v2978 = vunpack.c.l.b16 %v2844
    %v2979 = vunpack.c.h.b16 %v2844
    %v2980 = vunpack.c.l.b16 %v2845
    %v2981 = vunpack.c.h.b16 %v2845
    %v2982 = vunpack.c.l.b16 %v2846
    %v2983 = vunpack.c.h.b16 %v2846
    %v2984 = vunpack.c.l.b16 %v2847
    %v2985 = vunpack.c.h.b16 %v2847
    %v2986 = vunpack.c.l.b16 %v2848
    %v2987 = vunpack.c.h.b16 %v2848
    %v2988 = vunpack.c.l.b16 %v2849
    %v2989 = vunpack.c.h.b16 %v2849
    %v2990 = vunpack.c.l.b16 %v2850
    %v2991 = vunpack.c.h.b16 %v2850
    %v2992 = vunpack.c.l.b16 %v2851
    %v2993 = vunpack.c.h.b16 %v2851
    %v2994 = vunpack.c.l.b16 %v2852
    %v2995 = vunpack.c.h.b16 %v2852
    %v2996 = vunpack.c.l.b16 %v2853
    %v2997 = vunpack.c.h.b16 %v2853
    %v2998 = vunpack.c.l.b16 %v2854
    %v2999 = vunpack.c.h.b16 %v2854
    %v3000 = vunpack.c.l.b16 %v2855
    %v3001 = vunpack.c.h.b16 %v2855
    %v3002 = vunpack.c.l.b16 %v2856
    %v3003 = vunpack.c.h.b16 %v2856
    %v3004 = vunpack.c.l.b16 %v2857
    %v3005 = vunpack.c.h.b16 %v2857
    %v3006 = vunpack.c.l.b16 %v2858
    %v3007 = vunpack.c.h.b16 %v2858
    %v3008 = vunpack.c.l.b16 %v2859
    %v3009 = vunpack.c.h.b16 %v2859
    %v3010 = vunpack.c.l.b16 %v2860
    %v3011 = vunpack.c.h.b16 %v2860
    %v3012 = vunpack.c.l.b16 %v2861
    %v3013 = vunpack.c.h.b16 %v2861
    %v3014 = vunpack.c.l.b16 %v2862
    %v3015 = vunpack.c.h.b16 %v2862
    %v3016 = vunpack.c.l.b16 %v2863
    %v3017 = vunpack.c.h.b16 %v2863
    %v3018 = vunpack.c.l.b16 %v2864
    %v3019 = vunpack.c.h.b16 %v2864
    %v3020 = vunpack.c.l.b16 %v2865
    %v3021 = vunpack.c.h.b16 %v2865
    %v3022 = vunpack.c.l.b16 %v2866
    %v3023 = vunpack.c.h.b16 %v2866
    %v3024 = vunpack.c.l.b16 %v2867
    %v3025 = vunpack.c.h.b16 %v2867
    %v3026 = vunpack.c.l.b16 %v2868
    %v3027 = vunpack.c.h.b16 %v2868
    %v3028 = vunpack.c.l.b16 %v2869
    %v3029 = vunpack.c.h.b16 %v2869
    %v3030 = vunpack.c.l.b16 %v2870
    %v3031 = vunpack.c.h.b16 %v2870
    %v3032 = vunpack.c.l.b16 %v2871
    %v3033 = vunpack.c.h.b16 %v2871
    %v3034 = vunpack.c.l.b16 %v2872
    %v3035 = vunpack.c.h.b16 %v2872
    %v3036 = vunpack.c.l.b16 %v2873
    %v3037 = vunpack.c.h.b16 %v2873
    %v3038 = vunpack.c.l.b16 %v2874
    %v3039 = vunpack.c.h.b16 %v2874
    %v3040 = vunpack.c.l.b16 %v2875
    %v3041 = vunpack.c.h.b16 %v2875
    %v3042 = vunpack.c.l.b16 %v2876
    %v3043 = vunpack.c.h.b16 %v2876
    %v3044 = vunpack.c.l.b16 %v2877
    %v3045 = vunpack.c.h.b16 %v2877
    %v3046 = vunpack.c.l.b16 %v2878
    %v3047 = vunpack.c.h.b16 %v2878
    %v3048 = vunpack.c.l.b16 %v2879
    %v3049 = vunpack.c.h.b16 %v2879
    %v3050 = vunpack.c.l.b16 %v2880
    %v3051 = vunpack.c.h.b16 %v2880
    %v3052 = vunpack.c.l.b16 %v2881
    %v3053 = vunpack.c.h.b16 %v2881
    %v3054 = vunpack.c.l.b16 %v2882
    %v3055 = vunpack.c.h.b16 %v2882
    %v3056 = vunpack.c.l.b16 %v2883
    %v3057 = vunpack.c.h.b16 %v2883
    %v3058 = vunpack.c.l.b16 %v2884
    %v3059 = vunpack.c.h.b16 %v2884
    %v3060 = vunpack.c.l.b16 %v2885
    %v3061 = vunpack.c.h.b16 %v2885
    %v3062 = vunpack.c.l.b16 %v2886
    %v3063 = vunpack.c.h.b16 %v2886
    %v3064 = vunpack.c.l.b16 %v2887
    %v3065 = vunpack.c.h.b16 %v2887
    %v3066 = vunpack.c.l.b16 %v2888
    %v3067 = vunpack.c.h.b16 %v2888
    %v3068 = vunpack.c.l.b16 %v2889
    %v3069 = vunpack.c.h.b16 %v2889
    %v3070 = vunpack.c.l.b16 %v2890
    %v3071 = vunpack.c.h.b16 %v2890
    %v3072 = vunpack.c.l.b16 %v2891
    %v3073 = vunpack.c.h.b16 %v2891
    %v3074 = vunpack.c.l.b16 %v2892
    %v3075 = vunpack.c.h.b16 %v2892
    %v3076 = vunpack.c.l.b16 %v2893
    %v3077 = vunpack.c.h.b16 %v2893
    %v3078 = vunpack.c.l.b16 %v2894
    %v3079 = vunpack.c.h.b16 %v2894
    %v3080 = vunpack.c.l.b16 %v2895
    %v3081 = vunpack.c.h.b16 %v2895
    %v3082 = vunpack.c.l.b16 %v2896
    %v3083 = vunpack.c.h.b16 %v2896
    %v3084 = vunpack.c.l.b16 %v2897
    %v3085 = vunpack.c.h.b16 %v2897
    %v3086 = vunpack.c.l.b16 %v2898
    %v3087 = vunpack.c.h.b16 %v2898
    %v3088 = vunpack.c.l.b16 %v2899
    %v3089 = vunpack.c.h.b16 %v2899
    %v3090 = vunpack.c.l.b16 %v2900
    %v3091 = vunpack.c.h.b16 %v2900
    %v3092 = vunpack.c.l.b16 %v2901
    %v3093 = vunpack.c.h.b16 %v2901
    %v3094 = vpack.c.b16 %v2974, %v2966
    %v3095 = vpack.c.b16 %v2975, %v2967
    %v3096 = vpack.c.b16 %v2976, %v2968
    %v3097 = vpack.c.b16 %v2977, %v2969
    %v3098 = vpack.c.b16 %v2978, %v2970
    %v3099 = vpack.c.b16 %v2979, %v2971
    %v3100 = vpack.c.b16 %v2980, %v2972
    %v3101 = vpack.c.b16 %v2981, %v2973
    %v3102 = vpack.c.b16 %v2990, %v2982
    %v3103 = vpack.c.b16 %v2991, %v2983
    %v3104 = vpack.c.b16 %v2992, %v2984
    %v3105 = vpack.c.b16 %v2993, %v2985
    %v3106 = vpack.c.b16 %v2994, %v2986
    %v3107 = vpack.c.b16 %v2995, %v2987
    %v3108 = vpack.c.b16 %v2996, %v2988
    %v3109 = vpack.c.b16 %v2997, %v2989
    %v3110 = vpack.c.b16 %v3006, %v2998
    %v3111 = vpack.c.b16 %v3007, %v2999
    %v3112 = vpack.c.b16 %v3008, %v3000
    %v3113 = vpack.c.b16 %v3009, %v3001
    %v3114 = vpack.c.b16 %v3010, %v3002
    %v3115 = vpack.c.b16 %v3011, %v3003
    %v3116 = vpack.c.b16 %v3012, %v3004
    %v3117 = vpack.c.b16 %v3013, %v3005
    %v3118 = vpack.c.b16 %v3022, %v3014
    %v3119 = vpack.c.b16 %v3023, %v3015
    %v3120 = vpack.c.b16 %v3024, %v3016
    %v3121 = vpack.c.b16 %v3025, %v3017
    %v3122 = vpack.c.b16 %v3026, %v3018
    %v3123 = vpack.c.b16 %v3027, %v3019
    %v3124 = vpack.c.b16 %v3028, %v3020
    %v3125 = vpack.c.b16 %v3029, %v3021
    %v3126 = vpack.c.b16 %v3038, %v3030
    %v3127 = vpack.c.b16 %v3039, %v3031
    %v3128 = vpack.c.b16 %v3040, %v3032
    %v3129 = vpack.c.b16 %v3041, %v3033
    %v3130 = vpack.c.b16 %v3042, %v3034
    %v3131 = vpack.c.b16 %v3043, %v3035
    %v3132 = vpack.c.b16 %v3044, %v3036
    %v3133 = vpack.c.b16 %v3045, %v3037
    %v3134 = vpack.c.b16 %v3054, %v3046
    %v3135 = vpack.c.b16 %v3055, %v3047
    %v3136 = vpack.c.b16 %v3056, %v3048
    %v3137 = vpack.c.b16 %v3057, %v3049
    %v3138 = vpack.c.b16 %v3058, %v3050
    %v3139 = vpack.c.b16 %v3059, %v3051
    %v3140 = vpack.c.b16 %v3060, %v3052
    %v3141 = vpack.c.b16 %v3061, %v3053
    %v3142 = vpack.c.b16 %v3070, %v3062
    %v3143 = vpack.c.b16 %v3071, %v3063
    %v3144 = vpack.c.b16 %v3072, %v3064
    %v3145 = vpack.c.b16 %v3073, %v3065
    %v3146 = vpack.c.b16 %v3074, %v3066
    %v3147 = vpack.c.b16 %v3075, %v3067
    %v3148 = vpack.c.b16 %v3076, %v3068
    %v3149 = vpack.c.b16 %v3077, %v3069
    %v3150 = vpack.c.b16 %v3086, %v3078
    %v3151 = vpack.c.b16 %v3087, %v3079
    %v3152 = vpack.c.b16 %v3088, %v3080
    %v3153 = vpack.c.b16 %v3089, %v3081
    %v3154 = vpack.c.b16 %v3090, %v3082
    %v3155 = vpack.c.b16 %v3091, %v3083
    %v3156 = vpack.c.b16 %v3092, %v3084
    %v3157 = vpack.c.b16 %v3093, %v3085
    %3222 = vmatprep.subr.bf16.mxu0 %v3095
    %3223 = vmatpush1.bf16.msra.mxu0 %v3094
    %3224 = vmatprep.subr.bf16.mxu0 %v3103
    %3225 = vmatpush1.bf16.msra.mxu0 %v3102
    %3226 = vmatprep.subr.bf16.mxu0 %v3111
    %3227 = vmatpush1.bf16.msra.mxu0 %v3110
    %3228 = vmatprep.subr.bf16.mxu0 %v3119
    %3229 = vmatpush1.bf16.msra.mxu0 %v3118
    %3230 = vmatprep.subr.bf16.mxu0 %v3127
    %3231 = vmatpush1.bf16.msra.mxu0 %v3126
    %3232 = vmatprep.subr.bf16.mxu0 %v3135
    %3233 = vmatpush1.bf16.msra.mxu0 %v3134
    %3234 = vmatprep.subr.bf16.mxu0 %v3143
    %3235 = vmatpush1.bf16.msra.mxu0 %v3142
    %3236 = vmatprep.subr.bf16.mxu0 %v3151
    %3237 = vmatpush1.bf16.msra.mxu0 %v3150
    %3238 = vmatprep.subr.bf16.mxu0 0
    %3239 = vmatpush1.bf16.msra.mxu0 0
    %3240 = vmatprep.subr.bf16.mxu0 0
    %3241 = vmatpush1.bf16.msra.mxu0 0
    %3242 = vmatprep.subr.bf16.mxu0 0
    %3243 = vmatpush1.bf16.msra.mxu0 0
    %3244 = vmatprep.subr.bf16.mxu0 0
    %3245 = vmatpush1.bf16.msra.mxu0 0
    %3246 = vmatprep.subr.bf16.mxu0 0
    %3247 = vmatpush1.bf16.msra.mxu0 0
    %3248 = vmatprep.subr.bf16.mxu0 0
    %3249 = vmatpush1.bf16.msra.mxu0 0
    %3250 = vmatprep.subr.bf16.mxu0 0
    %3251 = vmatpush1.bf16.msra.mxu0 0
    %3252 = vmatprep.subr.bf16.mxu0 0
    %3253 = vmatpush1.bf16.msra.mxu0 0
    %3254 = vmatprep.mubr.bf16.mxu0 0
    %3255 = vmatmul.mubr.bf16.gmra.mrb[0].mxu0 0
    %v3256 = vpop.f32.mrb[0].mxu0
    %v3257 = vadd.f32 0.0, %v3256
    %v3258 = vpop.f32.mrb[0].mxu0
    %v3259 = vadd.f32 0.0, %v3258
    %v3260 = vpop.f32.mrb[0].mxu0
    %v3261 = vpop.f32.mrb[0].mxu0
    %3262 = vdwg.mxu0
    %3263 = vmatprep.subr.bf16.mxu0 %v3097
    %3264 = vmatpush1.bf16.msra.mxu0 %v3096
    %3265 = vmatprep.subr.bf16.mxu0 %v3105
    %3266 = vmatpush1.bf16.msra.mxu0 %v3104
    %3267 = vmatprep.subr.bf16.mxu0 %v3113
    %3268 = vmatpush1.bf16.msra.mxu0 %v3112
    %3269 = vmatprep.subr.bf16.mxu0 %v3121
    %3270 = vmatpush1.bf16.msra.mxu0 %v3120
    %3271 = vmatprep.subr.bf16.mxu0 %v3129
    %3272 = vmatpush1.bf16.msra.mxu0 %v3128
    %3273 = vmatprep.subr.bf16.mxu0 %v3137
    %3274 = vmatpush1.bf16.msra.mxu0 %v3136
    %3275 = vmatprep.subr.bf16.mxu0 %v3145
    %3276 = vmatpush1.bf16.msra.mxu0 %v3144
    %3277 = vmatprep.subr.bf16.mxu0 %v3153
    %3278 = vmatpush1.bf16.msra.mxu0 %v3152
    %3279 = vmatprep.subr.bf16.mxu0 0
    %3280 = vmatpush1.bf16.msra.mxu0 0
    %3281 = vmatprep.subr.bf16.mxu0 0
    %3282 = vmatpush1.bf16.msra.mxu0 0
    %3283 = vmatprep.subr.bf16.mxu0 0
    %3284 = vmatpush1.bf16.msra.mxu0 0
    %3285 = vmatprep.subr.bf16.mxu0 0
    %3286 = vmatpush1.bf16.msra.mxu0 0
    %3287 = vmatprep.subr.bf16.mxu0 0
    %3288 = vmatpush1.bf16.msra.mxu0 0
    %3289 = vmatprep.subr.bf16.mxu0 0
    %3290 = vmatpush1.bf16.msra.mxu0 0
    %3291 = vmatprep.subr.bf16.mxu0 0
    %3292 = vmatpush1.bf16.msra.mxu0 0
    %3293 = vmatprep.subr.bf16.mxu0 0
    %3294 = vmatpush1.bf16.msra.mxu0 0
    %3295 = vmatprep.mubr.bf16.mxu0 0
    %3296 = vmatmul.mubr.bf16.gmra.mrb[0].mxu0 0
    %v3297 = vpop.f32.mrb[0].mxu0
    %v3298 = vadd.f32 0.0, %v3297
    %v3299 = vpop.f32.mrb[0].mxu0
    %v3300 = vadd.f32 0.0, %v3299
    %v3301 = vpop.f32.mrb[0].mxu0
    %v3302 = vpop.f32.mrb[0].mxu0
    %3303 = vdwg.mxu0
    %3304 = vmatprep.subr.bf16.mxu0 %v3099
    %3305 = vmatpush1.bf16.msra.mxu0 %v3098
    %3306 = vmatprep.subr.bf16.mxu0 %v3107
    %3307 = vmatpush1.bf16.msra.mxu0 %v3106
    %3308 = vmatprep.subr.bf16.mxu0 %v3115
    %3309 = vmatpush1.bf16.msra.mxu0 %v3114
    %3310 = vmatprep.subr.bf16.mxu0 %v3123
    %3311 = vmatpush1.bf16.msra.mxu0 %v3122
    %3312 = vmatprep.subr.bf16.mxu0 %v3131
    %3313 = vmatpush1.bf16.msra.mxu0 %v3130
    %3314 = vmatprep.subr.bf16.mxu0 %v3139
    %3315 = vmatpush1.bf16.msra.mxu0 %v3138
    %3316 = vmatprep.subr.bf16.mxu0 %v3147
    %3317 = vmatpush1.bf16.msra.mxu0 %v3146
    %3318 = vmatprep.subr.bf16.mxu0 %v3155
    %3319 = vmatpush1.bf16.msra.mxu0 %v3154
    %3320 = vmatprep.subr.bf16.mxu0 0
    %3321 = vmatpush1.bf16.msra.mxu0 0
    %3322 = vmatprep.subr.bf16.mxu0 0
    %3323 = vmatpush1.bf16.msra.mxu0 0
    %3324 = vmatprep.subr.bf16.mxu0 0
    %3325 = vmatpush1.bf16.msra.mxu0 0
    %3326 = vmatprep.subr.bf16.mxu0 0
    %3327 = vmatpush1.bf16.msra.mxu0 0
    %3328 = vmatprep.subr.bf16.mxu0 0
    %3329 = vmatpush1.bf16.msra.mxu0 0
    %3330 = vmatprep.subr.bf16.mxu0 0
    %3331 = vmatpush1.bf16.msra.mxu0 0
    %3332 = vmatprep.subr.bf16.mxu0 0
    %3333 = vmatpush1.bf16.msra.mxu0 0
    %3334 = vmatprep.subr.bf16.mxu0 0
    %3335 = vmatpush1.bf16.msra.mxu0 0
    %3336 = vmatprep.mubr.bf16.mxu0 0
    %3337 = vmatmul.mubr.bf16.gmra.mrb[0].mxu0 0
    %v3338 = vpop.f32.mrb[0].mxu0
    %v3339 = vadd.f32 0.0, %v3338
    %v3340 = vpop.f32.mrb[0].mxu0
    %v3341 = vadd.f32 0.0, %v3340
    %v3342 = vpop.f32.mrb[0].mxu0
    %v3343 = vpop.f32.mrb[0].mxu0
    %3344 = vdwg.mxu0
    %3345 = vmatprep.subr.bf16.mxu0 %v3101
    %3346 = vmatpush1.bf16.msra.mxu0 %v3100
    %3347 = vmatprep.subr.bf16.mxu0 %v3109
    %3348 = vmatpush1.bf16.msra.mxu0 %v3108
    %3349 = vmatprep.subr.bf16.mxu0 %v3117
    %3350 = vmatpush1.bf16.msra.mxu0 %v3116
    %3351 = vmatprep.subr.bf16.mxu0 %v3125
    %3352 = vmatpush1.bf16.msra.mxu0 %v3124
    %3353 = vmatprep.subr.bf16.mxu0 %v3133
    %3354 = vmatpush1.bf16.msra.mxu0 %v3132
    %3355 = vmatprep.subr.bf16.mxu0 %v3141
    %3356 = vmatpush1.bf16.msra.mxu0 %v3140
    %3357 = vmatprep.subr.bf16.mxu0 %v3149
    %3358 = vmatpush1.bf16.msra.mxu0 %v3148
    %3359 = vmatprep.subr.bf16.mxu0 %v3157
    %3360 = vmatpush1.bf16.msra.mxu0 %v3156
    %3361 = vmatprep.subr.bf16.mxu0 0
    %3362 = vmatpush1.bf16.msra.mxu0 0
    %3363 = vmatprep.subr.bf16.mxu0 0
    %3364 = vmatpush1.bf16.msra.mxu0 0
    %3365 = vmatprep.subr.bf16.mxu0 0
    %3366 = vmatpush1.bf16.msra.mxu0 0
    %3367 = vmatprep.subr.bf16.mxu0 0
    %3368 = vmatpush1.bf16.msra.mxu0 0
    %3369 = vmatprep.subr.bf16.mxu0 0
    %3370 = vmatpush1.bf16.msra.mxu0 0
    %3371 = vmatprep.subr.bf16.mxu0 0
    %3372 = vmatpush1.bf16.msra.mxu0 0
    %3373 = vmatprep.subr.bf16.mxu0 0
    %3374 = vmatpush1.bf16.msra.mxu0 0
    %3375 = vmatprep.subr.bf16.mxu0 0
    %3376 = vmatpush1.bf16.msra.mxu0 0
    %3377 = vmatprep.mubr.bf16.mxu0 0
    %3378 = vmatmul.mubr.bf16.gmra.mrb[0].mxu0 0
    %v3379 = vpop.f32.mrb[0].mxu0
    %v3380 = vadd.f32 0.0, %v3379
    %v3381 = vpop.f32.mrb[0].mxu0
    %v3382 = vadd.f32 0.0, %v3381
    %v3383 = vpop.f32.mrb[0].mxu0
    %v3384 = vpop.f32.mrb[0].mxu0
    %3385 = vdwg.mxu0
    %v3386 = vsel %vm198, %v3257, %v3339
    %v3387 = vsel %vm198, %v3259, %v3341
    %v3388 = vsel %vm198, %v3298, %v3380
    %v3389 = vsel %vm198, %v3300, %v3382
    %v3390 = vadd.f32 %v2814, %v3386
    %v3391 = vadd.f32 %v2815, %v3387
    %v3392 = vadd.f32 %v2816, %v3388
    %v3393 = vadd.f32 %v2817, %v3389
    %v3394 = vxor.u32 %v3390, 2147483648
    %v3395 = vmul.f32 %v3394, 1.442695
    %v3396 = vpow.pop %v3395
    %v3397 = vadd.f32 %v3396, 1.0
    %v3398 = vrcp.pop %v3397
    %v3399 = vmul.f32 1.0, %v3398
    %v3400 = vtanh.pop %v3391
    %v3401 = vxor.u32 %v3392, 2147483648
    %v3402 = vmul.f32 %v3401, 1.442695
    %v3403 = vpow.pop %v3402
    %v3404 = vadd.f32 %v3403, 1.0
    %v3405 = vrcp.pop %v3404
    %v3406 = vmul.f32 1.0, %v3405
    %v3407 = vxor.u32 %v3393, 2147483648
    %v3408 = vmul.f32 %v3407, 1.442695
    %v3409 = vpow.pop %v3408
    %v3410 = vadd.f32 %v3409, 1.0
    %v3411 = vrcp.pop %v3410
    %v3412 = vmul.f32 1.0, %v3411
    %v3413 = vmul.f32 %v2819, %v2818
    %v3414 = vmul.f32 %v3412, %v3413
    %v3415 = vsub.f32 %v2819, %v3413
    %v3416 = vadd.f32 %v3414, %v3415
    %v3417 = vmul.f32 %v3406, %v3413
    %v3418 = vsub.f32 %v2818, %v3413
    %v3419 = vadd.f32 %v3417, %v3418
    %v3420 = vmul.f32 %v3416, 0.0
    %v3421 = vmul.f32 %v3419, %v3400
    %v3422 = vadd.f32 %v3420, %v3421
    %v3423 = vtanh.pop %v3422
    %v3424 = vmul.f32 %v3399, %v3423
    %v3425 = vpack.c.bf16 %v3424, %v3424
    %3426 = vmatprep.subr.bf16.mxu0 %v3095
    %3427 = vmatpush1.bf16.msra.mxu0 %v3094
    %3428 = vmatprep.subr.bf16.mxu0 %v3103
    %3429 = vmatpush1.bf16.msra.mxu0 %v3102
    %3430 = vmatprep.subr.bf16.mxu0 %v3111
    %3431 = vmatpush1.bf16.msra.mxu0 %v3110
    %3432 = vmatprep.subr.bf16.mxu0 %v3119
    %3433 = vmatpush1.bf16.msra.mxu0 %v3118
    %3434 = vmatprep.subr.bf16.mxu0 %v3127
    %3435 = vmatpush1.bf16.msra.mxu0 %v3126
    %3436 = vmatprep.subr.bf16.mxu0 %v3135
    %3437 = vmatpush1.bf16.msra.mxu0 %v3134
    %3438 = vmatprep.subr.bf16.mxu0 %v3143
    %3439 = vmatpush1.bf16.msra.mxu0 %v3142
    %3440 = vmatprep.subr.bf16.mxu0 %v3151
    %3441 = vmatpush1.bf16.msra.mxu0 %v3150
    %3442 = vmatprep.subr.bf16.mxu0 0
    %3443 = vmatpush1.bf16.msra.mxu0 0
    %3444 = vmatprep.subr.bf16.mxu0 0
    %3445 = vmatpush1.bf16.msra.mxu0 0
    %3446 = vmatprep.subr.bf16.mxu0 0
    %3447 = vmatpush1.bf16.msra.mxu0 0
    %3448 = vmatprep.subr.bf16.mxu0 0
    %3449 = vmatpush1.bf16.msra.mxu0 0
    %3450 = vmatprep.subr.bf16.mxu0 0
    %3451 = vmatpush1.bf16.msra.mxu0 0
    %3452 = vmatprep.subr.bf16.mxu0 0
    %3453 = vmatpush1.bf16.msra.mxu0 0
    %3454 = vmatprep.subr.bf16.mxu0 0
    %3455 = vmatpush1.bf16.msra.mxu0 0
    %3456 = vmatprep.subr.bf16.mxu0 0
    %3457 = vmatpush1.bf16.msra.mxu0 0
    %3458 = vmatprep.mubr.bf16.mxu0 0
    %3459 = vmatmul.mubr.bf16.gmra.mrb[0].mxu0 %v3425
    %v3460 = vpop.f32.mrb[0].mxu0
    %v3461 = vadd.f32 0.0, %v3460
    %v3462 = vpop.f32.mrb[0].mxu0
    %v3463 = vadd.f32 0.0, %v3462
    %v3464 = vpop.f32.mrb[0].mxu0
    %v3465 = vpop.f32.mrb[0].mxu0
    %3466 = vdwg.mxu0
    %3467 = vmatprep.subr.bf16.mxu0 %v3097
    %3468 = vmatpush1.bf16.msra.mxu0 %v3096
    %3469 = vmatprep.subr.bf16.mxu0 %v3105
    %3470 = vmatpush1.bf16.msra.mxu0 %v3104
    %3471 = vmatprep.subr.bf16.mxu0 %v3113
    %3472 = vmatpush1.bf16.msra.mxu0 %v3112
    %3473 = vmatprep.subr.bf16.mxu0 %v3121
    %3474 = vmatpush1.bf16.msra.mxu0 %v3120
    %3475 = vmatprep.subr.bf16.mxu0 %v3129
    %3476 = vmatpush1.bf16.msra.mxu0 %v3128
    %3477 = vmatprep.subr.bf16.mxu0 %v3137
    %3478 = vmatpush1.bf16.msra.mxu0 %v3136
    %3479 = vmatprep.subr.bf16.mxu0 %v3145
    %3480 = vmatpush1.bf16.msra.mxu0 %v3144
    %3481 = vmatprep.subr.bf16.mxu0 %v3153
    %3482 = vmatpush1.bf16.msra.mxu0 %v3152
    %3483 = vmatprep.subr.bf16.mxu0 0
    %3484 = vmatpush1.bf16.msra.mxu0 0
    %3485 = vmatprep.subr.bf16.mxu0 0
    %3486 = vmatpush1.bf16.msra.mxu0 0
    %3487 = vmatprep.subr.bf16.mxu0 0
    %3488 = vmatpush1.bf16.msra.mxu0 0
    %3489 = vmatprep.subr.bf16.mxu0 0
    %3490 = vmatpush1.bf16.msra.mxu0 0
    %3491 = vmatprep.subr.bf16.mxu0 0
    %3492 = vmatpush1.bf16.msra.mxu0 0
    %3493 = vmatprep.subr.bf16.mxu0 0
    %3494 = vmatpush1.bf16.msra.mxu0 0
    %3495 = vmatprep.subr.bf16.mxu0 0
    %3496 = vmatpush1.bf16.msra.mxu0 0
    %3497 = vmatprep.subr.bf16.mxu0 0
    %3498 = vmatpush1.bf16.msra.mxu0 0
    %3499 = vmatprep.mubr.bf16.mxu0 0
    %3500 = vmatmul.mubr.bf16.gmra.mrb[0].mxu0 %v3425
    %v3501 = vpop.f32.mrb[0].mxu0
    %v3502 = vadd.f32 0.0, %v3501
    %v3503 = vpop.f32.mrb[0].mxu0
    %v3504 = vadd.f32 0.0, %v3503
    %v3505 = vpop.f32.mrb[0].mxu0
    %v3506 = vpop.f32.mrb[0].mxu0
    %3507 = vdwg.mxu0
    %3508 = vmatprep.subr.bf16.mxu0 %v3099
    %3509 = vmatpush1.bf16.msra.mxu0 %v3098
    %3510 = vmatprep.subr.bf16.mxu0 %v3107
    %3511 = vmatpush1.bf16.msra.mxu0 %v3106
    %3512 = vmatprep.subr.bf16.mxu0 %v3115
    %3513 = vmatpush1.bf16.msra.mxu0 %v3114
    %3514 = vmatprep.subr.bf16.mxu0 %v3123
    %3515 = vmatpush1.bf16.msra.mxu0 %v3122
    %3516 = vmatprep.subr.bf16.mxu0 %v3131
    %3517 = vmatpush1.bf16.msra.mxu0 %v3130
    %3518 = vmatprep.subr.bf16.mxu0 %v3139
    %3519 = vmatpush1.bf16.msra.mxu0 %v3138
    %3520 = vmatprep.subr.bf16.mxu0 %v3147
    %3521 = vmatpush1.bf16.msra.mxu0 %v3146
    %3522 = vmatprep.subr.bf16.mxu0 %v3155
    %3523 = vmatpush1.bf16.msra.mxu0 %v3154
    %3524 = vmatprep.subr.bf16.mxu0 0
    %3525 = vmatpush1.bf16.msra.mxu0 0
    %3526 = vmatprep.subr.bf16.mxu0 0
    %3527 = vmatpush1.bf16.msra.mxu0 0
    %3528 = vmatprep.subr.bf16.mxu0 0
    %3529 = vmatpush1.bf16.msra.mxu0 0
    %3530 = vmatprep.subr.bf16.mxu0 0
    %3531 = vmatpush1.bf16.msra.mxu0 0
    %3532 = vmatprep.subr.bf16.mxu0 0
    %3533 = vmatpush1.bf16.msra.mxu0 0
    %3534 = vmatprep.subr.bf16.mxu0 0
    %3535 = vmatpush1.bf16.msra.mxu0 0
    %3536 = vmatprep.subr.bf16.mxu0 0
    %3537 = vmatpush1.bf16.msra.mxu0 0
    %3538 = vmatprep.subr.bf16.mxu0 0
    %3539 = vmatpush1.bf16.msra.mxu0 0
    %3540 = vmatprep.mubr.bf16.mxu0 0
    %3541 = vmatmul.mubr.bf16.gmra.mrb[0].mxu0 %v3425
    %v3542 = vpop.f32.mrb[0].mxu0
    %v3543 = vadd.f32 0.0, %v3542
    %v3544 = vpop.f32.mrb[0].mxu0
    %v3545 = vadd.f32 0.0, %v3544
    %v3546 = vpop.f32.mrb[0].mxu0
    %v3547 = vpop.f32.mrb[0].mxu0
    %3548 = vdwg.mxu0
    %3549 = vmatprep.subr.bf16.mxu0 %v3101
    %3550 = vmatpush1.bf16.msra.mxu0 %v3100
    %3551 = vmatprep.subr.bf16.mxu0 %v3109
    %3552 = vmatpush1.bf16.msra.mxu0 %v3108
    %3553 = vmatprep.subr.bf16.mxu0 %v3117
    %3554 = vmatpush1.bf16.msra.mxu0 %v3116
    %3555 = vmatprep.subr.bf16.mxu0 %v3125
    %3556 = vmatpush1.bf16.msra.mxu0 %v3124
    %3557 = vmatprep.subr.bf16.mxu0 %v3133
    %3558 = vmatpush1.bf16.msra.mxu0 %v3132
    %3559 = vmatprep.subr.bf16.mxu0 %v3141
    %3560 = vmatpush1.bf16.msra.mxu0 %v3140
    %3561 = vmatprep.subr.bf16.mxu0 %v3149
    %3562 = vmatpush1.bf16.msra.mxu0 %v3148
    %3563 = vmatprep.subr.bf16.mxu0 %v3157
    %3564 = vmatpush1.bf16.msra.mxu0 %v3156
    %3565 = vmatprep.subr.bf16.mxu0 0
    %3566 = vmatpush1.bf16.msra.mxu0 0
    %3567 = vmatprep.subr.bf16.mxu0 0
    %3568 = vmatpush1.bf16.msra.mxu0 0
    %3569 = vmatprep.subr.bf16.mxu0 0
    %3570 = vmatpush1.bf16.msra.mxu0 0
    %3571 = vmatprep.subr.bf16.mxu0 0
    %3572 = vmatpush1.bf16.msra.mxu0 0
    %3573 = vmatprep.subr.bf16.mxu0 0
    %3574 = vmatpush1.bf16.msra.mxu0 0
    %3575 = vmatprep.subr.bf16.mxu0 0
    %3576 = vmatpush1.bf16.msra.mxu0 0
    %3577 = vmatprep.subr.bf16.mxu0 0
    %3578 = vmatpush1.bf16.msra.mxu0 0
    %3579 = vmatprep.subr.bf16.mxu0 0
    %3580 = vmatpush1.bf16.msra.mxu0 0
    %3581 = vmatprep.mubr.bf16.mxu0 0
    %3582 = vmatmul.mubr.bf16.gmra.mrb[0].mxu0 %v3425
    %v3583 = vpop.f32.mrb[0].mxu0
    %v3584 = vadd.f32 0.0, %v3583
    %v3585 = vpop.f32.mrb[0].mxu0
    %v3586 = vadd.f32 0.0, %v3585
    %v3587 = vpop.f32.mrb[0].mxu0
    %v3588 = vpop.f32.mrb[0].mxu0
    %3589 = vdwg.mxu0
    %v3590 = vsel %vm198, %v3461, %v3543
    %v3591 = vsel %vm198, %v3463, %v3545
    %v3592 = vsel %vm198, %v3502, %v3584
    %v3593 = vsel %vm198, %v3504, %v3586
    %v3594 = vadd.f32 %v2820, %v3590
    %v3595 = vadd.f32 %v2821, %v3591
    %v3596 = vadd.f32 %v2822, %v3592
    %v3597 = vadd.f32 %v2823, %v3593
    %v3598 = vxor.u32 %v3594, 2147483648
    %v3599 = vmul.f32 %v3598, 1.442695
    %v3600 = vpow.pop %v3599
    %v3601 = vadd.f32 %v3600, 1.0
    %v3602 = vrcp.pop %v3601
    %v3603 = vmul.f32 1.0, %v3602
    %v3604 = vtanh.pop %v3595
    %v3605 = vxor.u32 %v3596, 2147483648
    %v3606 = vmul.f32 %v3605, 1.442695
    %v3607 = vpow.pop %v3606
    %v3608 = vadd.f32 %v3607, 1.0
    %v3609 = vrcp.pop %v3608
    %v3610 = vmul.f32 1.0, %v3609
    %v3611 = vxor.u32 %v3597, 2147483648
    %v3612 = vmul.f32 %v3611, 1.442695
    %v3613 = vpow.pop %v3612
    %v3614 = vadd.f32 %v3613, 1.0
    %v3615 = vrcp.pop %v3614
    %v3616 = vmul.f32 1.0, %v3615
    %v3617 = vmul.f32 %v2825, %v2824
    %v3618 = vmul.f32 %v3616, %v3617
    %v3619 = vsub.f32 %v2825, %v3617
    %v3620 = vadd.f32 %v3618, %v3619
    %v3621 = vmul.f32 %v3610, %v3617
    %v3622 = vsub.f32 %v2824, %v3617
    %v3623 = vadd.f32 %v3621, %v3622
    %v3624 = vmul.f32 %v3620, %v3422
    %v3625 = vmul.f32 %v3623, %v3604
    %v3626 = vadd.f32 %v3624, %v3625
    %v3627 = vtanh.pop %v3626
    %v3628 = vmul.f32 %v3603, %v3627
    %v3629 = vpack.c.bf16 %v3628, %v3628
    %3630 = vmatprep.subr.bf16.mxu0 %v3095
    %3631 = vmatpush1.bf16.msra.mxu0 %v3094
    %3632 = vmatprep.subr.bf16.mxu0 %v3103
    %3633 = vmatpush1.bf16.msra.mxu0 %v3102
    %3634 = vmatprep.subr.bf16.mxu0 %v3111
    %3635 = vmatpush1.bf16.msra.mxu0 %v3110
    %3636 = vmatprep.subr.bf16.mxu0 %v3119
    %3637 = vmatpush1.bf16.msra.mxu0 %v3118
    %3638 = vmatprep.subr.bf16.mxu0 %v3127
    %3639 = vmatpush1.bf16.msra.mxu0 %v3126
    %3640 = vmatprep.subr.bf16.mxu0 %v3135
    %3641 = vmatpush1.bf16.msra.mxu0 %v3134
    %3642 = vmatprep.subr.bf16.mxu0 %v3143
    %3643 = vmatpush1.bf16.msra.mxu0 %v3142
    %3644 = vmatprep.subr.bf16.mxu0 %v3151
    %3645 = vmatpush1.bf16.msra.mxu0 %v3150
    %3646 = vmatprep.subr.bf16.mxu0 0
    %3647 = vmatpush1.bf16.msra.mxu0 0
    %3648 = vmatprep.subr.bf16.mxu0 0
    %3649 = vmatpush1.bf16.msra.mxu0 0
    %3650 = vmatprep.subr.bf16.mxu0 0
    %3651 = vmatpush1.bf16.msra.mxu0 0
    %3652 = vmatprep.subr.bf16.mxu0 0
    %3653 = vmatpush1.bf16.msra.mxu0 0
    %3654 = vmatprep.subr.bf16.mxu0 0
    %3655 = vmatpush1.bf16.msra.mxu0 0
    %3656 = vmatprep.subr.bf16.mxu0 0
    %3657 = vmatpush1.bf16.msra.mxu0 0
    %3658 = vmatprep.subr.bf16.mxu0 0
    %3659 = vmatpush1.bf16.msra.mxu0 0
    %3660 = vmatprep.subr.bf16.mxu0 0
    %3661 = vmatpush1.bf16.msra.mxu0 0
    %3662 = vmatprep.mubr.bf16.mxu0 0
    %3663 = vmatmul.mubr.bf16.gmra.mrb[0].mxu0 %v3629
    %v3664 = vpop.f32.mrb[0].mxu0
    %v3665 = vadd.f32 0.0, %v3664
    %v3666 = vpop.f32.mrb[0].mxu0
    %v3667 = vadd.f32 0.0, %v3666
    %v3668 = vpop.f32.mrb[0].mxu0
    %v3669 = vpop.f32.mrb[0].mxu0
    %3670 = vdwg.mxu0
    %3671 = vmatprep.subr.bf16.mxu0 %v3097
    %3672 = vmatpush1.bf16.msra.mxu0 %v3096
    %3673 = vmatprep.subr.bf16.mxu0 %v3105
    %3674 = vmatpush1.bf16.msra.mxu0 %v3104
    %3675 = vmatprep.subr.bf16.mxu0 %v3113
    %3676 = vmatpush1.bf16.msra.mxu0 %v3112
    %3677 = vmatprep.subr.bf16.mxu0 %v3121
    %3678 = vmatpush1.bf16.msra.mxu0 %v3120
    %3679 = vmatprep.subr.bf16.mxu0 %v3129
    %3680 = vmatpush1.bf16.msra.mxu0 %v3128
    %3681 = vmatprep.subr.bf16.mxu0 %v3137
    %3682 = vmatpush1.bf16.msra.mxu0 %v3136
    %3683 = vmatprep.subr.bf16.mxu0 %v3145
    %3684 = vmatpush1.bf16.msra.mxu0 %v3144
    %3685 = vmatprep.subr.bf16.mxu0 %v3153
    %3686 = vmatpush1.bf16.msra.mxu0 %v3152
    %3687 = vmatprep.subr.bf16.mxu0 0
    %3688 = vmatpush1.bf16.msra.mxu0 0
    %3689 = vmatprep.subr.bf16.mxu0 0
    %3690 = vmatpush1.bf16.msra.mxu0 0
    %3691 = vmatprep.subr.bf16.mxu0 0
    %3692 = vmatpush1.bf16.msra.mxu0 0
    %3693 = vmatprep.subr.bf16.mxu0 0
    %3694 = vmatpush1.bf16.msra.mxu0 0
    %3695 = vmatprep.subr.bf16.mxu0 0
    %3696 = vmatpush1.bf16.msra.mxu0 0
    %3697 = vmatprep.subr.bf16.mxu0 0
    %3698 = vmatpush1.bf16.msra.mxu0 0
    %3699 = vmatprep.subr.bf16.mxu0 0
    %3700 = vmatpush1.bf16.msra.mxu0 0
    %3701 = vmatprep.subr.bf16.mxu0 0
    %3702 = vmatpush1.bf16.msra.mxu0 0
    %3703 = vmatprep.mubr.bf16.mxu0 0
    %3704 = vmatmul.mubr.bf16.gmra.mrb[0].mxu0 %v3629
    %v3705 = vpop.f32.mrb[0].mxu0
    %v3706 = vadd.f32 0.0, %v3705
    %v3707 = vpop.f32.mrb[0].mxu0
    %v3708 = vadd.f32 0.0, %v3707
    %v3709 = vpop.f32.mrb[0].mxu0
    %v3710 = vpop.f32.mrb[0].mxu0
    %3711 = vdwg.mxu0
    %3712 = vmatprep.subr.bf16.mxu0 %v3099
    %3713 = vmatpush1.bf16.msra.mxu0 %v3098
    %3714 = vmatprep.subr.bf16.mxu0 %v3107
    %3715 = vmatpush1.bf16.msra.mxu0 %v3106
    %3716 = vmatprep.subr.bf16.mxu0 %v3115
    %3717 = vmatpush1.bf16.msra.mxu0 %v3114
    %3718 = vmatprep.subr.bf16.mxu0 %v3123
    %3719 = vmatpush1.bf16.msra.mxu0 %v3122
    %3720 = vmatprep.subr.bf16.mxu0 %v3131
    %3721 = vmatpush1.bf16.msra.mxu0 %v3130
    %3722 = vmatprep.subr.bf16.mxu0 %v3139
    %3723 = vmatpush1.bf16.msra.mxu0 %v3138
    %3724 = vmatprep.subr.bf16.mxu0 %v3147
    %3725 = vmatpush1.bf16.msra.mxu0 %v3146
    %3726 = vmatprep.subr.bf16.mxu0 %v3155
    %3727 = vmatpush1.bf16.msra.mxu0 %v3154
    %3728 = vmatprep.subr.bf16.mxu0 0
    %3729 = vmatpush1.bf16.msra.mxu0 0
    %3730 = vmatprep.subr.bf16.mxu0 0
    %3731 = vmatpush1.bf16.msra.mxu0 0
    %3732 = vmatprep.subr.bf16.mxu0 0
    %3733 = vmatpush1.bf16.msra.mxu0 0
    %3734 = vmatprep.subr.bf16.mxu0 0
    %3735 = vmatpush1.bf16.msra.mxu0 0
    %3736 = vmatprep.subr.bf16.mxu0 0
    %3737 = vmatpush1.bf16.msra.mxu0 0
    %3738 = vmatprep.subr.bf16.mxu0 0
    %3739 = vmatpush1.bf16.msra.mxu0 0
    %3740 = vmatprep.subr.bf16.mxu0 0
    %3741 = vmatpush1.bf16.msra.mxu0 0
    %3742 = vmatprep.subr.bf16.mxu0 0
    %3743 = vmatpush1.bf16.msra.mxu0 0
    %3744 = vmatprep.mubr.bf16.mxu0 0
    %3745 = vmatmul.mubr.bf16.gmra.mrb[0].mxu0 %v3629
    %v3746 = vpop.f32.mrb[0].mxu0
    %v3747 = vadd.f32 0.0, %v3746
    %v3748 = vpop.f32.mrb[0].mxu0
    %v3749 = vadd.f32 0.0, %v3748
    %v3750 = vpop.f32.mrb[0].mxu0
    %v3751 = vpop.f32.mrb[0].mxu0
    %3752 = vdwg.mxu0
    %3753 = vmatprep.subr.bf16.mxu0 %v3101
    %3754 = vmatpush1.bf16.msra.mxu0 %v3100
    %3755 = vmatprep.subr.bf16.mxu0 %v3109
    %3756 = vmatpush1.bf16.msra.mxu0 %v3108
    %3757 = vmatprep.subr.bf16.mxu0 %v3117
    %3758 = vmatpush1.bf16.msra.mxu0 %v3116
    %3759 = vmatprep.subr.bf16.mxu0 %v3125
    %3760 = vmatpush1.bf16.msra.mxu0 %v3124
    %3761 = vmatprep.subr.bf16.mxu0 %v3133
    %3762 = vmatpush1.bf16.msra.mxu0 %v3132
    %3763 = vmatprep.subr.bf16.mxu0 %v3141
    %3764 = vmatpush1.bf16.msra.mxu0 %v3140
    %3765 = vmatprep.subr.bf16.mxu0 %v3149
    %3766 = vmatpush1.bf16.msra.mxu0 %v3148
    %3767 = vmatprep.subr.bf16.mxu0 %v3157
    %3768 = vmatpush1.bf16.msra.mxu0 %v3156
    %3769 = vmatprep.subr.bf16.mxu0 0
    %3770 = vmatpush1.bf16.msra.mxu0 0
    %3771 = vmatprep.subr.bf16.mxu0 0
    %3772 = vmatpush1.bf16.msra.mxu0 0
    %3773 = vmatprep.subr.bf16.mxu0 0
    %3774 = vmatpush1.bf16.msra.mxu0 0
    %3775 = vmatprep.subr.bf16.mxu0 0
    %3776 = vmatpush1.bf16.msra.mxu0 0
    %3777 = vmatprep.subr.bf16.mxu0 0
    %3778 = vmatpush1.bf16.msra.mxu0 0
    %3779 = vmatprep.subr.bf16.mxu0 0
    %3780 = vmatpush1.bf16.msra.mxu0 0
    %3781 = vmatprep.subr.bf16.mxu0 0
    %3782 = vmatpush1.bf16.msra.mxu0 0
    %3783 = vmatprep.subr.bf16.mxu0 0
    %3784 = vmatpush1.bf16.msra.mxu0 0
    %3785 = vmatprep.mubr.bf16.mxu0 0
    %3786 = vmatmul.mubr.bf16.gmra.mrb[0].mxu0 %v3629
    %v3787 = vpop.f32.mrb[0].mxu0
    %v3788 = vadd.f32 0.0, %v3787
    %v3789 = vpop.f32.mrb[0].mxu0
    %v3790 = vadd.f32 0.0, %v3789
    %v3791 = vpop.f32.mrb[0].mxu0
    %v3792 = vpop.f32.mrb[0].mxu0
    %3793 = vdwg.mxu0
    %v3794 = vsel %vm198, %v3665, %v3747
    %v3795 = vsel %vm198, %v3667, %v3749
    %v3796 = vsel %vm198, %v3706, %v3788
    %v3797 = vsel %vm198, %v3708, %v3790
    %v3798 = vadd.f32 %v2826, %v3794
    %v3799 = vadd.f32 %v2827, %v3795
    %v3800 = vadd.f32 %v2828, %v3796
    %v3801 = vadd.f32 %v2829, %v3797
    %v3802 = vxor.u32 %v3798, 2147483648
    %v3803 = vmul.f32 %v3802, 1.442695
    %v3804 = vpow.pop %v3803
    %v3805 = vadd.f32 %v3804, 1.0
    %v3806 = vrcp.pop %v3805
    %v3807 = vmul.f32 1.0, %v3806
    %v3808 = vtanh.pop %v3799
    %v3809 = vxor.u32 %v3800, 2147483648
    %v3810 = vmul.f32 %v3809, 1.442695
    %v3811 = vpow.pop %v3810
    %v3812 = vadd.f32 %v3811, 1.0
    %v3813 = vrcp.pop %v3812
    %v3814 = vmul.f32 1.0, %v3813
    %v3815 = vxor.u32 %v3801, 2147483648
    %v3816 = vmul.f32 %v3815, 1.442695
    %v3817 = vpow.pop %v3816
    %v3818 = vadd.f32 %v3817, 1.0
    %v3819 = vrcp.pop %v3818
    %v3820 = vmul.f32 1.0, %v3819
    %v3821 = vmul.f32 %v2831, %v2830
    %v3822 = vmul.f32 %v3820, %v3821
    %v3823 = vsub.f32 %v2831, %v3821
    %v3824 = vadd.f32 %v3822, %v3823
    %v3825 = vmul.f32 %v3814, %v3821
    %v3826 = vsub.f32 %v2830, %v3821
    %v3827 = vadd.f32 %v3825, %v3826
    %v3828 = vmul.f32 %v3824, %v3626
    %v3829 = vmul.f32 %v3827, %v3808
    %v3830 = vadd.f32 %v3828, %v3829
    %v3831 = vtanh.pop %v3830
    %v3832 = vmul.f32 %v3807, %v3831
    %v3833 = vpack.c.bf16 %v3832, %v3832
    %3834 = vmatprep.subr.bf16.mxu0 %v3095
    %3835 = vmatpush1.bf16.msra.mxu0 %v3094
    %3836 = vmatprep.subr.bf16.mxu0 %v3103
    %3837 = vmatpush1.bf16.msra.mxu0 %v3102
    %3838 = vmatprep.subr.bf16.mxu0 %v3111
    %3839 = vmatpush1.bf16.msra.mxu0 %v3110
    %3840 = vmatprep.subr.bf16.mxu0 %v3119
    %3841 = vmatpush1.bf16.msra.mxu0 %v3118
    %3842 = vmatprep.subr.bf16.mxu0 %v3127
    %3843 = vmatpush1.bf16.msra.mxu0 %v3126
    %3844 = vmatprep.subr.bf16.mxu0 %v3135
    %3845 = vmatpush1.bf16.msra.mxu0 %v3134
    %3846 = vmatprep.subr.bf16.mxu0 %v3143
    %3847 = vmatpush1.bf16.msra.mxu0 %v3142
    %3848 = vmatprep.subr.bf16.mxu0 %v3151
    %3849 = vmatpush1.bf16.msra.mxu0 %v3150
    %3850 = vmatprep.subr.bf16.mxu0 0
    %3851 = vmatpush1.bf16.msra.mxu0 0
    %3852 = vmatprep.subr.bf16.mxu0 0
    %3853 = vmatpush1.bf16.msra.mxu0 0
    %3854 = vmatprep.subr.bf16.mxu0 0
    %3855 = vmatpush1.bf16.msra.mxu0 0
    %3856 = vmatprep.subr.bf16.mxu0 0
    %3857 = vmatpush1.bf16.msra.mxu0 0
    %3858 = vmatprep.subr.bf16.mxu0 0
    %3859 = vmatpush1.bf16.msra.mxu0 0
    %3860 = vmatprep.subr.bf16.mxu0 0
    %3861 = vmatpush1.bf16.msra.mxu0 0
    %3862 = vmatprep.subr.bf16.mxu0 0
    %3863 = vmatpush1.bf16.msra.mxu0 0
    %3864 = vmatprep.subr.bf16.mxu0 0
    %3865 = vmatpush1.bf16.msra.mxu0 0
    %3866 = vmatprep.mubr.bf16.mxu0 0
    %3867 = vmatmul.mubr.bf16.gmra.mrb[0].mxu0 %v3833
    %v3868 = vpop.f32.mrb[0].mxu0
    %v3869 = vadd.f32 0.0, %v3868
    %v3870 = vpop.f32.mrb[0].mxu0
    %v3871 = vadd.f32 0.0, %v3870
    %v3872 = vpop.f32.mrb[0].mxu0
    %v3873 = vpop.f32.mrb[0].mxu0
    %3874 = vdwg.mxu0
    %3875 = vmatprep.subr.bf16.mxu0 %v3097
    %3876 = vmatpush1.bf16.msra.mxu0 %v3096
    %3877 = vmatprep.subr.bf16.mxu0 %v3105
    %3878 = vmatpush1.bf16.msra.mxu0 %v3104
    %3879 = vmatprep.subr.bf16.mxu0 %v3113
    %3880 = vmatpush1.bf16.msra.mxu0 %v3112
    %3881 = vmatprep.subr.bf16.mxu0 %v3121
    %3882 = vmatpush1.bf16.msra.mxu0 %v3120
    %3883 = vmatprep.subr.bf16.mxu0 %v3129
    %3884 = vmatpush1.bf16.msra.mxu0 %v3128
    %3885 = vmatprep.subr.bf16.mxu0 %v3137
    %3886 = vmatpush1.bf16.msra.mxu0 %v3136
    %3887 = vmatprep.subr.bf16.mxu0 %v3145
    %3888 = vmatpush1.bf16.msra.mxu0 %v3144
    %3889 = vmatprep.subr.bf16.mxu0 %v3153
    %3890 = vmatpush1.bf16.msra.mxu0 %v3152
    %3891 = vmatprep.subr.bf16.mxu0 0
    %3892 = vmatpush1.bf16.msra.mxu0 0
    %3893 = vmatprep.subr.bf16.mxu0 0
    %3894 = vmatpush1.bf16.msra.mxu0 0
    %3895 = vmatprep.subr.bf16.mxu0 0
    %3896 = vmatpush1.bf16.msra.mxu0 0
    %3897 = vmatprep.subr.bf16.mxu0 0
    %3898 = vmatpush1.bf16.msra.mxu0 0
    %3899 = vmatprep.subr.bf16.mxu0 0
    %3900 = vmatpush1.bf16.msra.mxu0 0
    %3901 = vmatprep.subr.bf16.mxu0 0
    %3902 = vmatpush1.bf16.msra.mxu0 0
    %3903 = vmatprep.subr.bf16.mxu0 0
    %3904 = vmatpush1.bf16.msra.mxu0 0
    %3905 = vmatprep.subr.bf16.mxu0 0
    %3906 = vmatpush1.bf16.msra.mxu0 0
    %3907 = vmatprep.mubr.bf16.mxu0 0
    %3908 = vmatmul.mubr.bf16.gmra.mrb[0].mxu0 %v3833
    %v3909 = vpop.f32.mrb[0].mxu0
    %v3910 = vadd.f32 0.0, %v3909
    %v3911 = vpop.f32.mrb[0].mxu0
    %v3912 = vadd.f32 0.0, %v3911
    %v3913 = vpop.f32.mrb[0].mxu0
    %v3914 = vpop.f32.mrb[0].mxu0
    %3915 = vdwg.mxu0
    %3916 = vmatprep.subr.bf16.mxu0 %v3099
    %3917 = vmatpush1.bf16.msra.mxu0 %v3098
    %3918 = vmatprep.subr.bf16.mxu0 %v3107
    %3919 = vmatpush1.bf16.msra.mxu0 %v3106
    %3920 = vmatprep.subr.bf16.mxu0 %v3115
    %3921 = vmatpush1.bf16.msra.mxu0 %v3114
    %3922 = vmatprep.subr.bf16.mxu0 %v3123
    %3923 = vmatpush1.bf16.msra.mxu0 %v3122
    %3924 = vmatprep.subr.bf16.mxu0 %v3131
    %3925 = vmatpush1.bf16.msra.mxu0 %v3130
    %3926 = vmatprep.subr.bf16.mxu0 %v3139
    %3927 = vmatpush1.bf16.msra.mxu0 %v3138
    %3928 = vmatprep.subr.bf16.mxu0 %v3147
    %3929 = vmatpush1.bf16.msra.mxu0 %v3146
    %3930 = vmatprep.subr.bf16.mxu0 %v3155
    %3931 = vmatpush1.bf16.msra.mxu0 %v3154
    %3932 = vmatprep.subr.bf16.mxu0 0
    %3933 = vmatpush1.bf16.msra.mxu0 0
    %3934 = vmatprep.subr.bf16.mxu0 0
    %3935 = vmatpush1.bf16.msra.mxu0 0
    %3936 = vmatprep.subr.bf16.mxu0 0
    %3937 = vmatpush1.bf16.msra.mxu0 0
    %3938 = vmatprep.subr.bf16.mxu0 0
    %3939 = vmatpush1.bf16.msra.mxu0 0
    %3940 = vmatprep.subr.bf16.mxu0 0
    %3941 = vmatpush1.bf16.msra.mxu0 0
    %3942 = vmatprep.subr.bf16.mxu0 0
    %3943 = vmatpush1.bf16.msra.mxu0 0
    %3944 = vmatprep.subr.bf16.mxu0 0
    %3945 = vmatpush1.bf16.msra.mxu0 0
    %3946 = vmatprep.subr.bf16.mxu0 0
    %3947 = vmatpush1.bf16.msra.mxu0 0
    %3948 = vmatprep.mubr.bf16.mxu0 0
    %3949 = vmatmul.mubr.bf16.gmra.mrb[0].mxu0 %v3833
    %v3950 = vpop.f32.mrb[0].mxu0
    %v3951 = vadd.f32 0.0, %v3950
    %v3952 = vpop.f32.mrb[0].mxu0
    %v3953 = vadd.f32 0.0, %v3952
    %v3954 = vpop.f32.mrb[0].mxu0
    %v3955 = vpop.f32.mrb[0].mxu0
    %3956 = vdwg.mxu0
    %3957 = vmatprep.subr.bf16.mxu0 %v3101
    %3958 = vmatpush1.bf16.msra.mxu0 %v3100
    %3959 = vmatprep.subr.bf16.mxu0 %v3109
    %3960 = vmatpush1.bf16.msra.mxu0 %v3108
    %3961 = vmatprep.subr.bf16.mxu0 %v3117
    %3962 = vmatpush1.bf16.msra.mxu0 %v3116
    %3963 = vmatprep.subr.bf16.mxu0 %v3125
    %3964 = vmatpush1.bf16.msra.mxu0 %v3124
    %3965 = vmatprep.subr.bf16.mxu0 %v3133
    %3966 = vmatpush1.bf16.msra.mxu0 %v3132
    %3967 = vmatprep.subr.bf16.mxu0 %v3141
    %3968 = vmatpush1.bf16.msra.mxu0 %v3140
    %3969 = vmatprep.subr.bf16.mxu0 %v3149
    %3970 = vmatpush1.bf16.msra.mxu0 %v3148
    %3971 = vmatprep.subr.bf16.mxu0 %v3157
    %3972 = vmatpush1.bf16.msra.mxu0 %v3156
    %3973 = vmatprep.subr.bf16.mxu0 0
    %3974 = vmatpush1.bf16.msra.mxu0 0
    %3975 = vmatprep.subr.bf16.mxu0 0
    %3976 = vmatpush1.bf16.msra.mxu0 0
    %3977 = vmatprep.subr.bf16.mxu0 0
    %3978 = vmatpush1.bf16.msra.mxu0 0
    %3979 = vmatprep.subr.bf16.mxu0 0
    %3980 = vmatpush1.bf16.msra.mxu0 0
    %3981 = vmatprep.subr.bf16.mxu0 0
    %3982 = vmatpush1.bf16.msra.mxu0 0
    %3983 = vmatprep.subr.bf16.mxu0 0
    %3984 = vmatpush1.bf16.msra.mxu0 0
    %3985 = vmatprep.subr.bf16.mxu0 0
    %3986 = vmatpush1.bf16.msra.mxu0 0
    %3987 = vmatprep.subr.bf16.mxu0 0
    %3988 = vmatpush1.bf16.msra.mxu0 0
    %3989 = vmatprep.mubr.bf16.mxu0 0
    %3990 = vmatmul.mubr.bf16.gmra.mrb[0].mxu0 %v3833
    %v3991 = vpop.f32.mrb[0].mxu0
    %v3992 = vadd.f32 0.0, %v3991
    %v3993 = vpop.f32.mrb[0].mxu0
    %v3994 = vadd.f32 0.0, %v3993
    %v3995 = vpop.f32.mrb[0].mxu0
    %v3996 = vpop.f32.mrb[0].mxu0
    %3997 = vdwg.mxu0
    %v3998 = vsel %vm198, %v3869, %v3951
    %v3999 = vsel %vm198, %v3871, %v3953
    %v4000 = vsel %vm198, %v3910, %v3992
    %v4001 = vsel %vm198, %v3912, %v3994
    %v4002 = vadd.f32 %v2832, %v3998
    %v4003 = vadd.f32 %v2833, %v3999
    %v4004 = vadd.f32 %v2834, %v4000
    %v4005 = vadd.f32 %v2835, %v4001
    %v4006 = vxor.u32 %v4002, 2147483648
    %v4007 = vmul.f32 %v4006, 1.442695
    %v4008 = vpow.pop %v4007
    %v4009 = vadd.f32 %v4008, 1.0
    %v4010 = vrcp.pop %v4009
    %v4011 = vmul.f32 1.0, %v4010
    %v4012 = vtanh.pop %v4003
    %v4013 = vxor.u32 %v4004, 2147483648
    %v4014 = vmul.f32 %v4013, 1.442695
    %v4015 = vpow.pop %v4014
    %v4016 = vadd.f32 %v4015, 1.0
    %v4017 = vrcp.pop %v4016
    %v4018 = vmul.f32 1.0, %v4017
    %v4019 = vxor.u32 %v4005, 2147483648
    %v4020 = vmul.f32 %v4019, 1.442695
    %v4021 = vpow.pop %v4020
    %v4022 = vadd.f32 %v4021, 1.0
    %v4023 = vrcp.pop %v4022
    %v4024 = vmul.f32 1.0, %v4023
    %v4025 = vmul.f32 %v2837, %v2836
    %v4026 = vmul.f32 %v4024, %v4025
    %v4027 = vsub.f32 %v2837, %v4025
    %v4028 = vadd.f32 %v4026, %v4027
    %v4029 = vmul.f32 %v4018, %v4025
    %v4030 = vsub.f32 %v2836, %v4025
    %v4031 = vadd.f32 %v4029, %v4030
    %v4032 = vmul.f32 %v4028, %v3830
    %v4033 = vmul.f32 %v4031, %v4012
    %v4034 = vadd.f32 %v4032, %v4033
    %v4035 = vtanh.pop %v4034
    %v4036 = vmul.f32 %v4011, %v4035
    %v4038 = vrot.slane %v4036, 4
    %v4040 = vld [vmem:[%s9] sm:$0xff]
    %v4041 = vld [vmem:[%s9 + $0x8] sm:$0xff]
    %v4042 = vld [vmem:[%s9 + $0x10] sm:$0xff]
    %v4043 = vld [vmem:[%s9 + $0x18] sm:$0xff]
    %v4044 = vld [vmem:[%s9 + $0x20] sm:$0xff]
    %v4045 = vld [vmem:[%s9 + $0x28] sm:$0xff]
    %v4046 = vld [vmem:[%s9 + $0x30] sm:$0xff]
    %v4047 = vld [vmem:[%s9 + $0x38] sm:$0xff]
    %v4048 = vld [vmem:[%s9 + $0x40] sm:$0xff]
    %v4049 = vld [vmem:[%s9 + $0x48] sm:$0xff]
    %v4050 = vld [vmem:[%s9 + $0x50] sm:$0xff]
    %v4051 = vld [vmem:[%s9 + $0x58] sm:$0xff]
    %v4052 = vld [vmem:[%s9 + $0x60] sm:$0xff]
    %v4053 = vld [vmem:[%s9 + $0x68] sm:$0xff]
    %v4054 = vld [vmem:[%s9 + $0x70] sm:$0xff]
    %v4055 = vld [vmem:[%s9 + $0x78] sm:$0xff]
    %v4056 = vld [vmem:[%s9 + $0x80] sm:$0xff]
    %v4057 = vld [vmem:[%s9 + $0x88] sm:$0xff]
    %v4058 = vld [vmem:[%s9 + $0x90] sm:$0xff]
    %v4059 = vld [vmem:[%s9 + $0x98] sm:$0xff]
    %v4060 = vld [vmem:[%s9 + $0xa0] sm:$0xff]
    %v4061 = vld [vmem:[%s9 + $0xa8] sm:$0xff]
    %v4062 = vld [vmem:[%s9 + $0xb0] sm:$0xff]
    %v4063 = vld [vmem:[%s9 + $0xb8] sm:$0xff]
    %v4064 = vld [vmem:[%s9 + $0xc0] sm:$0xff]
    %v4065 = vld [vmem:[%s9 + $0xc8] sm:$0xff]
    %v4066 = vld [vmem:[%s9 + $0xd0] sm:$0xff]
    %v4067 = vld [vmem:[%s9 + $0xd8] sm:$0xff]
    %v4068 = vld [vmem:[%s9 + $0xe0] sm:$0xff]
    %v4069 = vld [vmem:[%s9 + $0xe8] sm:$0xff]
    %v4070 = vld [vmem:[%s9 + $0xf0] sm:$0xff]
    %v4071 = vld [vmem:[%s9 + $0xf8] sm:$0xff]
    %v4072 = vld [vmem:[%s10] sm:$0x1]
    %v4074 = vlaneseq
    %v4075 = vshrl.u32 %v4074, 7
    %v4076 = vsub.s32 0, %v4075
    %v4077 = vrot.slane %v4072, %v4076
    %4079 = vmatprep.subr.mxu0 0.0
    %4080 = vmatpush1.msra.mxu0 %v4040
    %4081 = vmatprep.subr.mxu0 0.0
    %4082 = vmatpush1.msra.mxu0 %v4041
    %4083 = vmatprep.subr.mxu0 0.0
    %4084 = vmatpush1.msra.mxu0 %v4042
    %4085 = vmatprep.subr.mxu0 0.0
    %4086 = vmatpush1.msra.mxu0 %v4043
    %4087 = vmatprep.subr.mxu0 0.0
    %4088 = vmatpush1.msra.mxu0 %v4044
    %4089 = vmatprep.subr.mxu0 0.0
    %4090 = vmatpush1.msra.mxu0 %v4045
    %4091 = vmatprep.subr.mxu0 0.0
    %4092 = vmatpush1.msra.mxu0 %v4046
    %4093 = vmatprep.subr.mxu0 0.0
    %4094 = vmatpush1.msra.mxu0 %v4047
    %4095 = vmatprep.subr.mxu0 0.0
    %4096 = vmatpush1.msra.mxu0 %v4048
    %4097 = vmatprep.subr.mxu0 0.0
    %4098 = vmatpush1.msra.mxu0 %v4049
    %4099 = vmatprep.subr.mxu0 0.0
    %4100 = vmatpush1.msra.mxu0 %v4050
    %4101 = vmatprep.subr.mxu0 0.0
    %4102 = vmatpush1.msra.mxu0 %v4051
    %4103 = vmatprep.subr.mxu0 0.0
    %4104 = vmatpush1.msra.mxu0 %v4052
    %4105 = vmatprep.subr.mxu0 0.0
    %4106 = vmatpush1.msra.mxu0 %v4053
    %4107 = vmatprep.subr.mxu0 0.0
    %4108 = vmatpush1.msra.mxu0 %v4054
    %4109 = vmatprep.subr.mxu0 0.0
    %4110 = vmatpush1.msra.mxu0 %v4055
    %4111 = vmatprep.subr.mxu0 0.0
    %4112 = vmatpush1.msra.mxu0 %v4056
    %4113 = vmatprep.subr.mxu0 0.0
    %4114 = vmatpush1.msra.mxu0 %v4057
    %4115 = vmatprep.subr.mxu0 0.0
    %4116 = vmatpush1.msra.mxu0 %v4058
    %4117 = vmatprep.subr.mxu0 0.0
    %4118 = vmatpush1.msra.mxu0 %v4059
    %4119 = vmatprep.subr.mxu0 0.0
    %4120 = vmatpush1.msra.mxu0 %v4060
    %4121 = vmatprep.subr.mxu0 0.0
    %4122 = vmatpush1.msra.mxu0 %v4061
    %4123 = vmatprep.subr.mxu0 0.0
    %4124 = vmatpush1.msra.mxu0 %v4062
    %4125 = vmatprep.subr.mxu0 0.0
    %4126 = vmatpush1.msra.mxu0 %v4063
    %4127 = vmatprep.subr.mxu0 0.0
    %4128 = vmatpush1.msra.mxu0 %v4064
    %4129 = vmatprep.subr.mxu0 0.0
    %4130 = vmatpush1.msra.mxu0 %v4065
    %4131 = vmatprep.subr.mxu0 0.0
    %4132 = vmatpush1.msra.mxu0 %v4066
    %4133 = vmatprep.subr.mxu0 0.0
    %4134 = vmatpush1.msra.mxu0 %v4067
    %4135 = vmatprep.subr.mxu0 0.0
    %4136 = vmatpush1.msra.mxu0 %v4068
    %4137 = vmatprep.subr.mxu0 0.0
    %4138 = vmatpush1.msra.mxu0 %v4069
    %4139 = vmatprep.subr.mxu0 0.0
    %4140 = vmatpush1.msra.mxu0 %v4070
    %4141 = vmatprep.subr.mxu0 0.0
    %4142 = vmatpush1.msra.mxu0 %v4071
    %4143 = vmatprep.mubr.f32.mxu0 %v4038
    %4144 = vmatmul.mubr.f32.gmra.mrb[0].mxu0 %v4036
    %v4145 = vpop.f32.mrb[0].mxu0
    %v4146 = vadd.f32 %v4077, %v4145
    %v4147 = vpop.f32.mrb[0].mxu0
    %4148 = vdwg.mxu0
    %vm4149 = vcmask 27648
    %v4150 = vsel %vm4149, %v4146, -inf
    %4151 = vmax.xlane.f32.xlu0 %v4150
    %v4152 = vpop.xlane.xlu0 %4151
    %v4153 = vsub.f32 %v4146, %v4152
    %v4154 = vmul.f32 %v4153, 1.442695
    %v4155 = vpow.pop %v4154
    %v4156 = vsel %vm4149, %v4155, 0.0
    %4157 = vadd.xlane.f32.xlu0 %v4156
    %v4158 = vpop.xlane.xlu0 %4157
    %v4159 = vrcp.pop %v4158
    %v4160 = vmul.f32 %v4155, %v4159
    %4161 = vst.msk [vmem:[#allocation8] sm:$0xf] %vm4149, %v4160
    // Predicated region
    $region58: #{onlstm_stack_forward.1} parent=1 // pred_check
      _
    $region59: #{onlstm_stack_forward.1} parent=1 // pred_check_branch
      %4163 = sbr.rel (0) target = $region61
    $region60: #{onlstm_stack_forward.1} parent=1 // pred_region
      %s4165 = ssub.s32 64, 64
      %4166 = vsyncadd [#allocation4], %s4165
      %s4168 = sshll.u32 [#allocation8], 4
      %s4169 = int_to_ptr.vmem [resolvable:$true] %s4168
      %4171 = dma.vmem_to_hbm [thread:$0]  %s4169, 64, %s11, [#allocation4]
    $region61: #{onlstm_stack_forward.1} parent=1 // pred_fallthru
      _
    // Predicated region
    $region62: #{onlstm_stack_forward.1} parent=1 // pred_check
      _
    $region63: #{onlstm_stack_forward.1} parent=1 // pred_check_branch
      %4173 = sbr.rel (0) target = $region65
    $region64: #{onlstm_stack_forward.1} parent=1 // pred_region
      %4174 = dma.done [#allocation4], 64
    $region65: #{onlstm_stack_forward.1} parent=1 // pred_fallthru
      _
    %4175 = vsyncpa [#allocation3], 1
    %4176 = vsyncpa [#allocation6], 1
    %4177 = vsyncpa [#allocation4], 1

</llo_original>
